<compile_context>
chip_gen: v6e
topology: v6e:2x2x1
jax: 0.10.0
libtpu: 0.0.40
codegen_flags: <defaults>
</compile_context>

<pallas_src>
import jax
import jax.numpy as jnp
from jax.experimental import pallas as pl
from jax.experimental.pallas import tpu as pltpu


def mlp_kernel(x_ref, w1_ref, b1_ref, gw_ref, red_ref, out_ref):
    # fc1: (TB, D) @ (D, H) + b1  -> (TB, H), MXU matmul with f32 accumulate.
    z = jnp.dot(x_ref[...], w1_ref[...], preferred_element_type=jnp.float32)
    z = z + b1_ref[...]

    # sigmoid via tanh: single EUP op per element (vs exp + reciprocal).
    s = 0.5 * (jnp.tanh(0.5 * z) + 1.0)                       # (TB, H) f32

    # Fused LayerNorm + output linear epilogue (eps=1e-5, biased variance):
    #   out = inv_std * (sum(s*gw) - mean*sum_gw) + c
    inv_h = 1.0 / s.shape[-1]
    mean = jnp.sum(s, axis=-1, keepdims=True) * inv_h          # (TB, 1)
    ex2 = jnp.sum(s * s, axis=-1, keepdims=True) * inv_h
    var = ex2 - mean * mean
    inv_std = jax.lax.rsqrt(var + 1e-5)
    dot_gw = jnp.sum(s * gw_ref[...], axis=-1, keepdims=True)  # (TB, 1)

    sum_gw = red_ref[0]                                        # SMEM scalars
    c = red_ref[1]
    out_col = inv_std * (dot_gw - mean * sum_gw) + c           # (TB, 1)

    # Lane-dense store: column -> (1, 1, TB) row block.
    out_ref[...] = out_col.reshape(out_ref.shape).astype(out_ref.dtype)


def mlp_forward(arrays, params, *, block_b=1024, compute_dtype=jnp.float32,
                vmem_limit_bytes=32 * 1024 * 1024):
    """arrays: (B, D) float32. Returns (B, 1) float32."""
    B, D = arrays.shape
    H = params["w1"].shape[1]

    # Tile selection: as large as block_b allows (amortizes ~0.35us/step grid
    # overhead), multiple of 128, but halved until there are >= 2 grid steps so
    # the "parallel" batch axis can shard across both TensorCores on v7x.
    tb = max(128, (block_b // 128) * 128)
    while tb > 128 and pl.cdiv(B, tb) < 2:
        tb //= 2
    n_tiles = pl.cdiv(B, tb)
    b_pad = n_tiles * tb

    x = arrays
    if b_pad != B:
        x = jnp.pad(x, ((0, b_pad - B), (0, 0)))   # row-local math -> safe pad
    x = x.astype(compute_dtype)
    w1 = params["w1"].astype(compute_dtype)

    # Fused epilogue constants (f32).
    gw = (params["ln_g"] * params["wo"]).astype(jnp.float32)          # (1, H)
    sum_gw = jnp.sum(gw)
    c = jnp.sum(params["ln_b"] * params["wo"]) + params["bo"][0, 0]
    red = jnp.stack([sum_gw, c]).astype(jnp.float32)                  # (2,) SMEM

    const2 = lambda i: (0, 0)   # params: same block every step -> stay resident

    out = pl.pallas_call(
        mlp_kernel,
        out_shape=jax.ShapeDtypeStruct((n_tiles, 1, tb), jnp.float32),
        grid=(n_tiles,),
        in_specs=[
            pl.BlockSpec((tb, D), lambda i: (i, 0)),            # arrays (batch-tiled)
            pl.BlockSpec((D, H), const2),                       # fc1 weight (in, out)
            pl.BlockSpec((1, H), const2),                       # fc1 bias
            pl.BlockSpec((1, H), const2),                       # gw = ln_g * wo
            pl.BlockSpec(memory_space=pltpu.MemorySpace.SMEM),  # [sum_gw, c]
        ],
        out_specs=pl.BlockSpec((1, 1, tb), lambda i: (i, 0, 0)),  # lane-dense rows
        compiler_params=pltpu.CompilerParams(
            dimension_semantics=("parallel",),
            vmem_limit_bytes=vmem_limit_bytes,
        ),
    )(x, w1, params["b1"], gw, red)

    return out.reshape(b_pad)[:B].reshape(B, 1)


def init_params(key, input_dim, hidden_dim):
    k1, k2, k3 = jax.random.split(key, 3)
    # Linear weights stored as (in, out) so the in-kernel matmul is x @ W.
    w1 = jax.random.normal(k1, (input_dim, hidden_dim), jnp.float32) * 0.1
    b1 = jax.random.normal(k2, (1, hidden_dim), jnp.float32) * 0.01
    ln_g = jnp.ones((1, hidden_dim), jnp.float32)
    ln_b = jnp.zeros((1, hidden_dim), jnp.float32)
    # Output Linear weight stored lane-dense as a (1, hidden_dim) row.
    wo = jax.random.normal(k3, (1, hidden_dim), jnp.float32) * 0.1
    bo = jnp.full((1, 1), -0.02, jnp.float32)
    return dict(w1=w1, b1=b1, ln_g=ln_g, ln_b=ln_b, wo=wo, bo=bo)


def reference_forward(arrays, p):
    z = arrays @ p["w1"] + p["b1"]
    s = jax.nn.sigmoid(z)
    mean = jnp.mean(s, axis=-1, keepdims=True)
    var = jnp.mean((s - mean) ** 2, axis=-1, keepdims=True)
    h = (s - mean) / jnp.sqrt(var + 1e-5) * p["ln_g"] + p["ln_b"]
    return h @ p["wo"].T + p["bo"][0, 0]


if __name__ == "__main__":
    # Ragged batch (exercises padding + 2 grid tiles); hidden_dim=256 (module default).
    B, D, H = 500, 128, 256
    key = jax.random.PRNGKey(0)
    k_x, k_p = jax.random.split(key)
    arrays = jax.random.normal(k_x, (B, D), jnp.float32)
    params = init_params(k_p, D, H)

    ref = reference_forward(arrays, params)

    # f32 path: tight tolerance against the PyTorch-equivalent reference.
    out = jax.block_until_ready(mlp_forward(arrays, params))
    assert out.shape == (B, 1)
    assert jnp.allclose(out, ref, atol=1e-4, rtol=1e-4)

    # bf16-operand path (f32 accumulate): looser tolerance.
    out_bf16 = jax.block_until_ready(
        mlp_forward(arrays, params, compute_dtype=jnp.bfloat16))
    assert out_bf16.shape == (B, 1)
    assert jnp.allclose(out_bf16, ref, atol=1e-1, rtol=1e-1)

    print("KERNEL_OK")
</pallas_src>

<mosaic_0001>
module attributes {stable_mosaic.version = 11 : i64} {
  func.func @mlp_kernel(%arg0: i32, %arg1: memref<256x128xf32, #tpu.memory_space<vmem>>, %arg2: memref<128x256xf32, #tpu.memory_space<vmem>>, %arg3: memref<1x256xf32, #tpu.memory_space<vmem>>, %arg4: memref<1x256xf32, #tpu.memory_space<vmem>>, %arg5: memref<2xf32, #tpu.memory_space<smem>>, %arg6: memref<1x1x256xf32, #tpu.memory_space<vmem>>) attributes {dimension_semantics = [#tpu.dimension_semantics<parallel>], iteration_bounds = array<i64: 2>, scalar_prefetch = 0 : i64, scratch_operands = 0 : i64, tpu.core_type = #tpu.core_type<tc>, window_params = [{transform_indices = @transform_0, window_bounds = array<i64: 256, 128>}, {pipeline_mode = #tpu.pipeline_mode<synchronous>, transform_indices = @transform_1, window_bounds = array<i64: 128, 256>}, {pipeline_mode = #tpu.pipeline_mode<synchronous>, transform_indices = @transform_2, window_bounds = array<i64: 1, 256>}, {pipeline_mode = #tpu.pipeline_mode<synchronous>, transform_indices = @transform_3, window_bounds = array<i64: 1, 256>}, {transform_indices = @transform_4, window_bounds = array<i64: 2>}, {transform_indices = @transform_5, window_bounds = array<i64: 1, 1, 256>}]} {
    %c0 = arith.constant 0 : index
    %c0_0 = arith.constant 0 : index
    %0 = vector.load %arg1[%c0, %c0_0] : memref<256x128xf32, #tpu.memory_space<vmem>>, vector<256x128xf32>
    %c0_1 = arith.constant 0 : index
    %c0_2 = arith.constant 0 : index
    %1 = vector.load %arg2[%c0_1, %c0_2] : memref<128x256xf32, #tpu.memory_space<vmem>>, vector<128x256xf32>
    %cst = arith.constant dense<0.000000e+00> : vector<256x256xf32>
    %2 = tpu.matmul %0, %1, %cst {dimension_numbers = #tpu.dot_dimension_numbers<[1], [0], [0], [1], [0, 0, 1, 1], [], []>} : vector<256x128xf32>, vector<128x256xf32>, vector<256x256xf32> -> vector<256x256xf32>
    %c0_3 = arith.constant 0 : index
    %c0_4 = arith.constant 0 : index
    %3 = vector.load %arg3[%c0_3, %c0_4] : memref<1x256xf32, #tpu.memory_space<vmem>>, vector<1x256xf32>
    %4 = vector.broadcast %3 : vector<1x256xf32> to vector<256x256xf32>
    %5 = arith.addf %2, %4 : vector<256x256xf32>
    %cst_5 = arith.constant 5.000000e-01 : f32
    %6 = vector.broadcast %cst_5 : f32 to vector<256x256xf32>
    %7 = arith.mulf %6, %5 : vector<256x256xf32>
    %8 = math.tanh %7 : vector<256x256xf32>
    %cst_6 = arith.constant 1.000000e+00 : f32
    %9 = vector.broadcast %cst_6 : f32 to vector<256x256xf32>
    %10 = arith.addf %8, %9 : vector<256x256xf32>
    %cst_7 = arith.constant 5.000000e-01 : f32
    %11 = vector.broadcast %cst_7 : f32 to vector<256x256xf32>
    %12 = arith.mulf %11, %10 : vector<256x256xf32>
    %cst_8 = arith.constant dense<0.000000e+00> : vector<256xf32>
    %13 = vector.multi_reduction <add>, %12, %cst_8 [1] : vector<256x256xf32> to vector<256xf32>
    %14 = vector.shape_cast %13 : vector<256xf32> to vector<256x1xf32>
    %cst_9 = arith.constant 3.906250e-03 : f32
    %15 = vector.broadcast %cst_9 : f32 to vector<256x1xf32>
    %16 = arith.mulf %14, %15 : vector<256x1xf32>
    %17 = arith.mulf %12, %12 : vector<256x256xf32>
    %cst_10 = arith.constant dense<0.000000e+00> : vector<256xf32>
    %18 = vector.multi_reduction <add>, %17, %cst_10 [1] : vector<256x256xf32> to vector<256xf32>
    %19 = vector.shape_cast %18 : vector<256xf32> to vector<256x1xf32>
    %cst_11 = arith.constant 3.906250e-03 : f32
    %20 = vector.broadcast %cst_11 : f32 to vector<256x1xf32>
    %21 = arith.mulf %19, %20 : vector<256x1xf32>
    %22 = arith.mulf %16, %16 : vector<256x1xf32>
    %23 = arith.subf %21, %22 : vector<256x1xf32>
    %cst_12 = arith.constant 9.99999974E-6 : f32
    %24 = vector.broadcast %cst_12 : f32 to vector<256x1xf32>
    %25 = arith.addf %23, %24 : vector<256x1xf32>
    %26 = math.rsqrt %25 : vector<256x1xf32>
    %c0_13 = arith.constant 0 : index
    %c0_14 = arith.constant 0 : index
    %27 = vector.load %arg4[%c0_13, %c0_14] : memref<1x256xf32, #tpu.memory_space<vmem>>, vector<1x256xf32>
    %28 = vector.broadcast %27 : vector<1x256xf32> to vector<256x256xf32>
    %29 = arith.mulf %12, %28 : vector<256x256xf32>
    %cst_15 = arith.constant dense<0.000000e+00> : vector<256xf32>
    %30 = vector.multi_reduction <add>, %29, %cst_15 [1] : vector<256x256xf32> to vector<256xf32>
    %31 = vector.shape_cast %30 : vector<256xf32> to vector<256x1xf32>
    %c0_16 = arith.constant 0 : index
    %32 = memref.load %arg5[%c0_16] : memref<2xf32, #tpu.memory_space<smem>>
    %c1 = arith.constant 1 : index
    %33 = memref.load %arg5[%c1] : memref<2xf32, #tpu.memory_space<smem>>
    %34 = vector.broadcast %32 : f32 to vector<256x1xf32>
    %35 = arith.mulf %16, %34 : vector<256x1xf32>
    %36 = arith.subf %31, %35 : vector<256x1xf32>
    %37 = arith.mulf %26, %36 : vector<256x1xf32>
    %38 = vector.broadcast %33 : f32 to vector<256x1xf32>
    %39 = arith.addf %37, %38 : vector<256x1xf32>
    %40 = vector.shape_cast %39 : vector<256x1xf32> to vector<1x1x256xf32>
    %c0_17 = arith.constant 0 : index
    %c0_18 = arith.constant 0 : index
    %c0_19 = arith.constant 0 : index
    %41 = vector.load %arg6[%c0_17, %c0_18, %c0_19] : memref<1x1x256xf32, #tpu.memory_space<vmem>>, vector<1x1x256xf32>
    tpu.vector_store %arg6[%c0_17, %c0_18, %c0_19], %40 {strides = array<i32>} : memref<1x1x256xf32, #tpu.memory_space<vmem>>, vector<1x1x256xf32>,
    return
  }
  func.func @transform_0(%arg0: i32) -> (i32, i32) {
    %c0_i32 = arith.constant 0 : i32
    %c0_i32_0 = arith.constant 0 : i32
    return %arg0, %c0_i32 : i32, i32
  }
  func.func @transform_1(%arg0: i32) -> (i32, i32) {
    %c0_i32 = arith.constant 0 : i32
    %c0_i32_0 = arith.constant 0 : i32
    %c0_i32_1 = arith.constant 0 : i32
    return %c0_i32, %c0_i32_0 : i32, i32
  }
  func.func @transform_2(%arg0: i32) -> (i32, i32) {
    %c0_i32 = arith.constant 0 : i32
    %c0_i32_0 = arith.constant 0 : i32
    %c0_i32_1 = arith.constant 0 : i32
    return %c0_i32, %c0_i32_0 : i32, i32
  }
  func.func @transform_3(%arg0: i32) -> (i32, i32) {
    %c0_i32 = arith.constant 0 : i32
    %c0_i32_0 = arith.constant 0 : i32
    %c0_i32_1 = arith.constant 0 : i32
    return %c0_i32, %c0_i32_0 : i32, i32
  }
  func.func @transform_4(%arg0: i32) -> i32 {
    %c0_i32 = arith.constant 0 : i32
    %c0_i32_0 = arith.constant 0 : i32
    return %c0_i32 : i32
  }
  func.func @transform_5(%arg0: i32) -> (i32, i32, i32) {
    %c0_i32 = arith.constant 0 : i32
    %c0_i32_0 = arith.constant 0 : i32
    %c0_i32_1 = arith.constant 0 : i32
    return %arg0, %c0_i32, %c0_i32_0 : i32, i32, i32
  }
}

</mosaic_0001>

<llo_original>
// kernel: tpu_custom_call.1
$region0: #{tpu_custom_call.1}
  #allocation0 [shape = 'u32[]', space=smem, size = 0x4, offset = 0x4, fixed_abs, tag = 'smem constant byte address 0x4 - core index']
  #allocation1 [shape = 'u32[144,128]{1,0:T(1,128)}', space=vmem, size = 0x12000, scoped, tag = 'internal scratch']
  %s0 = inlined_call_operand.hbm [shape: f32[512,128], index: 0, kind: input, shape index: {}]
  %s1 = inlined_call_operand.hbm [shape: f32[128,256], index: 1, kind: input, shape index: {}]
  %s2 = inlined_call_operand.vmem [shape: f32[1,256], index: 2, kind: input, shape index: {}]
  %s3 = inlined_call_operand.vmem [shape: f32[1,256], index: 3, kind: input, shape index: {}]
  %s4 = inlined_call_operand.vmem [shape: f32[2], index: 4, kind: input, shape index: {}]
  %s5 = inlined_call_operand.hbm [shape: f32[2,1,256], index: 5, kind: output, shape index: {}]
  %s6 = sld [smem:[#allocation0]]
  $region65: #{tpu_custom_call.1} parent=0
    _
  %s8 = ssub.s32 1, %s6
  %s9 = scalar_select 0, %s8, %s6
  $region1: #{tpu_custom_call.1} parent=0
    #allocation2 [shape = 'u8[262144]{0}', space=vmem, size = 0x40000, scoped, tag = 'input window, operand 0']
    #allocation3 [shape = 's32[2]{0}', space=sflag, size = 0x8, scoped, tag = 'scoped memory for tpu_custom_call.1']
    #allocation4 [shape = 's32[2]{0}', space=sflag, size = 0x8, scoped, tag = 'scoped memory for tpu_custom_call.1']
    #allocation5 [shape = 's32[2]{0}', space=sflag, size = 0x8, scoped, tag = 'scoped memory for tpu_custom_call.1']
    #allocation6 [shape = 'u8[131072]{0}', space=vmem, size = 0x20000, scoped, tag = 'input window, operand 1, single buffered']
    #allocation7 [shape = 's32[1]{0}', space=sflag, size = 0x4, scoped, tag = 'scoped memory for tpu_custom_call.1']
    #allocation8 [shape = 'u8[512]{0}', space=smem, size = 0x200, scoped, tag = 'input window, operand 4, single buffered']
    #allocation9 [shape = 'u8[2048]{0}', space=vmem, size = 0x800, scoped, tag = 'output window, operand 0']
    %10 = vsyncpa [#allocation3], 0
    %s11 = scalar_lea.sflag [#allocation3], 1
    %12 = vsyncpa %s11, 0
    %13 = vsyncpa [#allocation7], 0
    %14 = vsyncpa [#allocation5], 0
    %15 = vsyncpa [#allocation4], 0
    %s16 = scalar_lea.sflag [#allocation4], 1
    %17 = vsyncpa %s16, 0
    loop: start=0, step=1, limit=4
    $region2: #{tpu_custom_call.1} parent=1 // loop_pre_header
      _
    $region3: #{tpu_custom_call.1} parent=1 // loop_header
      %s19 = sphi 0, %s23
      %p20 = scmp.ge.s32.totalorder %s19, 4
      %s29 = sphi 0, %s31
      %s32 = sphi 0, %s29
      %s33 = sphi 0, %s32
      %s49 = sphi 0, %s33
      %s53 = sphi 0, %s53
      %s55 = sphi 0, %s53
      %s56 = sphi 0, %s55
      %s70 = sphi 0, %s56
      %s74 = sphi 0, %s74
      %s76 = sphi 0, %s74
      %s77 = sphi 0, %s76
      %s91 = sphi 0, %s77
      %s95 = sphi 0, %s95
      %s97 = sphi 0, %s95
      %s98 = sphi 0, %s97
      %s112 = sphi 0, %s98
      %s116 = sphi 0, %s116
      %s118 = sphi 0, %s116
      %s119 = sphi 0, %s118
      %s133 = sphi 0, %s119
      %s139 = sphi 0, %s141
      %s142 = sphi 0, %s139
      %s143 = sphi 0, %s142
      %s159 = sphi 0, %s143
    $region4: #{tpu_custom_call.1} parent=1 // loop_header_branch
      %22 = sbr.rel (%p20) target = $region8
    $region5: #{tpu_custom_call.1} parent=1 // loop_body
      %s24 = ssub.s32 %s19, 1
      %s25 = ssub.s32 %s19, 2
      %s26 = sadd.s32 %s19, 1
      %s27 = ssub.s32 %s19, %s26
      %p28 = scmp.eq.s32.totalorder %s27, 0
      %s30 = sadd.s32 %s29, 1
      %s31 = scalar_select %p28, %s29, %s30
      %p34 = pneg %p28
      %p35 = scmp.eq.s32.totalorder %s19, 1
      %p36 = por %p34, %p35
      %p37 = scmp.ne.s32.totalorder %s29, %s32
      %p38 = scmp.eq.s32.totalorder %s19, 0
      %p39 = por %p37, %p38
      %p40 = scmp.ne.s32.totalorder %s29, %s32
      %p41 = scmp.eq.s32.totalorder %s24, 1
      %p42 = por %p40, %p41
      %p43 = scmp.ne.s32.totalorder %s32, %s33
      %p44 = scmp.eq.s32.totalorder %s24, 0
      %p45 = por %p43, %p44
      %p46 = scmp.ne.s32.totalorder %s32, %s33
      %p47 = scmp.eq.s32.totalorder %s25, 1
      %p48 = por %p46, %p47
      %p50 = scmp.ne.s32.totalorder %s33, %s49
      %p51 = scmp.eq.s32.totalorder %s25, 0
      %p52 = por %p50, %p51
      %s54 = sadd.s32 %s53, 1
      %p57 = scmp.eq.s32.totalorder %s19, 1
      %p58 = scmp.ne.s32.totalorder %s53, %s55
      %p59 = scmp.eq.s32.totalorder %s19, 0
      %p60 = por %p58, %p59
      %p61 = scmp.ne.s32.totalorder %s53, %s55
      %p62 = scmp.eq.s32.totalorder %s24, 1
      %p63 = por %p61, %p62
      %p64 = scmp.ne.s32.totalorder %s55, %s56
      %p65 = scmp.eq.s32.totalorder %s24, 0
      %p66 = por %p64, %p65
      %p67 = scmp.ne.s32.totalorder %s55, %s56
      %p68 = scmp.eq.s32.totalorder %s25, 1
      %p69 = por %p67, %p68
      %p71 = scmp.ne.s32.totalorder %s56, %s70
      %p72 = scmp.eq.s32.totalorder %s25, 0
      %p73 = por %p71, %p72
      %s75 = sadd.s32 %s74, 1
      %p78 = scmp.eq.s32.totalorder %s19, 1
      %p79 = scmp.ne.s32.totalorder %s74, %s76
      %p80 = scmp.eq.s32.totalorder %s19, 0
      %p81 = por %p79, %p80
      %p82 = scmp.ne.s32.totalorder %s74, %s76
      %p83 = scmp.eq.s32.totalorder %s24, 1
      %p84 = por %p82, %p83
      %p85 = scmp.ne.s32.totalorder %s76, %s77
      %p86 = scmp.eq.s32.totalorder %s24, 0
      %p87 = por %p85, %p86
      %p88 = scmp.ne.s32.totalorder %s76, %s77
      %p89 = scmp.eq.s32.totalorder %s25, 1
      %p90 = por %p88, %p89
      %p92 = scmp.ne.s32.totalorder %s77, %s91
      %p93 = scmp.eq.s32.totalorder %s25, 0
      %p94 = por %p92, %p93
      %s96 = sadd.s32 %s95, 1
      %p99 = scmp.eq.s32.totalorder %s19, 1
      %p100 = scmp.ne.s32.totalorder %s95, %s97
      %p101 = scmp.eq.s32.totalorder %s19, 0
      %p102 = por %p100, %p101
      %p103 = scmp.ne.s32.totalorder %s95, %s97
      %p104 = scmp.eq.s32.totalorder %s24, 1
      %p105 = por %p103, %p104
      %p106 = scmp.ne.s32.totalorder %s97, %s98
      %p107 = scmp.eq.s32.totalorder %s24, 0
      %p108 = por %p106, %p107
      %p109 = scmp.ne.s32.totalorder %s97, %s98
      %p110 = scmp.eq.s32.totalorder %s25, 1
      %p111 = por %p109, %p110
      %p113 = scmp.ne.s32.totalorder %s98, %s112
      %p114 = scmp.eq.s32.totalorder %s25, 0
      %p115 = por %p113, %p114
      %s117 = sadd.s32 %s116, 1
      %p120 = scmp.eq.s32.totalorder %s19, 1
      %p121 = scmp.ne.s32.totalorder %s116, %s118
      %p122 = scmp.eq.s32.totalorder %s19, 0
      %p123 = por %p121, %p122
      %p124 = scmp.ne.s32.totalorder %s116, %s118
      %p125 = scmp.eq.s32.totalorder %s24, 1
      %p126 = por %p124, %p125
      %p127 = scmp.ne.s32.totalorder %s118, %s119
      %p128 = scmp.eq.s32.totalorder %s24, 0
      %p129 = por %p127, %p128
      %p130 = scmp.ne.s32.totalorder %s118, %s119
      %p131 = scmp.eq.s32.totalorder %s25, 1
      %p132 = por %p130, %p131
      %p134 = scmp.ne.s32.totalorder %s119, %s133
      %p135 = scmp.eq.s32.totalorder %s25, 0
      %p136 = por %p134, %p135
      %s137 = ssub.s32 %s19, %s26
      %p138 = scmp.eq.s32.totalorder %s137, 0
      %s140 = sadd.s32 %s139, 1
      %s141 = scalar_select %p138, %s139, %s140
      %p144 = pneg %p138
      %p145 = scmp.eq.s32.totalorder %s19, 1
      %p146 = por %p144, %p145
      %p147 = scmp.ne.s32.totalorder %s139, %s142
      %p148 = scmp.eq.s32.totalorder %s19, 0
      %p149 = por %p147, %p148
      %p150 = scmp.ne.s32.totalorder %s139, %s142
      %p151 = scmp.eq.s32.totalorder %s24, 1
      %p152 = por %p150, %p151
      %p153 = scmp.ne.s32.totalorder %s142, %s143
      %p154 = scmp.eq.s32.totalorder %s24, 0
      %p155 = por %p153, %p154
      %p156 = scmp.ne.s32.totalorder %s142, %s143
      %p157 = scmp.eq.s32.totalorder %s25, 1
      %p158 = por %p156, %p157
      %p160 = scmp.ne.s32.totalorder %s143, %s159
      %p161 = scmp.eq.s32.totalorder %s25, 0
      %p162 = por %p160, %p161
      %p163 = scmp.le.s32.totalorder 1, %s19
      %p164 = scmp.lt.s32.totalorder %s19, 3
      %p165 = pnand %p163, %p164
      %p166 = pneg %p165
      // Predicated region
      $region9: #{tpu_custom_call.1} parent=5 // pred_check
        _
      $region10: #{tpu_custom_call.1} parent=5 // pred_check_branch
        %168 = sbr.rel (%p165) target = $region12
      $region11: #{tpu_custom_call.1} parent=5 // pred_region
        %s169 = ssub.s32 %s19, 1
        // Predicated region
        $region13: #{tpu_custom_call.1} parent=11 // pred_check
          %p170 = pneg %p66
        $region14: #{tpu_custom_call.1} parent=11 // pred_check_branch
          %172 = sbr.rel (%p170) target = $region16
        $region15: #{tpu_custom_call.1} parent=11 // pred_region
          %s174 = ssub.s32 4096, 4096
          %175 = vsyncadd [#allocation7], %s174
          %s176 = sshll.u32 [#allocation6], 4
          %s177 = int_to_ptr.vmem [resolvable:$true] %s176
          %182 = dma.hbm_to_vmem [thread:$0]  %s1, 4096, %s177, [#allocation7], 256, 256, 16
        $region16: #{tpu_custom_call.1} parent=11 // pred_fallthru
          _
        // Predicated region
        $region17: #{tpu_custom_call.1} parent=11 // pred_check
          %p183 = pneg %p87
        $region18: #{tpu_custom_call.1} parent=11 // pred_check_branch
          %185 = sbr.rel (%p183) target = $region20
        $region19: #{tpu_custom_call.1} parent=11 // pred_region
          _
        $region20: #{tpu_custom_call.1} parent=11 // pred_fallthru
          _
        // Predicated region
        $region21: #{tpu_custom_call.1} parent=11 // pred_check
          %p186 = pneg %p108
        $region22: #{tpu_custom_call.1} parent=11 // pred_check_branch
          %188 = sbr.rel (%p186) target = $region24
        $region23: #{tpu_custom_call.1} parent=11 // pred_region
          _
        $region24: #{tpu_custom_call.1} parent=11 // pred_fallthru
          _
        // Predicated region
        $region25: #{tpu_custom_call.1} parent=11 // pred_check
          %p189 = pneg %p129
        $region26: #{tpu_custom_call.1} parent=11 // pred_check_branch
          %191 = sbr.rel (%p189) target = $region28
        $region27: #{tpu_custom_call.1} parent=11 // pred_region
          %s193 = ssub.s32 16, 16
          %194 = vsyncadd [#allocation5], %s193
          %s196 = sshll.u32 %s4, 4
          %s197 = int_to_ptr.vmem [resolvable:$true] %s196
          %199 = dma.vmem_to_smem %s197, 16, [#allocation8], [#allocation5]
        $region28: #{tpu_custom_call.1} parent=11 // pred_fallthru
          _
      $region12: #{tpu_custom_call.1} parent=5 // pred_fallthru
        _
      %p200 = scmp.lt.s32.totalorder %s19, 2
      // Predicated region
      $region29: #{tpu_custom_call.1} parent=5 // pred_check
        %p201 = pneg %p200
      $region30: #{tpu_custom_call.1} parent=5 // pred_check_branch
        %203 = sbr.rel (%p201) target = $region32
      $region31: #{tpu_custom_call.1} parent=5 // pred_region
        // Predicated region
        $region33: #{tpu_custom_call.1} parent=31 // pred_check
          %p204 = pneg %p39
        $region34: #{tpu_custom_call.1} parent=31 // pred_check_branch
          %206 = sbr.rel (%p204) target = $region36
        $region35: #{tpu_custom_call.1} parent=31 // pred_region
          %s207 = sand.u32 %s29, 1
          %s208 = scalar_lea.sflag [#allocation3], %s207
          %s209 = sand.u32 %s29, 1
          %s210 = smul.addr %s209, 256
          %s211 = scalar_lea.vmem [#allocation2], %s210
          %s212 = smul.u32 32, %s19
          %s214 = ssub.s32 4096, 4096
          %215 = vsyncadd %s208, %s214
          %s216 = smul.addr %s212, 128
          %s217 = scalar_lea.hbm %s0, %s216
          %s218 = sshll.u32 %s211, 4
          %s219 = int_to_ptr.vmem [resolvable:$true] %s218
          %224 = dma.hbm_to_vmem [thread:$0]  %s217, 4096, %s219, %s208, 128, 128, 8
        $region36: #{tpu_custom_call.1} parent=31 // pred_fallthru
          _
      $region32: #{tpu_custom_call.1} parent=5 // pred_fallthru
        _
      %p225 = scmp.le.s32.totalorder 1, %s19
      %p226 = scmp.lt.s32.totalorder %s19, 3
      %p227 = pnand %p225, %p226
      %p228 = pneg %p227
      // Predicated region
      $region37: #{tpu_custom_call.1} parent=5 // pred_check
        _
      $region38: #{tpu_custom_call.1} parent=5 // pred_check_branch
        %230 = sbr.rel (%p227) target = $region40
      $region39: #{tpu_custom_call.1} parent=5 // pred_region
        %s231 = ssub.s32 %s19, 1
        %s232 = sand.u32 %s32, 1
        %s233 = scalar_lea.sflag [#allocation3], %s232
        %s234 = sand.u32 %s32, 1
        %s235 = smul.addr %s234, 256
        %s236 = scalar_lea.vmem [#allocation2], %s235
        // Predicated region
        $region41: #{tpu_custom_call.1} parent=39 // pred_check
          %p237 = pneg %p45
        $region42: #{tpu_custom_call.1} parent=39 // pred_check_branch
          %239 = sbr.rel (%p237) target = $region44
        $region43: #{tpu_custom_call.1} parent=39 // pred_region
          %240 = dma.done %s233, 4096
        $region44: #{tpu_custom_call.1} parent=39 // pred_fallthru
          _
        // Predicated region
        $region45: #{tpu_custom_call.1} parent=39 // pred_check
          %p241 = pneg %p66
        $region46: #{tpu_custom_call.1} parent=39 // pred_check_branch
          %243 = sbr.rel (%p241) target = $region48
        $region47: #{tpu_custom_call.1} parent=39 // pred_region
          %244 = dma.done [#allocation7], 4096
        $region48: #{tpu_custom_call.1} parent=39 // pred_fallthru
          _
        // Predicated region
        $region49: #{tpu_custom_call.1} parent=39 // pred_check
          %p245 = pneg %p129
        $region50: #{tpu_custom_call.1} parent=39 // pred_check_branch
          %247 = sbr.rel (%p245) target = $region52
        $region51: #{tpu_custom_call.1} parent=39 // pred_region
          %248 = dma.done [#allocation5], 16
        $region52: #{tpu_custom_call.1} parent=39 // pred_fallthru
          _
        %249 = sfence
        %s250 = sand.u32 %s32, 1
        %s251 = scalar_lea.sflag [#allocation3], %s250
        %s252 = sand.u32 %s32, 1
        %s253 = smul.addr %s252, 256
        %s254 = scalar_lea.vmem [#allocation2], %s253
        %p255 = pneg %p45
        %p256 = pneg %p42
        %p257 = pneg %p66
        %p258 = pneg %p63
        %p259 = pneg %p87
        %p260 = pneg %p84
        %p261 = pneg %p108
        %p262 = pneg %p105
        %p263 = pneg %p129
        %p264 = pneg %p126
        %p265 = pneg %p155
        %p266 = pneg %p152
        %s267 = sand.u32 %s142, 1
        %s268 = scalar_lea.sflag [#allocation4], %s267
        %s269 = sand.u32 %s142, 1
        %s270 = smul.addr %s269, 2
        %s271 = scalar_lea.vmem [#allocation9], %s270
        %s272 = smul.u32 32, %s24
        %v273 = vld [vmem:[%s236] sm:$0xff]
        %v274 = vld [vmem:[%s236 + $0x8] sm:$0xff]
        %v275 = vld [vmem:[%s236 + $0x10] sm:$0xff]
        %v276 = vld [vmem:[%s236 + $0x18] sm:$0xff]
        %v277 = vld [vmem:[%s236 + $0x20] sm:$0xff]
        %v278 = vld [vmem:[%s236 + $0x28] sm:$0xff]
        %v279 = vld [vmem:[%s236 + $0x30] sm:$0xff]
        %v280 = vld [vmem:[%s236 + $0x38] sm:$0xff]
        %v281 = vld [vmem:[%s236 + $0x40] sm:$0xff]
        %v282 = vld [vmem:[%s236 + $0x48] sm:$0xff]
        %v283 = vld [vmem:[%s236 + $0x50] sm:$0xff]
        %v284 = vld [vmem:[%s236 + $0x58] sm:$0xff]
        %v285 = vld [vmem:[%s236 + $0x60] sm:$0xff]
        %v286 = vld [vmem:[%s236 + $0x68] sm:$0xff]
        %v287 = vld [vmem:[%s236 + $0x70] sm:$0xff]
        %v288 = vld [vmem:[%s236 + $0x78] sm:$0xff]
        %v289 = vld [vmem:[%s236 + $0x80] sm:$0xff]
        %v290 = vld [vmem:[%s236 + $0x88] sm:$0xff]
        %v291 = vld [vmem:[%s236 + $0x90] sm:$0xff]
        %v292 = vld [vmem:[%s236 + $0x98] sm:$0xff]
        %v293 = vld [vmem:[%s236 + $0xa0] sm:$0xff]
        %v294 = vld [vmem:[%s236 + $0xa8] sm:$0xff]
        %v295 = vld [vmem:[%s236 + $0xb0] sm:$0xff]
        %v296 = vld [vmem:[%s236 + $0xb8] sm:$0xff]
        %v297 = vld [vmem:[%s236 + $0xc0] sm:$0xff]
        %v298 = vld [vmem:[%s236 + $0xc8] sm:$0xff]
        %v299 = vld [vmem:[%s236 + $0xd0] sm:$0xff]
        %v300 = vld [vmem:[%s236 + $0xd8] sm:$0xff]
        %v301 = vld [vmem:[%s236 + $0xe0] sm:$0xff]
        %v302 = vld [vmem:[%s236 + $0xe8] sm:$0xff]
        %v303 = vld [vmem:[%s236 + $0xf0] sm:$0xff]
        %v304 = vld [vmem:[%s236 + $0xf8] sm:$0xff]
        %v305 = vld [vmem:[#allocation6] sm:$0xff]
        %v306 = vld [vmem:[#allocation6 + $0x8] sm:$0xff]
        %v307 = vld [vmem:[#allocation6 + $0x10] sm:$0xff]
        %v308 = vld [vmem:[#allocation6 + $0x18] sm:$0xff]
        %v309 = vld [vmem:[#allocation6 + $0x20] sm:$0xff]
        %v310 = vld [vmem:[#allocation6 + $0x28] sm:$0xff]
        %v311 = vld [vmem:[#allocation6 + $0x30] sm:$0xff]
        %v312 = vld [vmem:[#allocation6 + $0x38] sm:$0xff]
        %v313 = vld [vmem:[#allocation6 + $0x40] sm:$0xff]
        %v314 = vld [vmem:[#allocation6 + $0x48] sm:$0xff]
        %v315 = vld [vmem:[#allocation6 + $0x50] sm:$0xff]
        %v316 = vld [vmem:[#allocation6 + $0x58] sm:$0xff]
        %v317 = vld [vmem:[#allocation6 + $0x60] sm:$0xff]
        %v318 = vld [vmem:[#allocation6 + $0x68] sm:$0xff]
        %v319 = vld [vmem:[#allocation6 + $0x70] sm:$0xff]
        %v320 = vld [vmem:[#allocation6 + $0x78] sm:$0xff]
        %v321 = vld [vmem:[#allocation6 + $0x80] sm:$0xff]
        %v322 = vld [vmem:[#allocation6 + $0x88] sm:$0xff]
        %v323 = vld [vmem:[#allocation6 + $0x90] sm:$0xff]
        %v324 = vld [vmem:[#allocation6 + $0x98] sm:$0xff]
        %v325 = vld [vmem:[#allocation6 + $0xa0] sm:$0xff]
        %v326 = vld [vmem:[#allocation6 + $0xa8] sm:$0xff]
        %v327 = vld [vmem:[#allocation6 + $0xb0] sm:$0xff]
        %v328 = vld [vmem:[#allocation6 + $0xb8] sm:$0xff]
        %v329 = vld [vmem:[#allocation6 + $0xc0] sm:$0xff]
        %v330 = vld [vmem:[#allocation6 + $0xc8] sm:$0xff]
        %v331 = vld [vmem:[#allocation6 + $0xd0] sm:$0xff]
        %v332 = vld [vmem:[#allocation6 + $0xd8] sm:$0xff]
        %v333 = vld [vmem:[#allocation6 + $0xe0] sm:$0xff]
        %v334 = vld [vmem:[#allocation6 + $0xe8] sm:$0xff]
        %v335 = vld [vmem:[#allocation6 + $0xf0] sm:$0xff]
        %v336 = vld [vmem:[#allocation6 + $0xf8] sm:$0xff]
        %v337 = vld [vmem:[%s2] sm:$0x3]
        %v339 = vlaneseq
        %v340 = vshrl.u32 %v339, 7
        %v341 = vsub.s32 0, %v340
        %v342 = vrot.slane %v337, %v341
        %v343 = vlaneseq
        %v344 = vshrl.u32 %v343, 7
        %v345 = vsub.s32 1, %v344
        %v346 = vrot.slane %v337, %v345
        %349 = vmatprep.subr.mxu0 %v336
        %350 = vmatpush1.msra.mxu0 %v335
        %351 = vmatprep.subr.mxu0 %v334
        %352 = vmatpush1.msra.mxu0 %v333
        %353 = vmatprep.subr.mxu0 %v332
        %354 = vmatpush1.msra.mxu0 %v331
        %355 = vmatprep.subr.mxu0 %v330
        %356 = vmatpush1.msra.mxu0 %v329
        %357 = vmatprep.subr.mxu0 %v328
        %358 = vmatpush1.msra.mxu0 %v327
        %359 = vmatprep.subr.mxu0 %v326
        %360 = vmatpush1.msra.mxu0 %v325
        %361 = vmatprep.subr.mxu0 %v324
        %362 = vmatpush1.msra.mxu0 %v323
        %363 = vmatprep.subr.mxu0 %v322
        %364 = vmatpush1.msra.mxu0 %v321
        %365 = vmatprep.subr.mxu0 %v320
        %366 = vmatpush1.msra.mxu0 %v319
        %367 = vmatprep.subr.mxu0 %v318
        %368 = vmatpush1.msra.mxu0 %v317
        %369 = vmatprep.subr.mxu0 %v316
        %370 = vmatpush1.msra.mxu0 %v315
        %371 = vmatprep.subr.mxu0 %v314
        %372 = vmatpush1.msra.mxu0 %v313
        %373 = vmatprep.subr.mxu0 %v312
        %374 = vmatpush1.msra.mxu0 %v311
        %375 = vmatprep.subr.mxu0 %v310
        %376 = vmatpush1.msra.mxu0 %v309
        %377 = vmatprep.subr.mxu0 %v308
        %378 = vmatpush1.msra.mxu0 %v307
        %379 = vmatprep.subr.mxu0 %v306
        %380 = vmatpush1.msra.mxu0 %v305
        %381 = vmatprep.subr.mxu0 0.0
        %382 = vmatpush2.msra.mxu0 0.0
        %383 = vmatprep.subr.mxu0 0.0
        %384 = vmatpush2.msra.mxu0 0.0
        %385 = vmatprep.subr.mxu0 0.0
        %386 = vmatpush2.msra.mxu0 0.0
        %387 = vmatprep.subr.mxu0 0.0
        %388 = vmatpush2.msra.mxu0 0.0
        %389 = vmatprep.subr.mxu0 0.0
        %390 = vmatpush2.msra.mxu0 0.0
        %391 = vmatprep.subr.mxu0 0.0
        %392 = vmatpush2.msra.mxu0 0.0
        %393 = vmatprep.subr.mxu0 0.0
        %394 = vmatpush2.msra.mxu0 0.0
        %395 = vmatprep.subr.mxu0 0.0
        %396 = vmatpush2.msra.mxu0 0.0
        %397 = vmatprep.subr.mxu0 0.0
        %398 = vmatpush2.msra.mxu0 0.0
        %399 = vmatprep.subr.mxu0 0.0
        %400 = vmatpush2.msra.mxu0 0.0
        %401 = vmatprep.subr.mxu0 0.0
        %402 = vmatpush2.msra.mxu0 0.0
        %403 = vmatprep.subr.mxu0 0.0
        %404 = vmatpush2.msra.mxu0 0.0
        %405 = vmatprep.subr.mxu0 0.0
        %406 = vmatpush2.msra.mxu0 0.0
        %407 = vmatprep.subr.mxu0 0.0
        %408 = vmatpush2.msra.mxu0 0.0
        %409 = vmatprep.subr.mxu0 0.0
        %410 = vmatpush2.msra.mxu0 0.0
        %411 = vmatprep.subr.mxu0 0.0
        %412 = vmatpush2.msra.mxu0 0.0
        %413 = vmatprep.mubr.f32.mxu0 0.0
        %414 = vmatmul.mubr.f32.gmra.mxu0 %v273
        %v415 = vpop.f32.mrf.mxu0
        %v416 = vadd.f32 %v342, %v415
        %v417 = vpop.f32.mrf.mxu0
        %v418 = vadd.f32 %v346, %v417
        %419 = vmatprep.mubr.f32.mxu0 0.0
        %420 = vmatmul.mubr.f32.gmra.mxu0 %v274
        %v421 = vpop.f32.mrf.mxu0
        %v422 = vadd.f32 %v342, %v421
        %v423 = vpop.f32.mrf.mxu0
        %v424 = vadd.f32 %v346, %v423
        %425 = vmatprep.mubr.f32.mxu0 0.0
        %426 = vmatmul.mubr.f32.gmra.mxu0 %v275
        %v427 = vpop.f32.mrf.mxu0
        %v428 = vadd.f32 %v342, %v427
        %v429 = vpop.f32.mrf.mxu0
        %v430 = vadd.f32 %v346, %v429
        %431 = vmatprep.mubr.f32.mxu0 0.0
        %432 = vmatmul.mubr.f32.gmra.mxu0 %v276
        %v433 = vpop.f32.mrf.mxu0
        %v434 = vadd.f32 %v342, %v433
        %v435 = vpop.f32.mrf.mxu0
        %v436 = vadd.f32 %v346, %v435
        %437 = vmatprep.mubr.f32.mxu0 0.0
        %438 = vmatmul.mubr.f32.gmra.mxu0 %v277
        %v439 = vpop.f32.mrf.mxu0
        %v440 = vadd.f32 %v342, %v439
        %v441 = vpop.f32.mrf.mxu0
        %v442 = vadd.f32 %v346, %v441
        %443 = vmatprep.mubr.f32.mxu0 0.0
        %444 = vmatmul.mubr.f32.gmra.mxu0 %v278
        %v445 = vpop.f32.mrf.mxu0
        %v446 = vadd.f32 %v342, %v445
        %v447 = vpop.f32.mrf.mxu0
        %v448 = vadd.f32 %v346, %v447
        %449 = vmatprep.mubr.f32.mxu0 0.0
        %450 = vmatmul.mubr.f32.gmra.mxu0 %v279
        %v451 = vpop.f32.mrf.mxu0
        %v452 = vadd.f32 %v342, %v451
        %v453 = vpop.f32.mrf.mxu0
        %v454 = vadd.f32 %v346, %v453
        %455 = vmatprep.mubr.f32.mxu0 0.0
        %456 = vmatmul.mubr.f32.gmra.mxu0 %v280
        %v457 = vpop.f32.mrf.mxu0
        %v458 = vadd.f32 %v342, %v457
        %v459 = vpop.f32.mrf.mxu0
        %v460 = vadd.f32 %v346, %v459
        %461 = vmatprep.mubr.f32.mxu0 0.0
        %462 = vmatmul.mubr.f32.gmra.mxu0 %v281
        %v463 = vpop.f32.mrf.mxu0
        %v464 = vadd.f32 %v342, %v463
        %v465 = vpop.f32.mrf.mxu0
        %v466 = vadd.f32 %v346, %v465
        %467 = vmatprep.mubr.f32.mxu0 0.0
        %468 = vmatmul.mubr.f32.gmra.mxu0 %v282
        %v469 = vpop.f32.mrf.mxu0
        %v470 = vadd.f32 %v342, %v469
        %v471 = vpop.f32.mrf.mxu0
        %v472 = vadd.f32 %v346, %v471
        %473 = vmatprep.mubr.f32.mxu0 0.0
        %474 = vmatmul.mubr.f32.gmra.mxu0 %v283
        %v475 = vpop.f32.mrf.mxu0
        %v476 = vadd.f32 %v342, %v475
        %v477 = vpop.f32.mrf.mxu0
        %v478 = vadd.f32 %v346, %v477
        %479 = vmatprep.mubr.f32.mxu0 0.0
        %480 = vmatmul.mubr.f32.gmra.mxu0 %v284
        %v481 = vpop.f32.mrf.mxu0
        %v482 = vadd.f32 %v342, %v481
        %v483 = vpop.f32.mrf.mxu0
        %v484 = vadd.f32 %v346, %v483
        %485 = vmatprep.mubr.f32.mxu0 0.0
        %486 = vmatmul.mubr.f32.gmra.mxu0 %v285
        %v487 = vpop.f32.mrf.mxu0
        %v488 = vadd.f32 %v342, %v487
        %v489 = vpop.f32.mrf.mxu0
        %v490 = vadd.f32 %v346, %v489
        %491 = vmatprep.mubr.f32.mxu0 0.0
        %492 = vmatmul.mubr.f32.gmra.mxu0 %v286
        %v493 = vpop.f32.mrf.mxu0
        %v494 = vadd.f32 %v342, %v493
        %v495 = vpop.f32.mrf.mxu0
        %v496 = vadd.f32 %v346, %v495
        %497 = vmatprep.mubr.f32.mxu0 0.0
        %498 = vmatmul.mubr.f32.gmra.mxu0 %v287
        %v499 = vpop.f32.mrf.mxu0
        %v500 = vadd.f32 %v342, %v499
        %v501 = vpop.f32.mrf.mxu0
        %v502 = vadd.f32 %v346, %v501
        %503 = vmatprep.mubr.f32.mxu0 0.0
        %504 = vmatmul.mubr.f32.gmra.mxu0 %v288
        %v505 = vpop.f32.mrf.mxu0
        %v506 = vadd.f32 %v342, %v505
        %v507 = vpop.f32.mrf.mxu0
        %v508 = vadd.f32 %v346, %v507
        %509 = vmatprep.mubr.f32.mxu0 0.0
        %510 = vmatmul.mubr.f32.gmra.mxu0 %v289
        %v511 = vpop.f32.mrf.mxu0
        %v512 = vadd.f32 %v342, %v511
        %v513 = vpop.f32.mrf.mxu0
        %v514 = vadd.f32 %v346, %v513
        %515 = vmatprep.mubr.f32.mxu0 0.0
        %516 = vmatmul.mubr.f32.gmra.mxu0 %v290
        %v517 = vpop.f32.mrf.mxu0
        %v518 = vadd.f32 %v342, %v517
        %v519 = vpop.f32.mrf.mxu0
        %v520 = vadd.f32 %v346, %v519
        %521 = vmatprep.mubr.f32.mxu0 0.0
        %522 = vmatmul.mubr.f32.gmra.mxu0 %v291
        %v523 = vpop.f32.mrf.mxu0
        %v524 = vadd.f32 %v342, %v523
        %v525 = vpop.f32.mrf.mxu0
        %v526 = vadd.f32 %v346, %v525
        %527 = vmatprep.mubr.f32.mxu0 0.0
        %528 = vmatmul.mubr.f32.gmra.mxu0 %v292
        %v529 = vpop.f32.mrf.mxu0
        %v530 = vadd.f32 %v342, %v529
        %v531 = vpop.f32.mrf.mxu0
        %v532 = vadd.f32 %v346, %v531
        %533 = vmatprep.mubr.f32.mxu0 0.0
        %534 = vmatmul.mubr.f32.gmra.mxu0 %v293
        %v535 = vpop.f32.mrf.mxu0
        %v536 = vadd.f32 %v342, %v535
        %v537 = vpop.f32.mrf.mxu0
        %v538 = vadd.f32 %v346, %v537
        %539 = vmatprep.mubr.f32.mxu0 0.0
        %540 = vmatmul.mubr.f32.gmra.mxu0 %v294
        %v541 = vpop.f32.mrf.mxu0
        %v542 = vadd.f32 %v342, %v541
        %v543 = vpop.f32.mrf.mxu0
        %v544 = vadd.f32 %v346, %v543
        %545 = vmatprep.mubr.f32.mxu0 0.0
        %546 = vmatmul.mubr.f32.gmra.mxu0 %v295
        %v547 = vpop.f32.mrf.mxu0
        %v548 = vadd.f32 %v342, %v547
        %v549 = vpop.f32.mrf.mxu0
        %v550 = vadd.f32 %v346, %v549
        %551 = vmatprep.mubr.f32.mxu0 0.0
        %552 = vmatmul.mubr.f32.gmra.mxu0 %v296
        %v553 = vpop.f32.mrf.mxu0
        %v554 = vadd.f32 %v342, %v553
        %v555 = vpop.f32.mrf.mxu0
        %v556 = vadd.f32 %v346, %v555
        %557 = vmatprep.mubr.f32.mxu0 0.0
        %558 = vmatmul.mubr.f32.gmra.mxu0 %v297
        %v559 = vpop.f32.mrf.mxu0
        %v560 = vadd.f32 %v342, %v559
        %v561 = vpop.f32.mrf.mxu0
        %v562 = vadd.f32 %v346, %v561
        %563 = vmatprep.mubr.f32.mxu0 0.0
        %564 = vmatmul.mubr.f32.gmra.mxu0 %v298
        %v565 = vpop.f32.mrf.mxu0
        %v566 = vadd.f32 %v342, %v565
        %v567 = vpop.f32.mrf.mxu0
        %v568 = vadd.f32 %v346, %v567
        %569 = vmatprep.mubr.f32.mxu0 0.0
        %570 = vmatmul.mubr.f32.gmra.mxu0 %v299
        %v571 = vpop.f32.mrf.mxu0
        %v572 = vadd.f32 %v342, %v571
        %v573 = vpop.f32.mrf.mxu0
        %v574 = vadd.f32 %v346, %v573
        %575 = vmatprep.mubr.f32.mxu0 0.0
        %576 = vmatmul.mubr.f32.gmra.mxu0 %v300
        %v577 = vpop.f32.mrf.mxu0
        %v578 = vadd.f32 %v342, %v577
        %v579 = vpop.f32.mrf.mxu0
        %v580 = vadd.f32 %v346, %v579
        %581 = vmatprep.mubr.f32.mxu0 0.0
        %582 = vmatmul.mubr.f32.gmra.mxu0 %v301
        %v583 = vpop.f32.mrf.mxu0
        %v584 = vadd.f32 %v342, %v583
        %v585 = vpop.f32.mrf.mxu0
        %v586 = vadd.f32 %v346, %v585
        %587 = vmatprep.mubr.f32.mxu0 0.0
        %588 = vmatmul.mubr.f32.gmra.mxu0 %v302
        %v589 = vpop.f32.mrf.mxu0
        %v590 = vadd.f32 %v342, %v589
        %v591 = vpop.f32.mrf.mxu0
        %v592 = vadd.f32 %v346, %v591
        %593 = vmatprep.mubr.f32.mxu0 0.0
        %594 = vmatmul.mubr.f32.gmra.mxu0 %v303
        %v595 = vpop.f32.mrf.mxu0
        %v596 = vadd.f32 %v342, %v595
        %v597 = vpop.f32.mrf.mxu0
        %v598 = vadd.f32 %v346, %v597
        %599 = vmatprep.mubr.f32.mxu0 0.0
        %600 = vmatmul.mubr.f32.gmra.mxu0 %v304
        %v601 = vpop.f32.mrf.mxu0
        %v602 = vadd.f32 %v342, %v601
        %v603 = vpop.f32.mrf.mxu0
        %v604 = vadd.f32 %v346, %v603
        %605 = vdwg.mxu0
        %v606 = vmul.f32 %v416, 0.5
        %v607 = vmul.f32 %v418, 0.5
        %v608 = vmul.f32 %v422, 0.5
        %v609 = vmul.f32 %v424, 0.5
        %v610 = vmul.f32 %v428, 0.5
        %v611 = vmul.f32 %v430, 0.5
        %v612 = vmul.f32 %v434, 0.5
        %v613 = vmul.f32 %v436, 0.5
        %v614 = vmul.f32 %v440, 0.5
        %v615 = vmul.f32 %v442, 0.5
        %v616 = vmul.f32 %v446, 0.5
        %v617 = vmul.f32 %v448, 0.5
        %v618 = vmul.f32 %v452, 0.5
        %v619 = vmul.f32 %v454, 0.5
        %v620 = vmul.f32 %v458, 0.5
        %v621 = vmul.f32 %v460, 0.5
        %v622 = vmul.f32 %v464, 0.5
        %v623 = vmul.f32 %v466, 0.5
        %v624 = vmul.f32 %v470, 0.5
        %v625 = vmul.f32 %v472, 0.5
        %v626 = vmul.f32 %v476, 0.5
        %v627 = vmul.f32 %v478, 0.5
        %v628 = vmul.f32 %v482, 0.5
        %v629 = vmul.f32 %v484, 0.5
        %v630 = vmul.f32 %v488, 0.5
        %v631 = vmul.f32 %v490, 0.5
        %v632 = vmul.f32 %v494, 0.5
        %v633 = vmul.f32 %v496, 0.5
        %v634 = vmul.f32 %v500, 0.5
        %v635 = vmul.f32 %v502, 0.5
        %v636 = vmul.f32 %v506, 0.5
        %v637 = vmul.f32 %v508, 0.5
        %v638 = vmul.f32 %v512, 0.5
        %v639 = vmul.f32 %v514, 0.5
        %v640 = vmul.f32 %v518, 0.5
        %v641 = vmul.f32 %v520, 0.5
        %v642 = vmul.f32 %v524, 0.5
        %v643 = vmul.f32 %v526, 0.5
        %v644 = vmul.f32 %v530, 0.5
        %v645 = vmul.f32 %v532, 0.5
        %v646 = vmul.f32 %v536, 0.5
        %v647 = vmul.f32 %v538, 0.5
        %v648 = vmul.f32 %v542, 0.5
        %v649 = vmul.f32 %v544, 0.5
        %v650 = vmul.f32 %v548, 0.5
        %v651 = vmul.f32 %v550, 0.5
        %v652 = vmul.f32 %v554, 0.5
        %v653 = vmul.f32 %v556, 0.5
        %v654 = vmul.f32 %v560, 0.5
        %v655 = vmul.f32 %v562, 0.5
        %v656 = vmul.f32 %v566, 0.5
        %v657 = vmul.f32 %v568, 0.5
        %v658 = vmul.f32 %v572, 0.5
        %v659 = vmul.f32 %v574, 0.5
        %v660 = vmul.f32 %v578, 0.5
        %v661 = vmul.f32 %v580, 0.5
        %v662 = vmul.f32 %v584, 0.5
        %v663 = vmul.f32 %v586, 0.5
        %v664 = vmul.f32 %v590, 0.5
        %v665 = vmul.f32 %v592, 0.5
        %v666 = vmul.f32 %v596, 0.5
        %v667 = vmul.f32 %v598, 0.5
        %v668 = vmul.f32 %v602, 0.5
        %v669 = vmul.f32 %v604, 0.5
        %v670 = vtanh.pop %v606
        %v671 = vtanh.pop %v607
        %v672 = vtanh.pop %v608
        %v673 = vtanh.pop %v609
        %v674 = vtanh.pop %v610
        %v675 = vtanh.pop %v611
        %v676 = vtanh.pop %v612
        %v677 = vtanh.pop %v613
        %v678 = vtanh.pop %v614
        %v679 = vtanh.pop %v615
        %v680 = vtanh.pop %v616
        %v681 = vtanh.pop %v617
        %v682 = vtanh.pop %v618
        %v683 = vtanh.pop %v619
        %v684 = vtanh.pop %v620
        %v685 = vtanh.pop %v621
        %v686 = vtanh.pop %v622
        %v687 = vtanh.pop %v623
        %v688 = vtanh.pop %v624
        %v689 = vtanh.pop %v625
        %v690 = vtanh.pop %v626
        %v691 = vtanh.pop %v627
        %v692 = vtanh.pop %v628
        %v693 = vtanh.pop %v629
        %v694 = vtanh.pop %v630
        %v695 = vtanh.pop %v631
        %v696 = vtanh.pop %v632
        %v697 = vtanh.pop %v633
        %v698 = vtanh.pop %v634
        %v699 = vtanh.pop %v635
        %v700 = vtanh.pop %v636
        %v701 = vtanh.pop %v637
        %v702 = vtanh.pop %v638
        %v703 = vtanh.pop %v639
        %v704 = vtanh.pop %v640
        %v705 = vtanh.pop %v641
        %v706 = vtanh.pop %v642
        %v707 = vtanh.pop %v643
        %v708 = vtanh.pop %v644
        %v709 = vtanh.pop %v645
        %v710 = vtanh.pop %v646
        %v711 = vtanh.pop %v647
        %v712 = vtanh.pop %v648
        %v713 = vtanh.pop %v649
        %v714 = vtanh.pop %v650
        %v715 = vtanh.pop %v651
        %v716 = vtanh.pop %v652
        %v717 = vtanh.pop %v653
        %v718 = vtanh.pop %v654
        %v719 = vtanh.pop %v655
        %v720 = vtanh.pop %v656
        %v721 = vtanh.pop %v657
        %v722 = vtanh.pop %v658
        %v723 = vtanh.pop %v659
        %v724 = vtanh.pop %v660
        %v725 = vtanh.pop %v661
        %v726 = vtanh.pop %v662
        %v727 = vtanh.pop %v663
        %v728 = vtanh.pop %v664
        %v729 = vtanh.pop %v665
        %v730 = vtanh.pop %v666
        %v731 = vtanh.pop %v667
        %v732 = vtanh.pop %v668
        %v733 = vtanh.pop %v669
        %v734 = vadd.f32 %v670, 1.0
        %v735 = vadd.f32 %v671, 1.0
        %v736 = vadd.f32 %v672, 1.0
        %v737 = vadd.f32 %v673, 1.0
        %v738 = vadd.f32 %v674, 1.0
        %v739 = vadd.f32 %v675, 1.0
        %v740 = vadd.f32 %v676, 1.0
        %v741 = vadd.f32 %v677, 1.0
        %v742 = vadd.f32 %v678, 1.0
        %v743 = vadd.f32 %v679, 1.0
        %v744 = vadd.f32 %v680, 1.0
        %v745 = vadd.f32 %v681, 1.0
        %v746 = vadd.f32 %v682, 1.0
        %v747 = vadd.f32 %v683, 1.0
        %v748 = vadd.f32 %v684, 1.0
        %v749 = vadd.f32 %v685, 1.0
        %v750 = vadd.f32 %v686, 1.0
        %v751 = vadd.f32 %v687, 1.0
        %v752 = vadd.f32 %v688, 1.0
        %v753 = vadd.f32 %v689, 1.0
        %v754 = vadd.f32 %v690, 1.0
        %v755 = vadd.f32 %v691, 1.0
        %v756 = vadd.f32 %v692, 1.0
        %v757 = vadd.f32 %v693, 1.0
        %v758 = vadd.f32 %v694, 1.0
        %v759 = vadd.f32 %v695, 1.0
        %v760 = vadd.f32 %v696, 1.0
        %v761 = vadd.f32 %v697, 1.0
        %v762 = vadd.f32 %v698, 1.0
        %v763 = vadd.f32 %v699, 1.0
        %v764 = vadd.f32 %v700, 1.0
        %v765 = vadd.f32 %v701, 1.0
        %v766 = vadd.f32 %v702, 1.0
        %v767 = vadd.f32 %v703, 1.0
        %v768 = vadd.f32 %v704, 1.0
        %v769 = vadd.f32 %v705, 1.0
        %v770 = vadd.f32 %v706, 1.0
        %v771 = vadd.f32 %v707, 1.0
        %v772 = vadd.f32 %v708, 1.0
        %v773 = vadd.f32 %v709, 1.0
        %v774 = vadd.f32 %v710, 1.0
        %v775 = vadd.f32 %v711, 1.0
        %v776 = vadd.f32 %v712, 1.0
        %v777 = vadd.f32 %v713, 1.0
        %v778 = vadd.f32 %v714, 1.0
        %v779 = vadd.f32 %v715, 1.0
        %v780 = vadd.f32 %v716, 1.0
        %v781 = vadd.f32 %v717, 1.0
        %v782 = vadd.f32 %v718, 1.0
        %v783 = vadd.f32 %v719, 1.0
        %v784 = vadd.f32 %v720, 1.0
        %v785 = vadd.f32 %v721, 1.0
        %v786 = vadd.f32 %v722, 1.0
        %v787 = vadd.f32 %v723, 1.0
        %v788 = vadd.f32 %v724, 1.0
        %v789 = vadd.f32 %v725, 1.0
        %v790 = vadd.f32 %v726, 1.0
        %v791 = vadd.f32 %v727, 1.0
        %v792 = vadd.f32 %v728, 1.0
        %v793 = vadd.f32 %v729, 1.0
        %v794 = vadd.f32 %v730, 1.0
        %v795 = vadd.f32 %v731, 1.0
        %v796 = vadd.f32 %v732, 1.0
        %v797 = vadd.f32 %v733, 1.0
        %v798 = vmul.f32 %v734, 0.5
        %v799 = vmul.f32 %v735, 0.5
        %v800 = vmul.f32 %v736, 0.5
        %v801 = vmul.f32 %v737, 0.5
        %v802 = vmul.f32 %v738, 0.5
        %v803 = vmul.f32 %v739, 0.5
        %v804 = vmul.f32 %v740, 0.5
        %v805 = vmul.f32 %v741, 0.5
        %v806 = vmul.f32 %v742, 0.5
        %v807 = vmul.f32 %v743, 0.5
        %v808 = vmul.f32 %v744, 0.5
        %v809 = vmul.f32 %v745, 0.5
        %v810 = vmul.f32 %v746, 0.5
        %v811 = vmul.f32 %v747, 0.5
        %v812 = vmul.f32 %v748, 0.5
        %v813 = vmul.f32 %v749, 0.5
        %v814 = vmul.f32 %v750, 0.5
        %v815 = vmul.f32 %v751, 0.5
        %v816 = vmul.f32 %v752, 0.5
        %v817 = vmul.f32 %v753, 0.5
        %v818 = vmul.f32 %v754, 0.5
        %v819 = vmul.f32 %v755, 0.5
        %v820 = vmul.f32 %v756, 0.5
        %v821 = vmul.f32 %v757, 0.5
        %v822 = vmul.f32 %v758, 0.5
        %v823 = vmul.f32 %v759, 0.5
        %v824 = vmul.f32 %v760, 0.5
        %v825 = vmul.f32 %v761, 0.5
        %v826 = vmul.f32 %v762, 0.5
        %v827 = vmul.f32 %v763, 0.5
        %v828 = vmul.f32 %v764, 0.5
        %v829 = vmul.f32 %v765, 0.5
        %v830 = vmul.f32 %v766, 0.5
        %v831 = vmul.f32 %v767, 0.5
        %v832 = vmul.f32 %v768, 0.5
        %v833 = vmul.f32 %v769, 0.5
        %v834 = vmul.f32 %v770, 0.5
        %v835 = vmul.f32 %v771, 0.5
        %v836 = vmul.f32 %v772, 0.5
        %v837 = vmul.f32 %v773, 0.5
        %v838 = vmul.f32 %v774, 0.5
        %v839 = vmul.f32 %v775, 0.5
        %v840 = vmul.f32 %v776, 0.5
        %v841 = vmul.f32 %v777, 0.5
        %v842 = vmul.f32 %v778, 0.5
        %v843 = vmul.f32 %v779, 0.5
        %v844 = vmul.f32 %v780, 0.5
        %v845 = vmul.f32 %v781, 0.5
        %v846 = vmul.f32 %v782, 0.5
        %v847 = vmul.f32 %v783, 0.5
        %v848 = vmul.f32 %v784, 0.5
        %v849 = vmul.f32 %v785, 0.5
        %v850 = vmul.f32 %v786, 0.5
        %v851 = vmul.f32 %v787, 0.5
        %v852 = vmul.f32 %v788, 0.5
        %v853 = vmul.f32 %v789, 0.5
        %v854 = vmul.f32 %v790, 0.5
        %v855 = vmul.f32 %v791, 0.5
        %v856 = vmul.f32 %v792, 0.5
        %v857 = vmul.f32 %v793, 0.5
        %v858 = vmul.f32 %v794, 0.5
        %v859 = vmul.f32 %v795, 0.5
        %v860 = vmul.f32 %v796, 0.5
        %v861 = vmul.f32 %v797, 0.5
        %v862 = vadd.f32 %v798, %v799
        %863 = vadd.xlane.f32.xlu0 %v862
        %v864 = vpop.xlane.xlu0 %863
        %v865 = vadd.f32 %v800, %v801
        %866 = vadd.xlane.f32.xlu0 %v865
        %v867 = vpop.xlane.xlu0 %866
        %v868 = vadd.f32 %v802, %v803
        %869 = vadd.xlane.f32.xlu0 %v868
        %v870 = vpop.xlane.xlu0 %869
        %v871 = vadd.f32 %v804, %v805
        %872 = vadd.xlane.f32.xlu0 %v871
        %v873 = vpop.xlane.xlu0 %872
        %v874 = vadd.f32 %v806, %v807
        %875 = vadd.xlane.f32.xlu0 %v874
        %v876 = vpop.xlane.xlu0 %875
        %v877 = vadd.f32 %v808, %v809
        %878 = vadd.xlane.f32.xlu0 %v877
        %v879 = vpop.xlane.xlu0 %878
        %v880 = vadd.f32 %v810, %v811
        %881 = vadd.xlane.f32.xlu0 %v880
        %v882 = vpop.xlane.xlu0 %881
        %v883 = vadd.f32 %v812, %v813
        %884 = vadd.xlane.f32.xlu0 %v883
        %v885 = vpop.xlane.xlu0 %884
        %v886 = vadd.f32 %v814, %v815
        %887 = vadd.xlane.f32.xlu0 %v886
        %v888 = vpop.xlane.xlu0 %887
        %v889 = vadd.f32 %v816, %v817
        %890 = vadd.xlane.f32.xlu0 %v889
        %v891 = vpop.xlane.xlu0 %890
        %v892 = vadd.f32 %v818, %v819
        %893 = vadd.xlane.f32.xlu0 %v892
        %v894 = vpop.xlane.xlu0 %893
        %v895 = vadd.f32 %v820, %v821
        %896 = vadd.xlane.f32.xlu0 %v895
        %v897 = vpop.xlane.xlu0 %896
        %v898 = vadd.f32 %v822, %v823
        %899 = vadd.xlane.f32.xlu0 %v898
        %v900 = vpop.xlane.xlu0 %899
        %v901 = vadd.f32 %v824, %v825
        %902 = vadd.xlane.f32.xlu0 %v901
        %v903 = vpop.xlane.xlu0 %902
        %v904 = vadd.f32 %v826, %v827
        %905 = vadd.xlane.f32.xlu0 %v904
        %v906 = vpop.xlane.xlu0 %905
        %v907 = vadd.f32 %v828, %v829
        %908 = vadd.xlane.f32.xlu0 %v907
        %v909 = vpop.xlane.xlu0 %908
        %v910 = vadd.f32 %v830, %v831
        %911 = vadd.xlane.f32.xlu0 %v910
        %v912 = vpop.xlane.xlu0 %911
        %v913 = vadd.f32 %v832, %v833
        %914 = vadd.xlane.f32.xlu0 %v913
        %v915 = vpop.xlane.xlu0 %914
        %v916 = vadd.f32 %v834, %v835
        %917 = vadd.xlane.f32.xlu0 %v916
        %v918 = vpop.xlane.xlu0 %917
        %v919 = vadd.f32 %v836, %v837
        %920 = vadd.xlane.f32.xlu0 %v919
        %v921 = vpop.xlane.xlu0 %920
        %v922 = vadd.f32 %v838, %v839
        %923 = vadd.xlane.f32.xlu0 %v922
        %v924 = vpop.xlane.xlu0 %923
        %v925 = vadd.f32 %v840, %v841
        %926 = vadd.xlane.f32.xlu0 %v925
        %v927 = vpop.xlane.xlu0 %926
        %v928 = vadd.f32 %v842, %v843
        %929 = vadd.xlane.f32.xlu0 %v928
        %v930 = vpop.xlane.xlu0 %929
        %v931 = vadd.f32 %v844, %v845
        %932 = vadd.xlane.f32.xlu0 %v931
        %v933 = vpop.xlane.xlu0 %932
        %v934 = vadd.f32 %v846, %v847
        %935 = vadd.xlane.f32.xlu0 %v934
        %v936 = vpop.xlane.xlu0 %935
        %v937 = vadd.f32 %v848, %v849
        %938 = vadd.xlane.f32.xlu0 %v937
        %v939 = vpop.xlane.xlu0 %938
        %v940 = vadd.f32 %v850, %v851
        %941 = vadd.xlane.f32.xlu0 %v940
        %v942 = vpop.xlane.xlu0 %941
        %v943 = vadd.f32 %v852, %v853
        %944 = vadd.xlane.f32.xlu0 %v943
        %v945 = vpop.xlane.xlu0 %944
        %v946 = vadd.f32 %v854, %v855
        %947 = vadd.xlane.f32.xlu0 %v946
        %v948 = vpop.xlane.xlu0 %947
        %v949 = vadd.f32 %v856, %v857
        %950 = vadd.xlane.f32.xlu0 %v949
        %v951 = vpop.xlane.xlu0 %950
        %v952 = vadd.f32 %v858, %v859
        %953 = vadd.xlane.f32.xlu0 %v952
        %v954 = vpop.xlane.xlu0 %953
        %v955 = vadd.f32 %v860, %v861
        %956 = vadd.xlane.f32.xlu0 %v955
        %v957 = vpop.xlane.xlu0 %956
        %v958 = vmul.f32 %v864, 0.00390625
        %v959 = vmul.f32 %v867, 0.00390625
        %v960 = vmul.f32 %v870, 0.00390625
        %v961 = vmul.f32 %v873, 0.00390625
        %v962 = vmul.f32 %v876, 0.00390625
        %v963 = vmul.f32 %v879, 0.00390625
        %v964 = vmul.f32 %v882, 0.00390625
        %v965 = vmul.f32 %v885, 0.00390625
        %v966 = vmul.f32 %v888, 0.00390625
        %v967 = vmul.f32 %v891, 0.00390625
        %v968 = vmul.f32 %v894, 0.00390625
        %v969 = vmul.f32 %v897, 0.00390625
        %v970 = vmul.f32 %v900, 0.00390625
        %v971 = vmul.f32 %v903, 0.00390625
        %v972 = vmul.f32 %v906, 0.00390625
        %v973 = vmul.f32 %v909, 0.00390625
        %v974 = vmul.f32 %v912, 0.00390625
        %v975 = vmul.f32 %v915, 0.00390625
        %v976 = vmul.f32 %v918, 0.00390625
        %v977 = vmul.f32 %v921, 0.00390625
        %v978 = vmul.f32 %v924, 0.00390625
        %v979 = vmul.f32 %v927, 0.00390625
        %v980 = vmul.f32 %v930, 0.00390625
        %v981 = vmul.f32 %v933, 0.00390625
        %v982 = vmul.f32 %v936, 0.00390625
        %v983 = vmul.f32 %v939, 0.00390625
        %v984 = vmul.f32 %v942, 0.00390625
        %v985 = vmul.f32 %v945, 0.00390625
        %v986 = vmul.f32 %v948, 0.00390625
        %v987 = vmul.f32 %v951, 0.00390625
        %v988 = vmul.f32 %v954, 0.00390625
        %v989 = vmul.f32 %v957, 0.00390625
        %v990 = vmul.f32 %v798, %v798
        %v991 = vmul.f32 %v799, %v799
        %v992 = vmul.f32 %v800, %v800
        %v993 = vmul.f32 %v801, %v801
        %v994 = vmul.f32 %v802, %v802
        %v995 = vmul.f32 %v803, %v803
        %v996 = vmul.f32 %v804, %v804
        %v997 = vmul.f32 %v805, %v805
        %v998 = vmul.f32 %v806, %v806
        %v999 = vmul.f32 %v807, %v807
        %v1000 = vmul.f32 %v808, %v808
        %v1001 = vmul.f32 %v809, %v809
        %v1002 = vmul.f32 %v810, %v810
        %v1003 = vmul.f32 %v811, %v811
        %v1004 = vmul.f32 %v812, %v812
        %v1005 = vmul.f32 %v813, %v813
        %v1006 = vmul.f32 %v814, %v814
        %v1007 = vmul.f32 %v815, %v815
        %v1008 = vmul.f32 %v816, %v816
        %v1009 = vmul.f32 %v817, %v817
        %v1010 = vmul.f32 %v818, %v818
        %v1011 = vmul.f32 %v819, %v819
        %v1012 = vmul.f32 %v820, %v820
        %v1013 = vmul.f32 %v821, %v821
        %v1014 = vmul.f32 %v822, %v822
        %v1015 = vmul.f32 %v823, %v823
        %v1016 = vmul.f32 %v824, %v824
        %v1017 = vmul.f32 %v825, %v825
        %v1018 = vmul.f32 %v826, %v826
        %v1019 = vmul.f32 %v827, %v827
        %v1020 = vmul.f32 %v828, %v828
        %v1021 = vmul.f32 %v829, %v829
        %v1022 = vmul.f32 %v830, %v830
        %v1023 = vmul.f32 %v831, %v831
        %v1024 = vmul.f32 %v832, %v832
        %v1025 = vmul.f32 %v833, %v833
        %v1026 = vmul.f32 %v834, %v834
        %v1027 = vmul.f32 %v835, %v835
        %v1028 = vmul.f32 %v836, %v836
        %v1029 = vmul.f32 %v837, %v837
        %v1030 = vmul.f32 %v838, %v838
        %v1031 = vmul.f32 %v839, %v839
        %v1032 = vmul.f32 %v840, %v840
        %v1033 = vmul.f32 %v841, %v841
        %v1034 = vmul.f32 %v842, %v842
        %v1035 = vmul.f32 %v843, %v843
        %v1036 = vmul.f32 %v844, %v844
        %v1037 = vmul.f32 %v845, %v845
        %v1038 = vmul.f32 %v846, %v846
        %v1039 = vmul.f32 %v847, %v847
        %v1040 = vmul.f32 %v848, %v848
        %v1041 = vmul.f32 %v849, %v849
        %v1042 = vmul.f32 %v850, %v850
        %v1043 = vmul.f32 %v851, %v851
        %v1044 = vmul.f32 %v852, %v852
        %v1045 = vmul.f32 %v853, %v853
        %v1046 = vmul.f32 %v854, %v854
        %v1047 = vmul.f32 %v855, %v855
        %v1048 = vmul.f32 %v856, %v856
        %v1049 = vmul.f32 %v857, %v857
        %v1050 = vmul.f32 %v858, %v858
        %v1051 = vmul.f32 %v859, %v859
        %v1052 = vmul.f32 %v860, %v860
        %v1053 = vmul.f32 %v861, %v861
        %v1054 = vadd.f32 %v990, %v991
        %1055 = vadd.xlane.f32.xlu0 %v1054
        %v1056 = vpop.xlane.xlu0 %1055
        %v1057 = vadd.f32 %v992, %v993
        %1058 = vadd.xlane.f32.xlu0 %v1057
        %v1059 = vpop.xlane.xlu0 %1058
        %v1060 = vadd.f32 %v994, %v995
        %1061 = vadd.xlane.f32.xlu0 %v1060
        %v1062 = vpop.xlane.xlu0 %1061
        %v1063 = vadd.f32 %v996, %v997
        %1064 = vadd.xlane.f32.xlu0 %v1063
        %v1065 = vpop.xlane.xlu0 %1064
        %v1066 = vadd.f32 %v998, %v999
        %1067 = vadd.xlane.f32.xlu0 %v1066
        %v1068 = vpop.xlane.xlu0 %1067
        %v1069 = vadd.f32 %v1000, %v1001
        %1070 = vadd.xlane.f32.xlu0 %v1069
        %v1071 = vpop.xlane.xlu0 %1070
        %v1072 = vadd.f32 %v1002, %v1003
        %1073 = vadd.xlane.f32.xlu0 %v1072
        %v1074 = vpop.xlane.xlu0 %1073
        %v1075 = vadd.f32 %v1004, %v1005
        %1076 = vadd.xlane.f32.xlu0 %v1075
        %v1077 = vpop.xlane.xlu0 %1076
        %v1078 = vadd.f32 %v1006, %v1007
        %1079 = vadd.xlane.f32.xlu0 %v1078
        %v1080 = vpop.xlane.xlu0 %1079
        %v1081 = vadd.f32 %v1008, %v1009
        %1082 = vadd.xlane.f32.xlu0 %v1081
        %v1083 = vpop.xlane.xlu0 %1082
        %v1084 = vadd.f32 %v1010, %v1011
        %1085 = vadd.xlane.f32.xlu0 %v1084
        %v1086 = vpop.xlane.xlu0 %1085
        %v1087 = vadd.f32 %v1012, %v1013
        %1088 = vadd.xlane.f32.xlu0 %v1087
        %v1089 = vpop.xlane.xlu0 %1088
        %v1090 = vadd.f32 %v1014, %v1015
        %1091 = vadd.xlane.f32.xlu0 %v1090
        %v1092 = vpop.xlane.xlu0 %1091
        %v1093 = vadd.f32 %v1016, %v1017
        %1094 = vadd.xlane.f32.xlu0 %v1093
        %v1095 = vpop.xlane.xlu0 %1094
        %v1096 = vadd.f32 %v1018, %v1019
        %1097 = vadd.xlane.f32.xlu0 %v1096
        %v1098 = vpop.xlane.xlu0 %1097
        %v1099 = vadd.f32 %v1020, %v1021
        %1100 = vadd.xlane.f32.xlu0 %v1099
        %v1101 = vpop.xlane.xlu0 %1100
        %v1102 = vadd.f32 %v1022, %v1023
        %1103 = vadd.xlane.f32.xlu0 %v1102
        %v1104 = vpop.xlane.xlu0 %1103
        %v1105 = vadd.f32 %v1024, %v1025
        %1106 = vadd.xlane.f32.xlu0 %v1105
        %v1107 = vpop.xlane.xlu0 %1106
        %v1108 = vadd.f32 %v1026, %v1027
        %1109 = vadd.xlane.f32.xlu0 %v1108
        %v1110 = vpop.xlane.xlu0 %1109
        %v1111 = vadd.f32 %v1028, %v1029
        %1112 = vadd.xlane.f32.xlu0 %v1111
        %v1113 = vpop.xlane.xlu0 %1112
        %v1114 = vadd.f32 %v1030, %v1031
        %1115 = vadd.xlane.f32.xlu0 %v1114
        %v1116 = vpop.xlane.xlu0 %1115
        %v1117 = vadd.f32 %v1032, %v1033
        %1118 = vadd.xlane.f32.xlu0 %v1117
        %v1119 = vpop.xlane.xlu0 %1118
        %v1120 = vadd.f32 %v1034, %v1035
        %1121 = vadd.xlane.f32.xlu0 %v1120
        %v1122 = vpop.xlane.xlu0 %1121
        %v1123 = vadd.f32 %v1036, %v1037
        %1124 = vadd.xlane.f32.xlu0 %v1123
        %v1125 = vpop.xlane.xlu0 %1124
        %v1126 = vadd.f32 %v1038, %v1039
        %1127 = vadd.xlane.f32.xlu0 %v1126
        %v1128 = vpop.xlane.xlu0 %1127
        %v1129 = vadd.f32 %v1040, %v1041
        %1130 = vadd.xlane.f32.xlu0 %v1129
        %v1131 = vpop.xlane.xlu0 %1130
        %v1132 = vadd.f32 %v1042, %v1043
        %1133 = vadd.xlane.f32.xlu0 %v1132
        %v1134 = vpop.xlane.xlu0 %1133
        %v1135 = vadd.f32 %v1044, %v1045
        %1136 = vadd.xlane.f32.xlu0 %v1135
        %v1137 = vpop.xlane.xlu0 %1136
        %v1138 = vadd.f32 %v1046, %v1047
        %1139 = vadd.xlane.f32.xlu0 %v1138
        %v1140 = vpop.xlane.xlu0 %1139
        %v1141 = vadd.f32 %v1048, %v1049
        %1142 = vadd.xlane.f32.xlu0 %v1141
        %v1143 = vpop.xlane.xlu0 %1142
        %v1144 = vadd.f32 %v1050, %v1051
        %1145 = vadd.xlane.f32.xlu0 %v1144
        %v1146 = vpop.xlane.xlu0 %1145
        %v1147 = vadd.f32 %v1052, %v1053
        %1148 = vadd.xlane.f32.xlu0 %v1147
        %v1149 = vpop.xlane.xlu0 %1148
        %v1150 = vmul.f32 %v1056, 0.00390625
        %v1151 = vmul.f32 %v1059, 0.00390625
        %v1152 = vmul.f32 %v1062, 0.00390625
        %v1153 = vmul.f32 %v1065, 0.00390625
        %v1154 = vmul.f32 %v1068, 0.00390625
        %v1155 = vmul.f32 %v1071, 0.00390625
        %v1156 = vmul.f32 %v1074, 0.00390625
        %v1157 = vmul.f32 %v1077, 0.00390625
        %v1158 = vmul.f32 %v1080, 0.00390625
        %v1159 = vmul.f32 %v1083, 0.00390625
        %v1160 = vmul.f32 %v1086, 0.00390625
        %v1161 = vmul.f32 %v1089, 0.00390625
        %v1162 = vmul.f32 %v1092, 0.00390625
        %v1163 = vmul.f32 %v1095, 0.00390625
        %v1164 = vmul.f32 %v1098, 0.00390625
        %v1165 = vmul.f32 %v1101, 0.00390625
        %v1166 = vmul.f32 %v1104, 0.00390625
        %v1167 = vmul.f32 %v1107, 0.00390625
        %v1168 = vmul.f32 %v1110, 0.00390625
        %v1169 = vmul.f32 %v1113, 0.00390625
        %v1170 = vmul.f32 %v1116, 0.00390625
        %v1171 = vmul.f32 %v1119, 0.00390625
        %v1172 = vmul.f32 %v1122, 0.00390625
        %v1173 = vmul.f32 %v1125, 0.00390625
        %v1174 = vmul.f32 %v1128, 0.00390625
        %v1175 = vmul.f32 %v1131, 0.00390625
        %v1176 = vmul.f32 %v1134, 0.00390625
        %v1177 = vmul.f32 %v1137, 0.00390625
        %v1178 = vmul.f32 %v1140, 0.00390625
        %v1179 = vmul.f32 %v1143, 0.00390625
        %v1180 = vmul.f32 %v1146, 0.00390625
        %v1181 = vmul.f32 %v1149, 0.00390625
        %v1182 = vmul.f32 %v958, %v958
        %v1183 = vmul.f32 %v959, %v959
        %v1184 = vmul.f32 %v960, %v960
        %v1185 = vmul.f32 %v961, %v961
        %v1186 = vmul.f32 %v962, %v962
        %v1187 = vmul.f32 %v963, %v963
        %v1188 = vmul.f32 %v964, %v964
        %v1189 = vmul.f32 %v965, %v965
        %v1190 = vmul.f32 %v966, %v966
        %v1191 = vmul.f32 %v967, %v967
        %v1192 = vmul.f32 %v968, %v968
        %v1193 = vmul.f32 %v969, %v969
        %v1194 = vmul.f32 %v970, %v970
        %v1195 = vmul.f32 %v971, %v971
        %v1196 = vmul.f32 %v972, %v972
        %v1197 = vmul.f32 %v973, %v973
        %v1198 = vmul.f32 %v974, %v974
        %v1199 = vmul.f32 %v975, %v975
        %v1200 = vmul.f32 %v976, %v976
        %v1201 = vmul.f32 %v977, %v977
        %v1202 = vmul.f32 %v978, %v978
        %v1203 = vmul.f32 %v979, %v979
        %v1204 = vmul.f32 %v980, %v980
        %v1205 = vmul.f32 %v981, %v981
        %v1206 = vmul.f32 %v982, %v982
        %v1207 = vmul.f32 %v983, %v983
        %v1208 = vmul.f32 %v984, %v984
        %v1209 = vmul.f32 %v985, %v985
        %v1210 = vmul.f32 %v986, %v986
        %v1211 = vmul.f32 %v987, %v987
        %v1212 = vmul.f32 %v988, %v988
        %v1213 = vmul.f32 %v989, %v989
        %v1214 = vsub.f32 %v1150, %v1182
        %v1215 = vsub.f32 %v1151, %v1183
        %v1216 = vsub.f32 %v1152, %v1184
        %v1217 = vsub.f32 %v1153, %v1185
        %v1218 = vsub.f32 %v1154, %v1186
        %v1219 = vsub.f32 %v1155, %v1187
        %v1220 = vsub.f32 %v1156, %v1188
        %v1221 = vsub.f32 %v1157, %v1189
        %v1222 = vsub.f32 %v1158, %v1190
        %v1223 = vsub.f32 %v1159, %v1191
        %v1224 = vsub.f32 %v1160, %v1192
        %v1225 = vsub.f32 %v1161, %v1193
        %v1226 = vsub.f32 %v1162, %v1194
        %v1227 = vsub.f32 %v1163, %v1195
        %v1228 = vsub.f32 %v1164, %v1196
        %v1229 = vsub.f32 %v1165, %v1197
        %v1230 = vsub.f32 %v1166, %v1198
        %v1231 = vsub.f32 %v1167, %v1199
        %v1232 = vsub.f32 %v1168, %v1200
        %v1233 = vsub.f32 %v1169, %v1201
        %v1234 = vsub.f32 %v1170, %v1202
        %v1235 = vsub.f32 %v1171, %v1203
        %v1236 = vsub.f32 %v1172, %v1204
        %v1237 = vsub.f32 %v1173, %v1205
        %v1238 = vsub.f32 %v1174, %v1206
        %v1239 = vsub.f32 %v1175, %v1207
        %v1240 = vsub.f32 %v1176, %v1208
        %v1241 = vsub.f32 %v1177, %v1209
        %v1242 = vsub.f32 %v1178, %v1210
        %v1243 = vsub.f32 %v1179, %v1211
        %v1244 = vsub.f32 %v1180, %v1212
        %v1245 = vsub.f32 %v1181, %v1213
        %v1246 = vadd.f32 %v1214, 1e-05
        %v1247 = vadd.f32 %v1215, 1e-05
        %v1248 = vadd.f32 %v1216, 1e-05
        %v1249 = vadd.f32 %v1217, 1e-05
        %v1250 = vadd.f32 %v1218, 1e-05
        %v1251 = vadd.f32 %v1219, 1e-05
        %v1252 = vadd.f32 %v1220, 1e-05
        %v1253 = vadd.f32 %v1221, 1e-05
        %v1254 = vadd.f32 %v1222, 1e-05
        %v1255 = vadd.f32 %v1223, 1e-05
        %v1256 = vadd.f32 %v1224, 1e-05
        %v1257 = vadd.f32 %v1225, 1e-05
        %v1258 = vadd.f32 %v1226, 1e-05
        %v1259 = vadd.f32 %v1227, 1e-05
        %v1260 = vadd.f32 %v1228, 1e-05
        %v1261 = vadd.f32 %v1229, 1e-05
        %v1262 = vadd.f32 %v1230, 1e-05
        %v1263 = vadd.f32 %v1231, 1e-05
        %v1264 = vadd.f32 %v1232, 1e-05
        %v1265 = vadd.f32 %v1233, 1e-05
        %v1266 = vadd.f32 %v1234, 1e-05
        %v1267 = vadd.f32 %v1235, 1e-05
        %v1268 = vadd.f32 %v1236, 1e-05
        %v1269 = vadd.f32 %v1237, 1e-05
        %v1270 = vadd.f32 %v1238, 1e-05
        %v1271 = vadd.f32 %v1239, 1e-05
        %v1272 = vadd.f32 %v1240, 1e-05
        %v1273 = vadd.f32 %v1241, 1e-05
        %v1274 = vadd.f32 %v1242, 1e-05
        %v1275 = vadd.f32 %v1243, 1e-05
        %v1276 = vadd.f32 %v1244, 1e-05
        %v1277 = vadd.f32 %v1245, 1e-05
        %v1278 = vrsqrt.pop %v1246
        %v1279 = vrsqrt.pop %v1247
        %v1280 = vrsqrt.pop %v1248
        %v1281 = vrsqrt.pop %v1249
        %v1282 = vrsqrt.pop %v1250
        %v1283 = vrsqrt.pop %v1251
        %v1284 = vrsqrt.pop %v1252
        %v1285 = vrsqrt.pop %v1253
        %v1286 = vrsqrt.pop %v1254
        %v1287 = vrsqrt.pop %v1255
        %v1288 = vrsqrt.pop %v1256
        %v1289 = vrsqrt.pop %v1257
        %v1290 = vrsqrt.pop %v1258
        %v1291 = vrsqrt.pop %v1259
        %v1292 = vrsqrt.pop %v1260
        %v1293 = vrsqrt.pop %v1261
        %v1294 = vrsqrt.pop %v1262
        %v1295 = vrsqrt.pop %v1263
        %v1296 = vrsqrt.pop %v1264
        %v1297 = vrsqrt.pop %v1265
        %v1298 = vrsqrt.pop %v1266
        %v1299 = vrsqrt.pop %v1267
        %v1300 = vrsqrt.pop %v1268
        %v1301 = vrsqrt.pop %v1269
        %v1302 = vrsqrt.pop %v1270
        %v1303 = vrsqrt.pop %v1271
        %v1304 = vrsqrt.pop %v1272
        %v1305 = vrsqrt.pop %v1273
        %v1306 = vrsqrt.pop %v1274
        %v1307 = vrsqrt.pop %v1275
        %v1308 = vrsqrt.pop %v1276
        %v1309 = vrsqrt.pop %v1277
        %v1310 = vld [vmem:[%s3] sm:$0x3]
        %v1312 = vlaneseq
        %v1313 = vshrl.u32 %v1312, 7
        %v1314 = vsub.s32 0, %v1313
        %v1315 = vrot.slane %v1310, %v1314
        %v1316 = vlaneseq
        %v1317 = vshrl.u32 %v1316, 7
        %v1318 = vsub.s32 1, %v1317
        %v1319 = vrot.slane %v1310, %v1318
        %v1322 = vmul.f32 %v798, %v1315
        %v1323 = vmul.f32 %v799, %v1319
        %v1324 = vmul.f32 %v800, %v1315
        %v1325 = vmul.f32 %v801, %v1319
        %v1326 = vmul.f32 %v802, %v1315
        %v1327 = vmul.f32 %v803, %v1319
        %v1328 = vmul.f32 %v804, %v1315
        %v1329 = vmul.f32 %v805, %v1319
        %v1330 = vmul.f32 %v806, %v1315
        %v1331 = vmul.f32 %v807, %v1319
        %v1332 = vmul.f32 %v808, %v1315
        %v1333 = vmul.f32 %v809, %v1319
        %v1334 = vmul.f32 %v810, %v1315
        %v1335 = vmul.f32 %v811, %v1319
        %v1336 = vmul.f32 %v812, %v1315
        %v1337 = vmul.f32 %v813, %v1319
        %v1338 = vmul.f32 %v814, %v1315
        %v1339 = vmul.f32 %v815, %v1319
        %v1340 = vmul.f32 %v816, %v1315
        %v1341 = vmul.f32 %v817, %v1319
        %v1342 = vmul.f32 %v818, %v1315
        %v1343 = vmul.f32 %v819, %v1319
        %v1344 = vmul.f32 %v820, %v1315
        %v1345 = vmul.f32 %v821, %v1319
        %v1346 = vmul.f32 %v822, %v1315
        %v1347 = vmul.f32 %v823, %v1319
        %v1348 = vmul.f32 %v824, %v1315
        %v1349 = vmul.f32 %v825, %v1319
        %v1350 = vmul.f32 %v826, %v1315
        %v1351 = vmul.f32 %v827, %v1319
        %v1352 = vmul.f32 %v828, %v1315
        %v1353 = vmul.f32 %v829, %v1319
        %v1354 = vmul.f32 %v830, %v1315
        %v1355 = vmul.f32 %v831, %v1319
        %v1356 = vmul.f32 %v832, %v1315
        %v1357 = vmul.f32 %v833, %v1319
        %v1358 = vmul.f32 %v834, %v1315
        %v1359 = vmul.f32 %v835, %v1319
        %v1360 = vmul.f32 %v836, %v1315
        %v1361 = vmul.f32 %v837, %v1319
        %v1362 = vmul.f32 %v838, %v1315
        %v1363 = vmul.f32 %v839, %v1319
        %v1364 = vmul.f32 %v840, %v1315
        %v1365 = vmul.f32 %v841, %v1319
        %v1366 = vmul.f32 %v842, %v1315
        %v1367 = vmul.f32 %v843, %v1319
        %v1368 = vmul.f32 %v844, %v1315
        %v1369 = vmul.f32 %v845, %v1319
        %v1370 = vmul.f32 %v846, %v1315
        %v1371 = vmul.f32 %v847, %v1319
        %v1372 = vmul.f32 %v848, %v1315
        %v1373 = vmul.f32 %v849, %v1319
        %v1374 = vmul.f32 %v850, %v1315
        %v1375 = vmul.f32 %v851, %v1319
        %v1376 = vmul.f32 %v852, %v1315
        %v1377 = vmul.f32 %v853, %v1319
        %v1378 = vmul.f32 %v854, %v1315
        %v1379 = vmul.f32 %v855, %v1319
        %v1380 = vmul.f32 %v856, %v1315
        %v1381 = vmul.f32 %v857, %v1319
        %v1382 = vmul.f32 %v858, %v1315
        %v1383 = vmul.f32 %v859, %v1319
        %v1384 = vmul.f32 %v860, %v1315
        %v1385 = vmul.f32 %v861, %v1319
        %v1386 = vadd.f32 %v1322, %v1323
        %1387 = vadd.xlane.f32.xlu0 %v1386
        %v1388 = vpop.xlane.xlu0 %1387
        %v1389 = vadd.f32 %v1324, %v1325
        %1390 = vadd.xlane.f32.xlu0 %v1389
        %v1391 = vpop.xlane.xlu0 %1390
        %v1392 = vadd.f32 %v1326, %v1327
        %1393 = vadd.xlane.f32.xlu0 %v1392
        %v1394 = vpop.xlane.xlu0 %1393
        %v1395 = vadd.f32 %v1328, %v1329
        %1396 = vadd.xlane.f32.xlu0 %v1395
        %v1397 = vpop.xlane.xlu0 %1396
        %v1398 = vadd.f32 %v1330, %v1331
        %1399 = vadd.xlane.f32.xlu0 %v1398
        %v1400 = vpop.xlane.xlu0 %1399
        %v1401 = vadd.f32 %v1332, %v1333
        %1402 = vadd.xlane.f32.xlu0 %v1401
        %v1403 = vpop.xlane.xlu0 %1402
        %v1404 = vadd.f32 %v1334, %v1335
        %1405 = vadd.xlane.f32.xlu0 %v1404
        %v1406 = vpop.xlane.xlu0 %1405
        %v1407 = vadd.f32 %v1336, %v1337
        %1408 = vadd.xlane.f32.xlu0 %v1407
        %v1409 = vpop.xlane.xlu0 %1408
        %v1410 = vadd.f32 %v1338, %v1339
        %1411 = vadd.xlane.f32.xlu0 %v1410
        %v1412 = vpop.xlane.xlu0 %1411
        %v1413 = vadd.f32 %v1340, %v1341
        %1414 = vadd.xlane.f32.xlu0 %v1413
        %v1415 = vpop.xlane.xlu0 %1414
        %v1416 = vadd.f32 %v1342, %v1343
        %1417 = vadd.xlane.f32.xlu0 %v1416
        %v1418 = vpop.xlane.xlu0 %1417
        %v1419 = vadd.f32 %v1344, %v1345
        %1420 = vadd.xlane.f32.xlu0 %v1419
        %v1421 = vpop.xlane.xlu0 %1420
        %v1422 = vadd.f32 %v1346, %v1347
        %1423 = vadd.xlane.f32.xlu0 %v1422
        %v1424 = vpop.xlane.xlu0 %1423
        %v1425 = vadd.f32 %v1348, %v1349
        %1426 = vadd.xlane.f32.xlu0 %v1425
        %v1427 = vpop.xlane.xlu0 %1426
        %v1428 = vadd.f32 %v1350, %v1351
        %1429 = vadd.xlane.f32.xlu0 %v1428
        %v1430 = vpop.xlane.xlu0 %1429
        %v1431 = vadd.f32 %v1352, %v1353
        %1432 = vadd.xlane.f32.xlu0 %v1431
        %v1433 = vpop.xlane.xlu0 %1432
        %v1434 = vadd.f32 %v1354, %v1355
        %1435 = vadd.xlane.f32.xlu0 %v1434
        %v1436 = vpop.xlane.xlu0 %1435
        %v1437 = vadd.f32 %v1356, %v1357
        %1438 = vadd.xlane.f32.xlu0 %v1437
        %v1439 = vpop.xlane.xlu0 %1438
        %v1440 = vadd.f32 %v1358, %v1359
        %1441 = vadd.xlane.f32.xlu0 %v1440
        %v1442 = vpop.xlane.xlu0 %1441
        %v1443 = vadd.f32 %v1360, %v1361
        %1444 = vadd.xlane.f32.xlu0 %v1443
        %v1445 = vpop.xlane.xlu0 %1444
        %v1446 = vadd.f32 %v1362, %v1363
        %1447 = vadd.xlane.f32.xlu0 %v1446
        %v1448 = vpop.xlane.xlu0 %1447
        %v1449 = vadd.f32 %v1364, %v1365
        %1450 = vadd.xlane.f32.xlu0 %v1449
        %v1451 = vpop.xlane.xlu0 %1450
        %v1452 = vadd.f32 %v1366, %v1367
        %1453 = vadd.xlane.f32.xlu0 %v1452
        %v1454 = vpop.xlane.xlu0 %1453
        %v1455 = vadd.f32 %v1368, %v1369
        %1456 = vadd.xlane.f32.xlu0 %v1455
        %v1457 = vpop.xlane.xlu0 %1456
        %v1458 = vadd.f32 %v1370, %v1371
        %1459 = vadd.xlane.f32.xlu0 %v1458
        %v1460 = vpop.xlane.xlu0 %1459
        %v1461 = vadd.f32 %v1372, %v1373
        %1462 = vadd.xlane.f32.xlu0 %v1461
        %v1463 = vpop.xlane.xlu0 %1462
        %v1464 = vadd.f32 %v1374, %v1375
        %1465 = vadd.xlane.f32.xlu0 %v1464
        %v1466 = vpop.xlane.xlu0 %1465
        %v1467 = vadd.f32 %v1376, %v1377
        %1468 = vadd.xlane.f32.xlu0 %v1467
        %v1469 = vpop.xlane.xlu0 %1468
        %v1470 = vadd.f32 %v1378, %v1379
        %1471 = vadd.xlane.f32.xlu0 %v1470
        %v1472 = vpop.xlane.xlu0 %1471
        %v1473 = vadd.f32 %v1380, %v1381
        %1474 = vadd.xlane.f32.xlu0 %v1473
        %v1475 = vpop.xlane.xlu0 %1474
        %v1476 = vadd.f32 %v1382, %v1383
        %1477 = vadd.xlane.f32.xlu0 %v1476
        %v1478 = vpop.xlane.xlu0 %1477
        %v1479 = vadd.f32 %v1384, %v1385
        %1480 = vadd.xlane.f32.xlu0 %v1479
        %v1481 = vpop.xlane.xlu0 %1480
        %s1482 = sld [smem:[#allocation8]]
        %s1483 = sld [smem:[#allocation8 + $0x1]]
        %v1484 = vstv %s1482
        %v1485 = vmul.f32 %v958, %v1484
        %v1486 = vmul.f32 %v959, %v1484
        %v1487 = vmul.f32 %v960, %v1484
        %v1488 = vmul.f32 %v961, %v1484
        %v1489 = vmul.f32 %v962, %v1484
        %v1490 = vmul.f32 %v963, %v1484
        %v1491 = vmul.f32 %v964, %v1484
        %v1492 = vmul.f32 %v965, %v1484
        %v1493 = vmul.f32 %v966, %v1484
        %v1494 = vmul.f32 %v967, %v1484
        %v1495 = vmul.f32 %v968, %v1484
        %v1496 = vmul.f32 %v969, %v1484
        %v1497 = vmul.f32 %v970, %v1484
        %v1498 = vmul.f32 %v971, %v1484
        %v1499 = vmul.f32 %v972, %v1484
        %v1500 = vmul.f32 %v973, %v1484
        %v1501 = vmul.f32 %v974, %v1484
        %v1502 = vmul.f32 %v975, %v1484
        %v1503 = vmul.f32 %v976, %v1484
        %v1504 = vmul.f32 %v977, %v1484
        %v1505 = vmul.f32 %v978, %v1484
        %v1506 = vmul.f32 %v979, %v1484
        %v1507 = vmul.f32 %v980, %v1484
        %v1508 = vmul.f32 %v981, %v1484
        %v1509 = vmul.f32 %v982, %v1484
        %v1510 = vmul.f32 %v983, %v1484
        %v1511 = vmul.f32 %v984, %v1484
        %v1512 = vmul.f32 %v985, %v1484
        %v1513 = vmul.f32 %v986, %v1484
        %v1514 = vmul.f32 %v987, %v1484
        %v1515 = vmul.f32 %v988, %v1484
        %v1516 = vmul.f32 %v989, %v1484
        %v1517 = vsub.f32 %v1388, %v1485
        %v1518 = vsub.f32 %v1391, %v1486
        %v1519 = vsub.f32 %v1394, %v1487
        %v1520 = vsub.f32 %v1397, %v1488
        %v1521 = vsub.f32 %v1400, %v1489
        %v1522 = vsub.f32 %v1403, %v1490
        %v1523 = vsub.f32 %v1406, %v1491
        %v1524 = vsub.f32 %v1409, %v1492
        %v1525 = vsub.f32 %v1412, %v1493
        %v1526 = vsub.f32 %v1415, %v1494
        %v1527 = vsub.f32 %v1418, %v1495
        %v1528 = vsub.f32 %v1421, %v1496
        %v1529 = vsub.f32 %v1424, %v1497
        %v1530 = vsub.f32 %v1427, %v1498
        %v1531 = vsub.f32 %v1430, %v1499
        %v1532 = vsub.f32 %v1433, %v1500
        %v1533 = vsub.f32 %v1436, %v1501
        %v1534 = vsub.f32 %v1439, %v1502
        %v1535 = vsub.f32 %v1442, %v1503
        %v1536 = vsub.f32 %v1445, %v1504
        %v1537 = vsub.f32 %v1448, %v1505
        %v1538 = vsub.f32 %v1451, %v1506
        %v1539 = vsub.f32 %v1454, %v1507
        %v1540 = vsub.f32 %v1457, %v1508
        %v1541 = vsub.f32 %v1460, %v1509
        %v1542 = vsub.f32 %v1463, %v1510
        %v1543 = vsub.f32 %v1466, %v1511
        %v1544 = vsub.f32 %v1469, %v1512
        %v1545 = vsub.f32 %v1472, %v1513
        %v1546 = vsub.f32 %v1475, %v1514
        %v1547 = vsub.f32 %v1478, %v1515
        %v1548 = vsub.f32 %v1481, %v1516
        %v1549 = vmul.f32 %v1278, %v1517
        %v1550 = vmul.f32 %v1279, %v1518
        %v1551 = vmul.f32 %v1280, %v1519
        %v1552 = vmul.f32 %v1281, %v1520
        %v1553 = vmul.f32 %v1282, %v1521
        %v1554 = vmul.f32 %v1283, %v1522
        %v1555 = vmul.f32 %v1284, %v1523
        %v1556 = vmul.f32 %v1285, %v1524
        %v1557 = vmul.f32 %v1286, %v1525
        %v1558 = vmul.f32 %v1287, %v1526
        %v1559 = vmul.f32 %v1288, %v1527
        %v1560 = vmul.f32 %v1289, %v1528
        %v1561 = vmul.f32 %v1290, %v1529
        %v1562 = vmul.f32 %v1291, %v1530
        %v1563 = vmul.f32 %v1292, %v1531
        %v1564 = vmul.f32 %v1293, %v1532
        %v1565 = vmul.f32 %v1294, %v1533
        %v1566 = vmul.f32 %v1295, %v1534
        %v1567 = vmul.f32 %v1296, %v1535
        %v1568 = vmul.f32 %v1297, %v1536
        %v1569 = vmul.f32 %v1298, %v1537
        %v1570 = vmul.f32 %v1299, %v1538
        %v1571 = vmul.f32 %v1300, %v1539
        %v1572 = vmul.f32 %v1301, %v1540
        %v1573 = vmul.f32 %v1302, %v1541
        %v1574 = vmul.f32 %v1303, %v1542
        %v1575 = vmul.f32 %v1304, %v1543
        %v1576 = vmul.f32 %v1305, %v1544
        %v1577 = vmul.f32 %v1306, %v1545
        %v1578 = vmul.f32 %v1307, %v1546
        %v1579 = vmul.f32 %v1308, %v1547
        %v1580 = vmul.f32 %v1309, %v1548
        %v1581 = vstv %s1483
        %v1582 = vadd.f32 %v1549, %v1581
        %v1583 = vadd.f32 %v1550, %v1581
        %v1584 = vadd.f32 %v1551, %v1581
        %v1585 = vadd.f32 %v1552, %v1581
        %v1586 = vadd.f32 %v1553, %v1581
        %v1587 = vadd.f32 %v1554, %v1581
        %v1588 = vadd.f32 %v1555, %v1581
        %v1589 = vadd.f32 %v1556, %v1581
        %v1590 = vadd.f32 %v1557, %v1581
        %v1591 = vadd.f32 %v1558, %v1581
        %v1592 = vadd.f32 %v1559, %v1581
        %v1593 = vadd.f32 %v1560, %v1581
        %v1594 = vadd.f32 %v1561, %v1581
        %v1595 = vadd.f32 %v1562, %v1581
        %v1596 = vadd.f32 %v1563, %v1581
        %v1597 = vadd.f32 %v1564, %v1581
        %v1598 = vadd.f32 %v1565, %v1581
        %v1599 = vadd.f32 %v1566, %v1581
        %v1600 = vadd.f32 %v1567, %v1581
        %v1601 = vadd.f32 %v1568, %v1581
        %v1602 = vadd.f32 %v1569, %v1581
        %v1603 = vadd.f32 %v1570, %v1581
        %v1604 = vadd.f32 %v1571, %v1581
        %v1605 = vadd.f32 %v1572, %v1581
        %v1606 = vadd.f32 %v1573, %v1581
        %v1607 = vadd.f32 %v1574, %v1581
        %v1608 = vadd.f32 %v1575, %v1581
        %v1609 = vadd.f32 %v1576, %v1581
        %v1610 = vadd.f32 %v1577, %v1581
        %v1611 = vadd.f32 %v1578, %v1581
        %v1612 = vadd.f32 %v1579, %v1581
        %v1613 = vadd.f32 %v1580, %v1581
        %v1646 = vlaneseq
        %v1647 = vshrl.u32 %v1646, 7
        %v1648 = vsub.s32 0, %v1647
        %v1649 = vrot.slane %v1582, %v1648
        %v1650 = vlaneseq
        %v1651 = vshrl.u32 %v1650, 7
        %v1652 = vsub.s32 1, %v1651
        %v1653 = vrot.slane %v1582, %v1652
        %v1654 = vlaneseq
        %v1655 = vshrl.u32 %v1654, 7
        %v1656 = vsub.s32 2, %v1655
        %v1657 = vrot.slane %v1582, %v1656
        %v1658 = vlaneseq
        %v1659 = vshrl.u32 %v1658, 7
        %v1660 = vsub.s32 3, %v1659
        %v1661 = vrot.slane %v1582, %v1660
        %v1662 = vlaneseq
        %v1663 = vshrl.u32 %v1662, 7
        %v1664 = vsub.s32 4, %v1663
        %v1665 = vrot.slane %v1582, %v1664
        %v1666 = vlaneseq
        %v1667 = vshrl.u32 %v1666, 7
        %v1668 = vsub.s32 5, %v1667
        %v1669 = vrot.slane %v1582, %v1668
        %v1670 = vlaneseq
        %v1671 = vshrl.u32 %v1670, 7
        %v1672 = vsub.s32 6, %v1671
        %v1673 = vrot.slane %v1582, %v1672
        %v1674 = vlaneseq
        %v1675 = vshrl.u32 %v1674, 7
        %v1676 = vsub.s32 7, %v1675
        %v1677 = vrot.slane %v1582, %v1676
        %v1678 = vlaneseq
        %v1679 = vshrl.u32 %v1678, 7
        %v1680 = vsub.s32 0, %v1679
        %v1681 = vrot.slane %v1583, %v1680
        %v1682 = vlaneseq
        %v1683 = vshrl.u32 %v1682, 7
        %v1684 = vsub.s32 1, %v1683
        %v1685 = vrot.slane %v1583, %v1684
        %v1686 = vlaneseq
        %v1687 = vshrl.u32 %v1686, 7
        %v1688 = vsub.s32 2, %v1687
        %v1689 = vrot.slane %v1583, %v1688
        %v1690 = vlaneseq
        %v1691 = vshrl.u32 %v1690, 7
        %v1692 = vsub.s32 3, %v1691
        %v1693 = vrot.slane %v1583, %v1692
        %v1694 = vlaneseq
        %v1695 = vshrl.u32 %v1694, 7
        %v1696 = vsub.s32 4, %v1695
        %v1697 = vrot.slane %v1583, %v1696
        %v1698 = vlaneseq
        %v1699 = vshrl.u32 %v1698, 7
        %v1700 = vsub.s32 5, %v1699
        %v1701 = vrot.slane %v1583, %v1700
        %v1702 = vlaneseq
        %v1703 = vshrl.u32 %v1702, 7
        %v1704 = vsub.s32 6, %v1703
        %v1705 = vrot.slane %v1583, %v1704
        %v1706 = vlaneseq
        %v1707 = vshrl.u32 %v1706, 7
        %v1708 = vsub.s32 7, %v1707
        %v1709 = vrot.slane %v1583, %v1708
        %v1710 = vlaneseq
        %v1711 = vshrl.u32 %v1710, 7
        %v1712 = vsub.s32 0, %v1711
        %v1713 = vrot.slane %v1584, %v1712
        %v1714 = vlaneseq
        %v1715 = vshrl.u32 %v1714, 7
        %v1716 = vsub.s32 1, %v1715
        %v1717 = vrot.slane %v1584, %v1716
        %v1718 = vlaneseq
        %v1719 = vshrl.u32 %v1718, 7
        %v1720 = vsub.s32 2, %v1719
        %v1721 = vrot.slane %v1584, %v1720
        %v1722 = vlaneseq
        %v1723 = vshrl.u32 %v1722, 7
        %v1724 = vsub.s32 3, %v1723
        %v1725 = vrot.slane %v1584, %v1724
        %v1726 = vlaneseq
        %v1727 = vshrl.u32 %v1726, 7
        %v1728 = vsub.s32 4, %v1727
        %v1729 = vrot.slane %v1584, %v1728
        %v1730 = vlaneseq
        %v1731 = vshrl.u32 %v1730, 7
        %v1732 = vsub.s32 5, %v1731
        %v1733 = vrot.slane %v1584, %v1732
        %v1734 = vlaneseq
        %v1735 = vshrl.u32 %v1734, 7
        %v1736 = vsub.s32 6, %v1735
        %v1737 = vrot.slane %v1584, %v1736
        %v1738 = vlaneseq
        %v1739 = vshrl.u32 %v1738, 7
        %v1740 = vsub.s32 7, %v1739
        %v1741 = vrot.slane %v1584, %v1740
        %v1742 = vlaneseq
        %v1743 = vshrl.u32 %v1742, 7
        %v1744 = vsub.s32 0, %v1743
        %v1745 = vrot.slane %v1585, %v1744
        %v1746 = vlaneseq
        %v1747 = vshrl.u32 %v1746, 7
        %v1748 = vsub.s32 1, %v1747
        %v1749 = vrot.slane %v1585, %v1748
        %v1750 = vlaneseq
        %v1751 = vshrl.u32 %v1750, 7
        %v1752 = vsub.s32 2, %v1751
        %v1753 = vrot.slane %v1585, %v1752
        %v1754 = vlaneseq
        %v1755 = vshrl.u32 %v1754, 7
        %v1756 = vsub.s32 3, %v1755
        %v1757 = vrot.slane %v1585, %v1756
        %v1758 = vlaneseq
        %v1759 = vshrl.u32 %v1758, 7
        %v1760 = vsub.s32 4, %v1759
        %v1761 = vrot.slane %v1585, %v1760
        %v1762 = vlaneseq
        %v1763 = vshrl.u32 %v1762, 7
        %v1764 = vsub.s32 5, %v1763
        %v1765 = vrot.slane %v1585, %v1764
        %v1766 = vlaneseq
        %v1767 = vshrl.u32 %v1766, 7
        %v1768 = vsub.s32 6, %v1767
        %v1769 = vrot.slane %v1585, %v1768
        %v1770 = vlaneseq
        %v1771 = vshrl.u32 %v1770, 7
        %v1772 = vsub.s32 7, %v1771
        %v1773 = vrot.slane %v1585, %v1772
        %v1774 = vlaneseq
        %v1775 = vshrl.u32 %v1774, 7
        %v1776 = vsub.s32 0, %v1775
        %v1777 = vrot.slane %v1586, %v1776
        %v1778 = vlaneseq
        %v1779 = vshrl.u32 %v1778, 7
        %v1780 = vsub.s32 1, %v1779
        %v1781 = vrot.slane %v1586, %v1780
        %v1782 = vlaneseq
        %v1783 = vshrl.u32 %v1782, 7
        %v1784 = vsub.s32 2, %v1783
        %v1785 = vrot.slane %v1586, %v1784
        %v1786 = vlaneseq
        %v1787 = vshrl.u32 %v1786, 7
        %v1788 = vsub.s32 3, %v1787
        %v1789 = vrot.slane %v1586, %v1788
        %v1790 = vlaneseq
        %v1791 = vshrl.u32 %v1790, 7
        %v1792 = vsub.s32 4, %v1791
        %v1793 = vrot.slane %v1586, %v1792
        %v1794 = vlaneseq
        %v1795 = vshrl.u32 %v1794, 7
        %v1796 = vsub.s32 5, %v1795
        %v1797 = vrot.slane %v1586, %v1796
        %v1798 = vlaneseq
        %v1799 = vshrl.u32 %v1798, 7
        %v1800 = vsub.s32 6, %v1799
        %v1801 = vrot.slane %v1586, %v1800
        %v1802 = vlaneseq
        %v1803 = vshrl.u32 %v1802, 7
        %v1804 = vsub.s32 7, %v1803
        %v1805 = vrot.slane %v1586, %v1804
        %v1806 = vlaneseq
        %v1807 = vshrl.u32 %v1806, 7
        %v1808 = vsub.s32 0, %v1807
        %v1809 = vrot.slane %v1587, %v1808
        %v1810 = vlaneseq
        %v1811 = vshrl.u32 %v1810, 7
        %v1812 = vsub.s32 1, %v1811
        %v1813 = vrot.slane %v1587, %v1812
        %v1814 = vlaneseq
        %v1815 = vshrl.u32 %v1814, 7
        %v1816 = vsub.s32 2, %v1815
        %v1817 = vrot.slane %v1587, %v1816
        %v1818 = vlaneseq
        %v1819 = vshrl.u32 %v1818, 7
        %v1820 = vsub.s32 3, %v1819
        %v1821 = vrot.slane %v1587, %v1820
        %v1822 = vlaneseq
        %v1823 = vshrl.u32 %v1822, 7
        %v1824 = vsub.s32 4, %v1823
        %v1825 = vrot.slane %v1587, %v1824
        %v1826 = vlaneseq
        %v1827 = vshrl.u32 %v1826, 7
        %v1828 = vsub.s32 5, %v1827
        %v1829 = vrot.slane %v1587, %v1828
        %v1830 = vlaneseq
        %v1831 = vshrl.u32 %v1830, 7
        %v1832 = vsub.s32 6, %v1831
        %v1833 = vrot.slane %v1587, %v1832
        %v1834 = vlaneseq
        %v1835 = vshrl.u32 %v1834, 7
        %v1836 = vsub.s32 7, %v1835
        %v1837 = vrot.slane %v1587, %v1836
        %v1838 = vlaneseq
        %v1839 = vshrl.u32 %v1838, 7
        %v1840 = vsub.s32 0, %v1839
        %v1841 = vrot.slane %v1588, %v1840
        %v1842 = vlaneseq
        %v1843 = vshrl.u32 %v1842, 7
        %v1844 = vsub.s32 1, %v1843
        %v1845 = vrot.slane %v1588, %v1844
        %v1846 = vlaneseq
        %v1847 = vshrl.u32 %v1846, 7
        %v1848 = vsub.s32 2, %v1847
        %v1849 = vrot.slane %v1588, %v1848
        %v1850 = vlaneseq
        %v1851 = vshrl.u32 %v1850, 7
        %v1852 = vsub.s32 3, %v1851
        %v1853 = vrot.slane %v1588, %v1852
        %v1854 = vlaneseq
        %v1855 = vshrl.u32 %v1854, 7
        %v1856 = vsub.s32 4, %v1855
        %v1857 = vrot.slane %v1588, %v1856
        %v1858 = vlaneseq
        %v1859 = vshrl.u32 %v1858, 7
        %v1860 = vsub.s32 5, %v1859
        %v1861 = vrot.slane %v1588, %v1860
        %v1862 = vlaneseq
        %v1863 = vshrl.u32 %v1862, 7
        %v1864 = vsub.s32 6, %v1863
        %v1865 = vrot.slane %v1588, %v1864
        %v1866 = vlaneseq
        %v1867 = vshrl.u32 %v1866, 7
        %v1868 = vsub.s32 7, %v1867
        %v1869 = vrot.slane %v1588, %v1868
        %v1870 = vlaneseq
        %v1871 = vshrl.u32 %v1870, 7
        %v1872 = vsub.s32 0, %v1871
        %v1873 = vrot.slane %v1589, %v1872
        %v1874 = vlaneseq
        %v1875 = vshrl.u32 %v1874, 7
        %v1876 = vsub.s32 1, %v1875
        %v1877 = vrot.slane %v1589, %v1876
        %v1878 = vlaneseq
        %v1879 = vshrl.u32 %v1878, 7
        %v1880 = vsub.s32 2, %v1879
        %v1881 = vrot.slane %v1589, %v1880
        %v1882 = vlaneseq
        %v1883 = vshrl.u32 %v1882, 7
        %v1884 = vsub.s32 3, %v1883
        %v1885 = vrot.slane %v1589, %v1884
        %v1886 = vlaneseq
        %v1887 = vshrl.u32 %v1886, 7
        %v1888 = vsub.s32 4, %v1887
        %v1889 = vrot.slane %v1589, %v1888
        %v1890 = vlaneseq
        %v1891 = vshrl.u32 %v1890, 7
        %v1892 = vsub.s32 5, %v1891
        %v1893 = vrot.slane %v1589, %v1892
        %v1894 = vlaneseq
        %v1895 = vshrl.u32 %v1894, 7
        %v1896 = vsub.s32 6, %v1895
        %v1897 = vrot.slane %v1589, %v1896
        %v1898 = vlaneseq
        %v1899 = vshrl.u32 %v1898, 7
        %v1900 = vsub.s32 7, %v1899
        %v1901 = vrot.slane %v1589, %v1900
        %v1902 = vlaneseq
        %v1903 = vshrl.u32 %v1902, 7
        %v1904 = vsub.s32 0, %v1903
        %v1905 = vrot.slane %v1590, %v1904
        %v1906 = vlaneseq
        %v1907 = vshrl.u32 %v1906, 7
        %v1908 = vsub.s32 1, %v1907
        %v1909 = vrot.slane %v1590, %v1908
        %v1910 = vlaneseq
        %v1911 = vshrl.u32 %v1910, 7
        %v1912 = vsub.s32 2, %v1911
        %v1913 = vrot.slane %v1590, %v1912
        %v1914 = vlaneseq
        %v1915 = vshrl.u32 %v1914, 7
        %v1916 = vsub.s32 3, %v1915
        %v1917 = vrot.slane %v1590, %v1916
        %v1918 = vlaneseq
        %v1919 = vshrl.u32 %v1918, 7
        %v1920 = vsub.s32 4, %v1919
        %v1921 = vrot.slane %v1590, %v1920
        %v1922 = vlaneseq
        %v1923 = vshrl.u32 %v1922, 7
        %v1924 = vsub.s32 5, %v1923
        %v1925 = vrot.slane %v1590, %v1924
        %v1926 = vlaneseq
        %v1927 = vshrl.u32 %v1926, 7
        %v1928 = vsub.s32 6, %v1927
        %v1929 = vrot.slane %v1590, %v1928
        %v1930 = vlaneseq
        %v1931 = vshrl.u32 %v1930, 7
        %v1932 = vsub.s32 7, %v1931
        %v1933 = vrot.slane %v1590, %v1932
        %v1934 = vlaneseq
        %v1935 = vshrl.u32 %v1934, 7
        %v1936 = vsub.s32 0, %v1935
        %v1937 = vrot.slane %v1591, %v1936
        %v1938 = vlaneseq
        %v1939 = vshrl.u32 %v1938, 7
        %v1940 = vsub.s32 1, %v1939
        %v1941 = vrot.slane %v1591, %v1940
        %v1942 = vlaneseq
        %v1943 = vshrl.u32 %v1942, 7
        %v1944 = vsub.s32 2, %v1943
        %v1945 = vrot.slane %v1591, %v1944
        %v1946 = vlaneseq
        %v1947 = vshrl.u32 %v1946, 7
        %v1948 = vsub.s32 3, %v1947
        %v1949 = vrot.slane %v1591, %v1948
        %v1950 = vlaneseq
        %v1951 = vshrl.u32 %v1950, 7
        %v1952 = vsub.s32 4, %v1951
        %v1953 = vrot.slane %v1591, %v1952
        %v1954 = vlaneseq
        %v1955 = vshrl.u32 %v1954, 7
        %v1956 = vsub.s32 5, %v1955
        %v1957 = vrot.slane %v1591, %v1956
        %v1958 = vlaneseq
        %v1959 = vshrl.u32 %v1958, 7
        %v1960 = vsub.s32 6, %v1959
        %v1961 = vrot.slane %v1591, %v1960
        %v1962 = vlaneseq
        %v1963 = vshrl.u32 %v1962, 7
        %v1964 = vsub.s32 7, %v1963
        %v1965 = vrot.slane %v1591, %v1964
        %v1966 = vlaneseq
        %v1967 = vshrl.u32 %v1966, 7
        %v1968 = vsub.s32 0, %v1967
        %v1969 = vrot.slane %v1592, %v1968
        %v1970 = vlaneseq
        %v1971 = vshrl.u32 %v1970, 7
        %v1972 = vsub.s32 1, %v1971
        %v1973 = vrot.slane %v1592, %v1972
        %v1974 = vlaneseq
        %v1975 = vshrl.u32 %v1974, 7
        %v1976 = vsub.s32 2, %v1975
        %v1977 = vrot.slane %v1592, %v1976
        %v1978 = vlaneseq
        %v1979 = vshrl.u32 %v1978, 7
        %v1980 = vsub.s32 3, %v1979
        %v1981 = vrot.slane %v1592, %v1980
        %v1982 = vlaneseq
        %v1983 = vshrl.u32 %v1982, 7
        %v1984 = vsub.s32 4, %v1983
        %v1985 = vrot.slane %v1592, %v1984
        %v1986 = vlaneseq
        %v1987 = vshrl.u32 %v1986, 7
        %v1988 = vsub.s32 5, %v1987
        %v1989 = vrot.slane %v1592, %v1988
        %v1990 = vlaneseq
        %v1991 = vshrl.u32 %v1990, 7
        %v1992 = vsub.s32 6, %v1991
        %v1993 = vrot.slane %v1592, %v1992
        %v1994 = vlaneseq
        %v1995 = vshrl.u32 %v1994, 7
        %v1996 = vsub.s32 7, %v1995
        %v1997 = vrot.slane %v1592, %v1996
        %v1998 = vlaneseq
        %v1999 = vshrl.u32 %v1998, 7
        %v2000 = vsub.s32 0, %v1999
        %v2001 = vrot.slane %v1593, %v2000
        %v2002 = vlaneseq
        %v2003 = vshrl.u32 %v2002, 7
        %v2004 = vsub.s32 1, %v2003
        %v2005 = vrot.slane %v1593, %v2004
        %v2006 = vlaneseq
        %v2007 = vshrl.u32 %v2006, 7
        %v2008 = vsub.s32 2, %v2007
        %v2009 = vrot.slane %v1593, %v2008
        %v2010 = vlaneseq
        %v2011 = vshrl.u32 %v2010, 7
        %v2012 = vsub.s32 3, %v2011
        %v2013 = vrot.slane %v1593, %v2012
        %v2014 = vlaneseq
        %v2015 = vshrl.u32 %v2014, 7
        %v2016 = vsub.s32 4, %v2015
        %v2017 = vrot.slane %v1593, %v2016
        %v2018 = vlaneseq
        %v2019 = vshrl.u32 %v2018, 7
        %v2020 = vsub.s32 5, %v2019
        %v2021 = vrot.slane %v1593, %v2020
        %v2022 = vlaneseq
        %v2023 = vshrl.u32 %v2022, 7
        %v2024 = vsub.s32 6, %v2023
        %v2025 = vrot.slane %v1593, %v2024
        %v2026 = vlaneseq
        %v2027 = vshrl.u32 %v2026, 7
        %v2028 = vsub.s32 7, %v2027
        %v2029 = vrot.slane %v1593, %v2028
        %v2030 = vlaneseq
        %v2031 = vshrl.u32 %v2030, 7
        %v2032 = vsub.s32 0, %v2031
        %v2033 = vrot.slane %v1594, %v2032
        %v2034 = vlaneseq
        %v2035 = vshrl.u32 %v2034, 7
        %v2036 = vsub.s32 1, %v2035
        %v2037 = vrot.slane %v1594, %v2036
        %v2038 = vlaneseq
        %v2039 = vshrl.u32 %v2038, 7
        %v2040 = vsub.s32 2, %v2039
        %v2041 = vrot.slane %v1594, %v2040
        %v2042 = vlaneseq
        %v2043 = vshrl.u32 %v2042, 7
        %v2044 = vsub.s32 3, %v2043
        %v2045 = vrot.slane %v1594, %v2044
        %v2046 = vlaneseq
        %v2047 = vshrl.u32 %v2046, 7
        %v2048 = vsub.s32 4, %v2047
        %v2049 = vrot.slane %v1594, %v2048
        %v2050 = vlaneseq
        %v2051 = vshrl.u32 %v2050, 7
        %v2052 = vsub.s32 5, %v2051
        %v2053 = vrot.slane %v1594, %v2052
        %v2054 = vlaneseq
        %v2055 = vshrl.u32 %v2054, 7
        %v2056 = vsub.s32 6, %v2055
        %v2057 = vrot.slane %v1594, %v2056
        %v2058 = vlaneseq
        %v2059 = vshrl.u32 %v2058, 7
        %v2060 = vsub.s32 7, %v2059
        %v2061 = vrot.slane %v1594, %v2060
        %v2062 = vlaneseq
        %v2063 = vshrl.u32 %v2062, 7
        %v2064 = vsub.s32 0, %v2063
        %v2065 = vrot.slane %v1595, %v2064
        %v2066 = vlaneseq
        %v2067 = vshrl.u32 %v2066, 7
        %v2068 = vsub.s32 1, %v2067
        %v2069 = vrot.slane %v1595, %v2068
        %v2070 = vlaneseq
        %v2071 = vshrl.u32 %v2070, 7
        %v2072 = vsub.s32 2, %v2071
        %v2073 = vrot.slane %v1595, %v2072
        %v2074 = vlaneseq
        %v2075 = vshrl.u32 %v2074, 7
        %v2076 = vsub.s32 3, %v2075
        %v2077 = vrot.slane %v1595, %v2076
        %v2078 = vlaneseq
        %v2079 = vshrl.u32 %v2078, 7
        %v2080 = vsub.s32 4, %v2079
        %v2081 = vrot.slane %v1595, %v2080
        %v2082 = vlaneseq
        %v2083 = vshrl.u32 %v2082, 7
        %v2084 = vsub.s32 5, %v2083
        %v2085 = vrot.slane %v1595, %v2084
        %v2086 = vlaneseq
        %v2087 = vshrl.u32 %v2086, 7
        %v2088 = vsub.s32 6, %v2087
        %v2089 = vrot.slane %v1595, %v2088
        %v2090 = vlaneseq
        %v2091 = vshrl.u32 %v2090, 7
        %v2092 = vsub.s32 7, %v2091
        %v2093 = vrot.slane %v1595, %v2092
        %v2094 = vlaneseq
        %v2095 = vshrl.u32 %v2094, 7
        %v2096 = vsub.s32 0, %v2095
        %v2097 = vrot.slane %v1596, %v2096
        %v2098 = vlaneseq
        %v2099 = vshrl.u32 %v2098, 7
        %v2100 = vsub.s32 1, %v2099
        %v2101 = vrot.slane %v1596, %v2100
        %v2102 = vlaneseq
        %v2103 = vshrl.u32 %v2102, 7
        %v2104 = vsub.s32 2, %v2103
        %v2105 = vrot.slane %v1596, %v2104
        %v2106 = vlaneseq
        %v2107 = vshrl.u32 %v2106, 7
        %v2108 = vsub.s32 3, %v2107
        %v2109 = vrot.slane %v1596, %v2108
        %v2110 = vlaneseq
        %v2111 = vshrl.u32 %v2110, 7
        %v2112 = vsub.s32 4, %v2111
        %v2113 = vrot.slane %v1596, %v2112
        %v2114 = vlaneseq
        %v2115 = vshrl.u32 %v2114, 7
        %v2116 = vsub.s32 5, %v2115
        %v2117 = vrot.slane %v1596, %v2116
        %v2118 = vlaneseq
        %v2119 = vshrl.u32 %v2118, 7
        %v2120 = vsub.s32 6, %v2119
        %v2121 = vrot.slane %v1596, %v2120
        %v2122 = vlaneseq
        %v2123 = vshrl.u32 %v2122, 7
        %v2124 = vsub.s32 7, %v2123
        %v2125 = vrot.slane %v1596, %v2124
        %v2126 = vlaneseq
        %v2127 = vshrl.u32 %v2126, 7
        %v2128 = vsub.s32 0, %v2127
        %v2129 = vrot.slane %v1597, %v2128
        %v2130 = vlaneseq
        %v2131 = vshrl.u32 %v2130, 7
        %v2132 = vsub.s32 1, %v2131
        %v2133 = vrot.slane %v1597, %v2132
        %v2134 = vlaneseq
        %v2135 = vshrl.u32 %v2134, 7
        %v2136 = vsub.s32 2, %v2135
        %v2137 = vrot.slane %v1597, %v2136
        %v2138 = vlaneseq
        %v2139 = vshrl.u32 %v2138, 7
        %v2140 = vsub.s32 3, %v2139
        %v2141 = vrot.slane %v1597, %v2140
        %v2142 = vlaneseq
        %v2143 = vshrl.u32 %v2142, 7
        %v2144 = vsub.s32 4, %v2143
        %v2145 = vrot.slane %v1597, %v2144
        %v2146 = vlaneseq
        %v2147 = vshrl.u32 %v2146, 7
        %v2148 = vsub.s32 5, %v2147
        %v2149 = vrot.slane %v1597, %v2148
        %v2150 = vlaneseq
        %v2151 = vshrl.u32 %v2150, 7
        %v2152 = vsub.s32 6, %v2151
        %v2153 = vrot.slane %v1597, %v2152
        %v2154 = vlaneseq
        %v2155 = vshrl.u32 %v2154, 7
        %v2156 = vsub.s32 7, %v2155
        %v2157 = vrot.slane %v1597, %v2156
        %v2158 = vlaneseq
        %v2159 = vshrl.u32 %v2158, 7
        %v2160 = vsub.s32 0, %v2159
        %v2161 = vrot.slane %v1598, %v2160
        %v2162 = vlaneseq
        %v2163 = vshrl.u32 %v2162, 7
        %v2164 = vsub.s32 1, %v2163
        %v2165 = vrot.slane %v1598, %v2164
        %v2166 = vlaneseq
        %v2167 = vshrl.u32 %v2166, 7
        %v2168 = vsub.s32 2, %v2167
        %v2169 = vrot.slane %v1598, %v2168
        %v2170 = vlaneseq
        %v2171 = vshrl.u32 %v2170, 7
        %v2172 = vsub.s32 3, %v2171
        %v2173 = vrot.slane %v1598, %v2172
        %v2174 = vlaneseq
        %v2175 = vshrl.u32 %v2174, 7
        %v2176 = vsub.s32 4, %v2175
        %v2177 = vrot.slane %v1598, %v2176
        %v2178 = vlaneseq
        %v2179 = vshrl.u32 %v2178, 7
        %v2180 = vsub.s32 5, %v2179
        %v2181 = vrot.slane %v1598, %v2180
        %v2182 = vlaneseq
        %v2183 = vshrl.u32 %v2182, 7
        %v2184 = vsub.s32 6, %v2183
        %v2185 = vrot.slane %v1598, %v2184
        %v2186 = vlaneseq
        %v2187 = vshrl.u32 %v2186, 7
        %v2188 = vsub.s32 7, %v2187
        %v2189 = vrot.slane %v1598, %v2188
        %v2190 = vlaneseq
        %v2191 = vshrl.u32 %v2190, 7
        %v2192 = vsub.s32 0, %v2191
        %v2193 = vrot.slane %v1599, %v2192
        %v2194 = vlaneseq
        %v2195 = vshrl.u32 %v2194, 7
        %v2196 = vsub.s32 1, %v2195
        %v2197 = vrot.slane %v1599, %v2196
        %v2198 = vlaneseq
        %v2199 = vshrl.u32 %v2198, 7
        %v2200 = vsub.s32 2, %v2199
        %v2201 = vrot.slane %v1599, %v2200
        %v2202 = vlaneseq
        %v2203 = vshrl.u32 %v2202, 7
        %v2204 = vsub.s32 3, %v2203
        %v2205 = vrot.slane %v1599, %v2204
        %v2206 = vlaneseq
        %v2207 = vshrl.u32 %v2206, 7
        %v2208 = vsub.s32 4, %v2207
        %v2209 = vrot.slane %v1599, %v2208
        %v2210 = vlaneseq
        %v2211 = vshrl.u32 %v2210, 7
        %v2212 = vsub.s32 5, %v2211
        %v2213 = vrot.slane %v1599, %v2212
        %v2214 = vlaneseq
        %v2215 = vshrl.u32 %v2214, 7
        %v2216 = vsub.s32 6, %v2215
        %v2217 = vrot.slane %v1599, %v2216
        %v2218 = vlaneseq
        %v2219 = vshrl.u32 %v2218, 7
        %v2220 = vsub.s32 7, %v2219
        %v2221 = vrot.slane %v1599, %v2220
        %v2222 = vlaneseq
        %v2223 = vshrl.u32 %v2222, 7
        %v2224 = vsub.s32 0, %v2223
        %v2225 = vrot.slane %v1600, %v2224
        %v2226 = vlaneseq
        %v2227 = vshrl.u32 %v2226, 7
        %v2228 = vsub.s32 1, %v2227
        %v2229 = vrot.slane %v1600, %v2228
        %v2230 = vlaneseq
        %v2231 = vshrl.u32 %v2230, 7
        %v2232 = vsub.s32 2, %v2231
        %v2233 = vrot.slane %v1600, %v2232
        %v2234 = vlaneseq
        %v2235 = vshrl.u32 %v2234, 7
        %v2236 = vsub.s32 3, %v2235
        %v2237 = vrot.slane %v1600, %v2236
        %v2238 = vlaneseq
        %v2239 = vshrl.u32 %v2238, 7
        %v2240 = vsub.s32 4, %v2239
        %v2241 = vrot.slane %v1600, %v2240
        %v2242 = vlaneseq
        %v2243 = vshrl.u32 %v2242, 7
        %v2244 = vsub.s32 5, %v2243
        %v2245 = vrot.slane %v1600, %v2244
        %v2246 = vlaneseq
        %v2247 = vshrl.u32 %v2246, 7
        %v2248 = vsub.s32 6, %v2247
        %v2249 = vrot.slane %v1600, %v2248
        %v2250 = vlaneseq
        %v2251 = vshrl.u32 %v2250, 7
        %v2252 = vsub.s32 7, %v2251
        %v2253 = vrot.slane %v1600, %v2252
        %v2254 = vlaneseq
        %v2255 = vshrl.u32 %v2254, 7
        %v2256 = vsub.s32 0, %v2255
        %v2257 = vrot.slane %v1601, %v2256
        %v2258 = vlaneseq
        %v2259 = vshrl.u32 %v2258, 7
        %v2260 = vsub.s32 1, %v2259
        %v2261 = vrot.slane %v1601, %v2260
        %v2262 = vlaneseq
        %v2263 = vshrl.u32 %v2262, 7
        %v2264 = vsub.s32 2, %v2263
        %v2265 = vrot.slane %v1601, %v2264
        %v2266 = vlaneseq
        %v2267 = vshrl.u32 %v2266, 7
        %v2268 = vsub.s32 3, %v2267
        %v2269 = vrot.slane %v1601, %v2268
        %v2270 = vlaneseq
        %v2271 = vshrl.u32 %v2270, 7
        %v2272 = vsub.s32 4, %v2271
        %v2273 = vrot.slane %v1601, %v2272
        %v2274 = vlaneseq
        %v2275 = vshrl.u32 %v2274, 7
        %v2276 = vsub.s32 5, %v2275
        %v2277 = vrot.slane %v1601, %v2276
        %v2278 = vlaneseq
        %v2279 = vshrl.u32 %v2278, 7
        %v2280 = vsub.s32 6, %v2279
        %v2281 = vrot.slane %v1601, %v2280
        %v2282 = vlaneseq
        %v2283 = vshrl.u32 %v2282, 7
        %v2284 = vsub.s32 7, %v2283
        %v2285 = vrot.slane %v1601, %v2284
        %v2286 = vlaneseq
        %v2287 = vshrl.u32 %v2286, 7
        %v2288 = vsub.s32 0, %v2287
        %v2289 = vrot.slane %v1602, %v2288
        %v2290 = vlaneseq
        %v2291 = vshrl.u32 %v2290, 7
        %v2292 = vsub.s32 1, %v2291
        %v2293 = vrot.slane %v1602, %v2292
        %v2294 = vlaneseq
        %v2295 = vshrl.u32 %v2294, 7
        %v2296 = vsub.s32 2, %v2295
        %v2297 = vrot.slane %v1602, %v2296
        %v2298 = vlaneseq
        %v2299 = vshrl.u32 %v2298, 7
        %v2300 = vsub.s32 3, %v2299
        %v2301 = vrot.slane %v1602, %v2300
        %v2302 = vlaneseq
        %v2303 = vshrl.u32 %v2302, 7
        %v2304 = vsub.s32 4, %v2303
        %v2305 = vrot.slane %v1602, %v2304
        %v2306 = vlaneseq
        %v2307 = vshrl.u32 %v2306, 7
        %v2308 = vsub.s32 5, %v2307
        %v2309 = vrot.slane %v1602, %v2308
        %v2310 = vlaneseq
        %v2311 = vshrl.u32 %v2310, 7
        %v2312 = vsub.s32 6, %v2311
        %v2313 = vrot.slane %v1602, %v2312
        %v2314 = vlaneseq
        %v2315 = vshrl.u32 %v2314, 7
        %v2316 = vsub.s32 7, %v2315
        %v2317 = vrot.slane %v1602, %v2316
        %v2318 = vlaneseq
        %v2319 = vshrl.u32 %v2318, 7
        %v2320 = vsub.s32 0, %v2319
        %v2321 = vrot.slane %v1603, %v2320
        %v2322 = vlaneseq
        %v2323 = vshrl.u32 %v2322, 7
        %v2324 = vsub.s32 1, %v2323
        %v2325 = vrot.slane %v1603, %v2324
        %v2326 = vlaneseq
        %v2327 = vshrl.u32 %v2326, 7
        %v2328 = vsub.s32 2, %v2327
        %v2329 = vrot.slane %v1603, %v2328
        %v2330 = vlaneseq
        %v2331 = vshrl.u32 %v2330, 7
        %v2332 = vsub.s32 3, %v2331
        %v2333 = vrot.slane %v1603, %v2332
        %v2334 = vlaneseq
        %v2335 = vshrl.u32 %v2334, 7
        %v2336 = vsub.s32 4, %v2335
        %v2337 = vrot.slane %v1603, %v2336
        %v2338 = vlaneseq
        %v2339 = vshrl.u32 %v2338, 7
        %v2340 = vsub.s32 5, %v2339
        %v2341 = vrot.slane %v1603, %v2340
        %v2342 = vlaneseq
        %v2343 = vshrl.u32 %v2342, 7
        %v2344 = vsub.s32 6, %v2343
        %v2345 = vrot.slane %v1603, %v2344
        %v2346 = vlaneseq
        %v2347 = vshrl.u32 %v2346, 7
        %v2348 = vsub.s32 7, %v2347
        %v2349 = vrot.slane %v1603, %v2348
        %v2350 = vlaneseq
        %v2351 = vshrl.u32 %v2350, 7
        %v2352 = vsub.s32 0, %v2351
        %v2353 = vrot.slane %v1604, %v2352
        %v2354 = vlaneseq
        %v2355 = vshrl.u32 %v2354, 7
        %v2356 = vsub.s32 1, %v2355
        %v2357 = vrot.slane %v1604, %v2356
        %v2358 = vlaneseq
        %v2359 = vshrl.u32 %v2358, 7
        %v2360 = vsub.s32 2, %v2359
        %v2361 = vrot.slane %v1604, %v2360
        %v2362 = vlaneseq
        %v2363 = vshrl.u32 %v2362, 7
        %v2364 = vsub.s32 3, %v2363
        %v2365 = vrot.slane %v1604, %v2364
        %v2366 = vlaneseq
        %v2367 = vshrl.u32 %v2366, 7
        %v2368 = vsub.s32 4, %v2367
        %v2369 = vrot.slane %v1604, %v2368
        %v2370 = vlaneseq
        %v2371 = vshrl.u32 %v2370, 7
        %v2372 = vsub.s32 5, %v2371
        %v2373 = vrot.slane %v1604, %v2372
        %v2374 = vlaneseq
        %v2375 = vshrl.u32 %v2374, 7
        %v2376 = vsub.s32 6, %v2375
        %v2377 = vrot.slane %v1604, %v2376
        %v2378 = vlaneseq
        %v2379 = vshrl.u32 %v2378, 7
        %v2380 = vsub.s32 7, %v2379
        %v2381 = vrot.slane %v1604, %v2380
        %v2382 = vlaneseq
        %v2383 = vshrl.u32 %v2382, 7
        %v2384 = vsub.s32 0, %v2383
        %v2385 = vrot.slane %v1605, %v2384
        %v2386 = vlaneseq
        %v2387 = vshrl.u32 %v2386, 7
        %v2388 = vsub.s32 1, %v2387
        %v2389 = vrot.slane %v1605, %v2388
        %v2390 = vlaneseq
        %v2391 = vshrl.u32 %v2390, 7
        %v2392 = vsub.s32 2, %v2391
        %v2393 = vrot.slane %v1605, %v2392
        %v2394 = vlaneseq
        %v2395 = vshrl.u32 %v2394, 7
        %v2396 = vsub.s32 3, %v2395
        %v2397 = vrot.slane %v1605, %v2396
        %v2398 = vlaneseq
        %v2399 = vshrl.u32 %v2398, 7
        %v2400 = vsub.s32 4, %v2399
        %v2401 = vrot.slane %v1605, %v2400
        %v2402 = vlaneseq
        %v2403 = vshrl.u32 %v2402, 7
        %v2404 = vsub.s32 5, %v2403
        %v2405 = vrot.slane %v1605, %v2404
        %v2406 = vlaneseq
        %v2407 = vshrl.u32 %v2406, 7
        %v2408 = vsub.s32 6, %v2407
        %v2409 = vrot.slane %v1605, %v2408
        %v2410 = vlaneseq
        %v2411 = vshrl.u32 %v2410, 7
        %v2412 = vsub.s32 7, %v2411
        %v2413 = vrot.slane %v1605, %v2412
        %v2414 = vlaneseq
        %v2415 = vshrl.u32 %v2414, 7
        %v2416 = vsub.s32 0, %v2415
        %v2417 = vrot.slane %v1606, %v2416
        %v2418 = vlaneseq
        %v2419 = vshrl.u32 %v2418, 7
        %v2420 = vsub.s32 1, %v2419
        %v2421 = vrot.slane %v1606, %v2420
        %v2422 = vlaneseq
        %v2423 = vshrl.u32 %v2422, 7
        %v2424 = vsub.s32 2, %v2423
        %v2425 = vrot.slane %v1606, %v2424
        %v2426 = vlaneseq
        %v2427 = vshrl.u32 %v2426, 7
        %v2428 = vsub.s32 3, %v2427
        %v2429 = vrot.slane %v1606, %v2428
        %v2430 = vlaneseq
        %v2431 = vshrl.u32 %v2430, 7
        %v2432 = vsub.s32 4, %v2431
        %v2433 = vrot.slane %v1606, %v2432
        %v2434 = vlaneseq
        %v2435 = vshrl.u32 %v2434, 7
        %v2436 = vsub.s32 5, %v2435
        %v2437 = vrot.slane %v1606, %v2436
        %v2438 = vlaneseq
        %v2439 = vshrl.u32 %v2438, 7
        %v2440 = vsub.s32 6, %v2439
        %v2441 = vrot.slane %v1606, %v2440
        %v2442 = vlaneseq
        %v2443 = vshrl.u32 %v2442, 7
        %v2444 = vsub.s32 7, %v2443
        %v2445 = vrot.slane %v1606, %v2444
        %v2446 = vlaneseq
        %v2447 = vshrl.u32 %v2446, 7
        %v2448 = vsub.s32 0, %v2447
        %v2449 = vrot.slane %v1607, %v2448
        %v2450 = vlaneseq
        %v2451 = vshrl.u32 %v2450, 7
        %v2452 = vsub.s32 1, %v2451
        %v2453 = vrot.slane %v1607, %v2452
        %v2454 = vlaneseq
        %v2455 = vshrl.u32 %v2454, 7
        %v2456 = vsub.s32 2, %v2455
        %v2457 = vrot.slane %v1607, %v2456
        %v2458 = vlaneseq
        %v2459 = vshrl.u32 %v2458, 7
        %v2460 = vsub.s32 3, %v2459
        %v2461 = vrot.slane %v1607, %v2460
        %v2462 = vlaneseq
        %v2463 = vshrl.u32 %v2462, 7
        %v2464 = vsub.s32 4, %v2463
        %v2465 = vrot.slane %v1607, %v2464
        %v2466 = vlaneseq
        %v2467 = vshrl.u32 %v2466, 7
        %v2468 = vsub.s32 5, %v2467
        %v2469 = vrot.slane %v1607, %v2468
        %v2470 = vlaneseq
        %v2471 = vshrl.u32 %v2470, 7
        %v2472 = vsub.s32 6, %v2471
        %v2473 = vrot.slane %v1607, %v2472
        %v2474 = vlaneseq
        %v2475 = vshrl.u32 %v2474, 7
        %v2476 = vsub.s32 7, %v2475
        %v2477 = vrot.slane %v1607, %v2476
        %v2478 = vlaneseq
        %v2479 = vshrl.u32 %v2478, 7
        %v2480 = vsub.s32 0, %v2479
        %v2481 = vrot.slane %v1608, %v2480
        %v2482 = vlaneseq
        %v2483 = vshrl.u32 %v2482, 7
        %v2484 = vsub.s32 1, %v2483
        %v2485 = vrot.slane %v1608, %v2484
        %v2486 = vlaneseq
        %v2487 = vshrl.u32 %v2486, 7
        %v2488 = vsub.s32 2, %v2487
        %v2489 = vrot.slane %v1608, %v2488
        %v2490 = vlaneseq
        %v2491 = vshrl.u32 %v2490, 7
        %v2492 = vsub.s32 3, %v2491
        %v2493 = vrot.slane %v1608, %v2492
        %v2494 = vlaneseq
        %v2495 = vshrl.u32 %v2494, 7
        %v2496 = vsub.s32 4, %v2495
        %v2497 = vrot.slane %v1608, %v2496
        %v2498 = vlaneseq
        %v2499 = vshrl.u32 %v2498, 7
        %v2500 = vsub.s32 5, %v2499
        %v2501 = vrot.slane %v1608, %v2500
        %v2502 = vlaneseq
        %v2503 = vshrl.u32 %v2502, 7
        %v2504 = vsub.s32 6, %v2503
        %v2505 = vrot.slane %v1608, %v2504
        %v2506 = vlaneseq
        %v2507 = vshrl.u32 %v2506, 7
        %v2508 = vsub.s32 7, %v2507
        %v2509 = vrot.slane %v1608, %v2508
        %v2510 = vlaneseq
        %v2511 = vshrl.u32 %v2510, 7
        %v2512 = vsub.s32 0, %v2511
        %v2513 = vrot.slane %v1609, %v2512
        %v2514 = vlaneseq
        %v2515 = vshrl.u32 %v2514, 7
        %v2516 = vsub.s32 1, %v2515
        %v2517 = vrot.slane %v1609, %v2516
        %v2518 = vlaneseq
        %v2519 = vshrl.u32 %v2518, 7
        %v2520 = vsub.s32 2, %v2519
        %v2521 = vrot.slane %v1609, %v2520
        %v2522 = vlaneseq
        %v2523 = vshrl.u32 %v2522, 7
        %v2524 = vsub.s32 3, %v2523
        %v2525 = vrot.slane %v1609, %v2524
        %v2526 = vlaneseq
        %v2527 = vshrl.u32 %v2526, 7
        %v2528 = vsub.s32 4, %v2527
        %v2529 = vrot.slane %v1609, %v2528
        %v2530 = vlaneseq
        %v2531 = vshrl.u32 %v2530, 7
        %v2532 = vsub.s32 5, %v2531
        %v2533 = vrot.slane %v1609, %v2532
        %v2534 = vlaneseq
        %v2535 = vshrl.u32 %v2534, 7
        %v2536 = vsub.s32 6, %v2535
        %v2537 = vrot.slane %v1609, %v2536
        %v2538 = vlaneseq
        %v2539 = vshrl.u32 %v2538, 7
        %v2540 = vsub.s32 7, %v2539
        %v2541 = vrot.slane %v1609, %v2540
        %v2542 = vlaneseq
        %v2543 = vshrl.u32 %v2542, 7
        %v2544 = vsub.s32 0, %v2543
        %v2545 = vrot.slane %v1610, %v2544
        %v2546 = vlaneseq
        %v2547 = vshrl.u32 %v2546, 7
        %v2548 = vsub.s32 1, %v2547
        %v2549 = vrot.slane %v1610, %v2548
        %v2550 = vlaneseq
        %v2551 = vshrl.u32 %v2550, 7
        %v2552 = vsub.s32 2, %v2551
        %v2553 = vrot.slane %v1610, %v2552
        %v2554 = vlaneseq
        %v2555 = vshrl.u32 %v2554, 7
        %v2556 = vsub.s32 3, %v2555
        %v2557 = vrot.slane %v1610, %v2556
        %v2558 = vlaneseq
        %v2559 = vshrl.u32 %v2558, 7
        %v2560 = vsub.s32 4, %v2559
        %v2561 = vrot.slane %v1610, %v2560
        %v2562 = vlaneseq
        %v2563 = vshrl.u32 %v2562, 7
        %v2564 = vsub.s32 5, %v2563
        %v2565 = vrot.slane %v1610, %v2564
        %v2566 = vlaneseq
        %v2567 = vshrl.u32 %v2566, 7
        %v2568 = vsub.s32 6, %v2567
        %v2569 = vrot.slane %v1610, %v2568
        %v2570 = vlaneseq
        %v2571 = vshrl.u32 %v2570, 7
        %v2572 = vsub.s32 7, %v2571
        %v2573 = vrot.slane %v1610, %v2572
        %v2574 = vlaneseq
        %v2575 = vshrl.u32 %v2574, 7
        %v2576 = vsub.s32 0, %v2575
        %v2577 = vrot.slane %v1611, %v2576
        %v2578 = vlaneseq
        %v2579 = vshrl.u32 %v2578, 7
        %v2580 = vsub.s32 1, %v2579
        %v2581 = vrot.slane %v1611, %v2580
        %v2582 = vlaneseq
        %v2583 = vshrl.u32 %v2582, 7
        %v2584 = vsub.s32 2, %v2583
        %v2585 = vrot.slane %v1611, %v2584
        %v2586 = vlaneseq
        %v2587 = vshrl.u32 %v2586, 7
        %v2588 = vsub.s32 3, %v2587
        %v2589 = vrot.slane %v1611, %v2588
        %v2590 = vlaneseq
        %v2591 = vshrl.u32 %v2590, 7
        %v2592 = vsub.s32 4, %v2591
        %v2593 = vrot.slane %v1611, %v2592
        %v2594 = vlaneseq
        %v2595 = vshrl.u32 %v2594, 7
        %v2596 = vsub.s32 5, %v2595
        %v2597 = vrot.slane %v1611, %v2596
        %v2598 = vlaneseq
        %v2599 = vshrl.u32 %v2598, 7
        %v2600 = vsub.s32 6, %v2599
        %v2601 = vrot.slane %v1611, %v2600
        %v2602 = vlaneseq
        %v2603 = vshrl.u32 %v2602, 7
        %v2604 = vsub.s32 7, %v2603
        %v2605 = vrot.slane %v1611, %v2604
        %v2606 = vlaneseq
        %v2607 = vshrl.u32 %v2606, 7
        %v2608 = vsub.s32 0, %v2607
        %v2609 = vrot.slane %v1612, %v2608
        %v2610 = vlaneseq
        %v2611 = vshrl.u32 %v2610, 7
        %v2612 = vsub.s32 1, %v2611
        %v2613 = vrot.slane %v1612, %v2612
        %v2614 = vlaneseq
        %v2615 = vshrl.u32 %v2614, 7
        %v2616 = vsub.s32 2, %v2615
        %v2617 = vrot.slane %v1612, %v2616
        %v2618 = vlaneseq
        %v2619 = vshrl.u32 %v2618, 7
        %v2620 = vsub.s32 3, %v2619
        %v2621 = vrot.slane %v1612, %v2620
        %v2622 = vlaneseq
        %v2623 = vshrl.u32 %v2622, 7
        %v2624 = vsub.s32 4, %v2623
        %v2625 = vrot.slane %v1612, %v2624
        %v2626 = vlaneseq
        %v2627 = vshrl.u32 %v2626, 7
        %v2628 = vsub.s32 5, %v2627
        %v2629 = vrot.slane %v1612, %v2628
        %v2630 = vlaneseq
        %v2631 = vshrl.u32 %v2630, 7
        %v2632 = vsub.s32 6, %v2631
        %v2633 = vrot.slane %v1612, %v2632
        %v2634 = vlaneseq
        %v2635 = vshrl.u32 %v2634, 7
        %v2636 = vsub.s32 7, %v2635
        %v2637 = vrot.slane %v1612, %v2636
        %v2638 = vlaneseq
        %v2639 = vshrl.u32 %v2638, 7
        %v2640 = vsub.s32 0, %v2639
        %v2641 = vrot.slane %v1613, %v2640
        %v2642 = vlaneseq
        %v2643 = vshrl.u32 %v2642, 7
        %v2644 = vsub.s32 1, %v2643
        %v2645 = vrot.slane %v1613, %v2644
        %v2646 = vlaneseq
        %v2647 = vshrl.u32 %v2646, 7
        %v2648 = vsub.s32 2, %v2647
        %v2649 = vrot.slane %v1613, %v2648
        %v2650 = vlaneseq
        %v2651 = vshrl.u32 %v2650, 7
        %v2652 = vsub.s32 3, %v2651
        %v2653 = vrot.slane %v1613, %v2652
        %v2654 = vlaneseq
        %v2655 = vshrl.u32 %v2654, 7
        %v2656 = vsub.s32 4, %v2655
        %v2657 = vrot.slane %v1613, %v2656
        %v2658 = vlaneseq
        %v2659 = vshrl.u32 %v2658, 7
        %v2660 = vsub.s32 5, %v2659
        %v2661 = vrot.slane %v1613, %v2660
        %v2662 = vlaneseq
        %v2663 = vshrl.u32 %v2662, 7
        %v2664 = vsub.s32 6, %v2663
        %v2665 = vrot.slane %v1613, %v2664
        %v2666 = vlaneseq
        %v2667 = vshrl.u32 %v2666, 7
        %v2668 = vsub.s32 7, %v2667
        %v2669 = vrot.slane %v1613, %v2668
        %v2670 = vcombine.low %v1649, %v1653
        %v2671 = vcombine.low %v1657, %v1661
        %v2672 = vcombine.low %v1665, %v1669
        %v2673 = vcombine.low %v1673, %v1677
        %v2675 = vunpack.c.l.s4 1966171168
        %v2676 = vunpack.c.0.s8 %v2675
        %v2677 = vlaneseq
        %v2678 = vshrl.u32 %v2677, 7
        %v2679 = vsub.s32 %v2676, %v2678
        %v2680 = vrot.slane %v2670, %v2679
        %v2682 = vunpack.c.l.s4 1966171168
        %v2683 = vunpack.c.0.s8 %v2682
        %v2684 = vlaneseq
        %v2685 = vshrl.u32 %v2684, 7
        %v2686 = vsub.s32 %v2683, %v2685
        %v2687 = vrot.slane %v2671, %v2686
        %v2689 = vunpack.c.l.s4 1966171168
        %v2690 = vunpack.c.0.s8 %v2689
        %v2691 = vlaneseq
        %v2692 = vshrl.u32 %v2691, 7
        %v2693 = vsub.s32 %v2690, %v2692
        %v2694 = vrot.slane %v2672, %v2693
        %v2696 = vunpack.c.l.s4 1966171168
        %v2697 = vunpack.c.0.s8 %v2696
        %v2698 = vlaneseq
        %v2699 = vshrl.u32 %v2698, 7
        %v2700 = vsub.s32 %v2697, %v2699
        %v2701 = vrot.slane %v2673, %v2700
        %v2702 = vcombine.low %v2680, %v2687
        %v2703 = vcombine.low %v2694, %v2701
        %v2705 = vunpack.c.l.s4 1966171168
        %v2706 = vunpack.c.0.s8 %v2705
        %v2707 = vlaneseq
        %v2708 = vshrl.u32 %v2707, 7
        %v2709 = vsub.s32 %v2706, %v2708
        %v2710 = vrot.slane %v2702, %v2709
        %v2712 = vunpack.c.l.s4 1966171168
        %v2713 = vunpack.c.0.s8 %v2712
        %v2714 = vlaneseq
        %v2715 = vshrl.u32 %v2714, 7
        %v2716 = vsub.s32 %v2713, %v2715
        %v2717 = vrot.slane %v2703, %v2716
        %v2718 = vcombine.low %v2710, %v2717
        %v2719 = vcombine.low %v1681, %v1685
        %v2720 = vcombine.low %v1689, %v1693
        %v2721 = vcombine.low %v1697, %v1701
        %v2722 = vcombine.low %v1705, %v1709
        %v2724 = vunpack.c.l.s4 1966171168
        %v2725 = vunpack.c.0.s8 %v2724
        %v2726 = vlaneseq
        %v2727 = vshrl.u32 %v2726, 7
        %v2728 = vsub.s32 %v2725, %v2727
        %v2729 = vrot.slane %v2719, %v2728
        %v2731 = vunpack.c.l.s4 1966171168
        %v2732 = vunpack.c.0.s8 %v2731
        %v2733 = vlaneseq
        %v2734 = vshrl.u32 %v2733, 7
        %v2735 = vsub.s32 %v2732, %v2734
        %v2736 = vrot.slane %v2720, %v2735
        %v2738 = vunpack.c.l.s4 1966171168
        %v2739 = vunpack.c.0.s8 %v2738
        %v2740 = vlaneseq
        %v2741 = vshrl.u32 %v2740, 7
        %v2742 = vsub.s32 %v2739, %v2741
        %v2743 = vrot.slane %v2721, %v2742
        %v2745 = vunpack.c.l.s4 1966171168
        %v2746 = vunpack.c.0.s8 %v2745
        %v2747 = vlaneseq
        %v2748 = vshrl.u32 %v2747, 7
        %v2749 = vsub.s32 %v2746, %v2748
        %v2750 = vrot.slane %v2722, %v2749
        %v2751 = vcombine.low %v2729, %v2736
        %v2752 = vcombine.low %v2743, %v2750
        %v2754 = vunpack.c.l.s4 1966171168
        %v2755 = vunpack.c.0.s8 %v2754
        %v2756 = vlaneseq
        %v2757 = vshrl.u32 %v2756, 7
        %v2758 = vsub.s32 %v2755, %v2757
        %v2759 = vrot.slane %v2751, %v2758
        %v2761 = vunpack.c.l.s4 1966171168
        %v2762 = vunpack.c.0.s8 %v2761
        %v2763 = vlaneseq
        %v2764 = vshrl.u32 %v2763, 7
        %v2765 = vsub.s32 %v2762, %v2764
        %v2766 = vrot.slane %v2752, %v2765
        %v2767 = vcombine.low %v2759, %v2766
        %v2768 = vcombine.low %v1713, %v1717
        %v2769 = vcombine.low %v1721, %v1725
        %v2770 = vcombine.low %v1729, %v1733
        %v2771 = vcombine.low %v1737, %v1741
        %v2773 = vunpack.c.l.s4 1966171168
        %v2774 = vunpack.c.0.s8 %v2773
        %v2775 = vlaneseq
        %v2776 = vshrl.u32 %v2775, 7
        %v2777 = vsub.s32 %v2774, %v2776
        %v2778 = vrot.slane %v2768, %v2777
        %v2780 = vunpack.c.l.s4 1966171168
        %v2781 = vunpack.c.0.s8 %v2780
        %v2782 = vlaneseq
        %v2783 = vshrl.u32 %v2782, 7
        %v2784 = vsub.s32 %v2781, %v2783
        %v2785 = vrot.slane %v2769, %v2784
        %v2787 = vunpack.c.l.s4 1966171168
        %v2788 = vunpack.c.0.s8 %v2787
        %v2789 = vlaneseq
        %v2790 = vshrl.u32 %v2789, 7
        %v2791 = vsub.s32 %v2788, %v2790
        %v2792 = vrot.slane %v2770, %v2791
        %v2794 = vunpack.c.l.s4 1966171168
        %v2795 = vunpack.c.0.s8 %v2794
        %v2796 = vlaneseq
        %v2797 = vshrl.u32 %v2796, 7
        %v2798 = vsub.s32 %v2795, %v2797
        %v2799 = vrot.slane %v2771, %v2798
        %v2800 = vcombine.low %v2778, %v2785
        %v2801 = vcombine.low %v2792, %v2799
        %v2803 = vunpack.c.l.s4 1966171168
        %v2804 = vunpack.c.0.s8 %v2803
        %v2805 = vlaneseq
        %v2806 = vshrl.u32 %v2805, 7
        %v2807 = vsub.s32 %v2804, %v2806
        %v2808 = vrot.slane %v2800, %v2807
        %v2810 = vunpack.c.l.s4 1966171168
        %v2811 = vunpack.c.0.s8 %v2810
        %v2812 = vlaneseq
        %v2813 = vshrl.u32 %v2812, 7
        %v2814 = vsub.s32 %v2811, %v2813
        %v2815 = vrot.slane %v2801, %v2814
        %v2816 = vcombine.low %v2808, %v2815
        %v2817 = vcombine.low %v1745, %v1749
        %v2818 = vcombine.low %v1753, %v1757
        %v2819 = vcombine.low %v1761, %v1765
        %v2820 = vcombine.low %v1769, %v1773
        %v2822 = vunpack.c.l.s4 1966171168
        %v2823 = vunpack.c.0.s8 %v2822
        %v2824 = vlaneseq
        %v2825 = vshrl.u32 %v2824, 7
        %v2826 = vsub.s32 %v2823, %v2825
        %v2827 = vrot.slane %v2817, %v2826
        %v2829 = vunpack.c.l.s4 1966171168
        %v2830 = vunpack.c.0.s8 %v2829
        %v2831 = vlaneseq
        %v2832 = vshrl.u32 %v2831, 7
        %v2833 = vsub.s32 %v2830, %v2832
        %v2834 = vrot.slane %v2818, %v2833
        %v2836 = vunpack.c.l.s4 1966171168
        %v2837 = vunpack.c.0.s8 %v2836
        %v2838 = vlaneseq
        %v2839 = vshrl.u32 %v2838, 7
        %v2840 = vsub.s32 %v2837, %v2839
        %v2841 = vrot.slane %v2819, %v2840
        %v2843 = vunpack.c.l.s4 1966171168
        %v2844 = vunpack.c.0.s8 %v2843
        %v2845 = vlaneseq
        %v2846 = vshrl.u32 %v2845, 7
        %v2847 = vsub.s32 %v2844, %v2846
        %v2848 = vrot.slane %v2820, %v2847
        %v2849 = vcombine.low %v2827, %v2834
        %v2850 = vcombine.low %v2841, %v2848
        %v2852 = vunpack.c.l.s4 1966171168
        %v2853 = vunpack.c.0.s8 %v2852
        %v2854 = vlaneseq
        %v2855 = vshrl.u32 %v2854, 7
        %v2856 = vsub.s32 %v2853, %v2855
        %v2857 = vrot.slane %v2849, %v2856
        %v2859 = vunpack.c.l.s4 1966171168
        %v2860 = vunpack.c.0.s8 %v2859
        %v2861 = vlaneseq
        %v2862 = vshrl.u32 %v2861, 7
        %v2863 = vsub.s32 %v2860, %v2862
        %v2864 = vrot.slane %v2850, %v2863
        %v2865 = vcombine.low %v2857, %v2864
        %v2866 = vcombine.low %v1777, %v1781
        %v2867 = vcombine.low %v1785, %v1789
        %v2868 = vcombine.low %v1793, %v1797
        %v2869 = vcombine.low %v1801, %v1805
        %v2871 = vunpack.c.l.s4 1966171168
        %v2872 = vunpack.c.0.s8 %v2871
        %v2873 = vlaneseq
        %v2874 = vshrl.u32 %v2873, 7
        %v2875 = vsub.s32 %v2872, %v2874
        %v2876 = vrot.slane %v2866, %v2875
        %v2878 = vunpack.c.l.s4 1966171168
        %v2879 = vunpack.c.0.s8 %v2878
        %v2880 = vlaneseq
        %v2881 = vshrl.u32 %v2880, 7
        %v2882 = vsub.s32 %v2879, %v2881
        %v2883 = vrot.slane %v2867, %v2882
        %v2885 = vunpack.c.l.s4 1966171168
        %v2886 = vunpack.c.0.s8 %v2885
        %v2887 = vlaneseq
        %v2888 = vshrl.u32 %v2887, 7
        %v2889 = vsub.s32 %v2886, %v2888
        %v2890 = vrot.slane %v2868, %v2889
        %v2892 = vunpack.c.l.s4 1966171168
        %v2893 = vunpack.c.0.s8 %v2892
        %v2894 = vlaneseq
        %v2895 = vshrl.u32 %v2894, 7
        %v2896 = vsub.s32 %v2893, %v2895
        %v2897 = vrot.slane %v2869, %v2896
        %v2898 = vcombine.low %v2876, %v2883
        %v2899 = vcombine.low %v2890, %v2897
        %v2901 = vunpack.c.l.s4 1966171168
        %v2902 = vunpack.c.0.s8 %v2901
        %v2903 = vlaneseq
        %v2904 = vshrl.u32 %v2903, 7
        %v2905 = vsub.s32 %v2902, %v2904
        %v2906 = vrot.slane %v2898, %v2905
        %v2908 = vunpack.c.l.s4 1966171168
        %v2909 = vunpack.c.0.s8 %v2908
        %v2910 = vlaneseq
        %v2911 = vshrl.u32 %v2910, 7
        %v2912 = vsub.s32 %v2909, %v2911
        %v2913 = vrot.slane %v2899, %v2912
        %v2914 = vcombine.low %v2906, %v2913
        %v2915 = vcombine.low %v1809, %v1813
        %v2916 = vcombine.low %v1817, %v1821
        %v2917 = vcombine.low %v1825, %v1829
        %v2918 = vcombine.low %v1833, %v1837
        %v2920 = vunpack.c.l.s4 1966171168
        %v2921 = vunpack.c.0.s8 %v2920
        %v2922 = vlaneseq
        %v2923 = vshrl.u32 %v2922, 7
        %v2924 = vsub.s32 %v2921, %v2923
        %v2925 = vrot.slane %v2915, %v2924
        %v2927 = vunpack.c.l.s4 1966171168
        %v2928 = vunpack.c.0.s8 %v2927
        %v2929 = vlaneseq
        %v2930 = vshrl.u32 %v2929, 7
        %v2931 = vsub.s32 %v2928, %v2930
        %v2932 = vrot.slane %v2916, %v2931
        %v2934 = vunpack.c.l.s4 1966171168
        %v2935 = vunpack.c.0.s8 %v2934
        %v2936 = vlaneseq
        %v2937 = vshrl.u32 %v2936, 7
        %v2938 = vsub.s32 %v2935, %v2937
        %v2939 = vrot.slane %v2917, %v2938
        %v2941 = vunpack.c.l.s4 1966171168
        %v2942 = vunpack.c.0.s8 %v2941
        %v2943 = vlaneseq
        %v2944 = vshrl.u32 %v2943, 7
        %v2945 = vsub.s32 %v2942, %v2944
        %v2946 = vrot.slane %v2918, %v2945
        %v2947 = vcombine.low %v2925, %v2932
        %v2948 = vcombine.low %v2939, %v2946
        %v2950 = vunpack.c.l.s4 1966171168
        %v2951 = vunpack.c.0.s8 %v2950
        %v2952 = vlaneseq
        %v2953 = vshrl.u32 %v2952, 7
        %v2954 = vsub.s32 %v2951, %v2953
        %v2955 = vrot.slane %v2947, %v2954
        %v2957 = vunpack.c.l.s4 1966171168
        %v2958 = vunpack.c.0.s8 %v2957
        %v2959 = vlaneseq
        %v2960 = vshrl.u32 %v2959, 7
        %v2961 = vsub.s32 %v2958, %v2960
        %v2962 = vrot.slane %v2948, %v2961
        %v2963 = vcombine.low %v2955, %v2962
        %v2964 = vcombine.low %v1841, %v1845
        %v2965 = vcombine.low %v1849, %v1853
        %v2966 = vcombine.low %v1857, %v1861
        %v2967 = vcombine.low %v1865, %v1869
        %v2969 = vunpack.c.l.s4 1966171168
        %v2970 = vunpack.c.0.s8 %v2969
        %v2971 = vlaneseq
        %v2972 = vshrl.u32 %v2971, 7
        %v2973 = vsub.s32 %v2970, %v2972
        %v2974 = vrot.slane %v2964, %v2973
        %v2976 = vunpack.c.l.s4 1966171168
        %v2977 = vunpack.c.0.s8 %v2976
        %v2978 = vlaneseq
        %v2979 = vshrl.u32 %v2978, 7
        %v2980 = vsub.s32 %v2977, %v2979
        %v2981 = vrot.slane %v2965, %v2980
        %v2983 = vunpack.c.l.s4 1966171168
        %v2984 = vunpack.c.0.s8 %v2983
        %v2985 = vlaneseq
        %v2986 = vshrl.u32 %v2985, 7
        %v2987 = vsub.s32 %v2984, %v2986
        %v2988 = vrot.slane %v2966, %v2987
        %v2990 = vunpack.c.l.s4 1966171168
        %v2991 = vunpack.c.0.s8 %v2990
        %v2992 = vlaneseq
        %v2993 = vshrl.u32 %v2992, 7
        %v2994 = vsub.s32 %v2991, %v2993
        %v2995 = vrot.slane %v2967, %v2994
        %v2996 = vcombine.low %v2974, %v2981
        %v2997 = vcombine.low %v2988, %v2995
        %v2999 = vunpack.c.l.s4 1966171168
        %v3000 = vunpack.c.0.s8 %v2999
        %v3001 = vlaneseq
        %v3002 = vshrl.u32 %v3001, 7
        %v3003 = vsub.s32 %v3000, %v3002
        %v3004 = vrot.slane %v2996, %v3003
        %v3006 = vunpack.c.l.s4 1966171168
        %v3007 = vunpack.c.0.s8 %v3006
        %v3008 = vlaneseq
        %v3009 = vshrl.u32 %v3008, 7
        %v3010 = vsub.s32 %v3007, %v3009
        %v3011 = vrot.slane %v2997, %v3010
        %v3012 = vcombine.low %v3004, %v3011
        %v3013 = vcombine.low %v1873, %v1877
        %v3014 = vcombine.low %v1881, %v1885
        %v3015 = vcombine.low %v1889, %v1893
        %v3016 = vcombine.low %v1897, %v1901
        %v3018 = vunpack.c.l.s4 1966171168
        %v3019 = vunpack.c.0.s8 %v3018
        %v3020 = vlaneseq
        %v3021 = vshrl.u32 %v3020, 7
        %v3022 = vsub.s32 %v3019, %v3021
        %v3023 = vrot.slane %v3013, %v3022
        %v3025 = vunpack.c.l.s4 1966171168
        %v3026 = vunpack.c.0.s8 %v3025
        %v3027 = vlaneseq
        %v3028 = vshrl.u32 %v3027, 7
        %v3029 = vsub.s32 %v3026, %v3028
        %v3030 = vrot.slane %v3014, %v3029
        %v3032 = vunpack.c.l.s4 1966171168
        %v3033 = vunpack.c.0.s8 %v3032
        %v3034 = vlaneseq
        %v3035 = vshrl.u32 %v3034, 7
        %v3036 = vsub.s32 %v3033, %v3035
        %v3037 = vrot.slane %v3015, %v3036
        %v3039 = vunpack.c.l.s4 1966171168
        %v3040 = vunpack.c.0.s8 %v3039
        %v3041 = vlaneseq
        %v3042 = vshrl.u32 %v3041, 7
        %v3043 = vsub.s32 %v3040, %v3042
        %v3044 = vrot.slane %v3016, %v3043
        %v3045 = vcombine.low %v3023, %v3030
        %v3046 = vcombine.low %v3037, %v3044
        %v3048 = vunpack.c.l.s4 1966171168
        %v3049 = vunpack.c.0.s8 %v3048
        %v3050 = vlaneseq
        %v3051 = vshrl.u32 %v3050, 7
        %v3052 = vsub.s32 %v3049, %v3051
        %v3053 = vrot.slane %v3045, %v3052
        %v3055 = vunpack.c.l.s4 1966171168
        %v3056 = vunpack.c.0.s8 %v3055
        %v3057 = vlaneseq
        %v3058 = vshrl.u32 %v3057, 7
        %v3059 = vsub.s32 %v3056, %v3058
        %v3060 = vrot.slane %v3046, %v3059
        %v3061 = vcombine.low %v3053, %v3060
        %v3062 = vcombine.low %v1905, %v1909
        %v3063 = vcombine.low %v1913, %v1917
        %v3064 = vcombine.low %v1921, %v1925
        %v3065 = vcombine.low %v1929, %v1933
        %v3067 = vunpack.c.l.s4 1966171168
        %v3068 = vunpack.c.0.s8 %v3067
        %v3069 = vlaneseq
        %v3070 = vshrl.u32 %v3069, 7
        %v3071 = vsub.s32 %v3068, %v3070
        %v3072 = vrot.slane %v3062, %v3071
        %v3074 = vunpack.c.l.s4 1966171168
        %v3075 = vunpack.c.0.s8 %v3074
        %v3076 = vlaneseq
        %v3077 = vshrl.u32 %v3076, 7
        %v3078 = vsub.s32 %v3075, %v3077
        %v3079 = vrot.slane %v3063, %v3078
        %v3081 = vunpack.c.l.s4 1966171168
        %v3082 = vunpack.c.0.s8 %v3081
        %v3083 = vlaneseq
        %v3084 = vshrl.u32 %v3083, 7
        %v3085 = vsub.s32 %v3082, %v3084
        %v3086 = vrot.slane %v3064, %v3085
        %v3088 = vunpack.c.l.s4 1966171168
        %v3089 = vunpack.c.0.s8 %v3088
        %v3090 = vlaneseq
        %v3091 = vshrl.u32 %v3090, 7
        %v3092 = vsub.s32 %v3089, %v3091
        %v3093 = vrot.slane %v3065, %v3092
        %v3094 = vcombine.low %v3072, %v3079
        %v3095 = vcombine.low %v3086, %v3093
        %v3097 = vunpack.c.l.s4 1966171168
        %v3098 = vunpack.c.0.s8 %v3097
        %v3099 = vlaneseq
        %v3100 = vshrl.u32 %v3099, 7
        %v3101 = vsub.s32 %v3098, %v3100
        %v3102 = vrot.slane %v3094, %v3101
        %v3104 = vunpack.c.l.s4 1966171168
        %v3105 = vunpack.c.0.s8 %v3104
        %v3106 = vlaneseq
        %v3107 = vshrl.u32 %v3106, 7
        %v3108 = vsub.s32 %v3105, %v3107
        %v3109 = vrot.slane %v3095, %v3108
        %v3110 = vcombine.low %v3102, %v3109
        %v3111 = vcombine.low %v1937, %v1941
        %v3112 = vcombine.low %v1945, %v1949
        %v3113 = vcombine.low %v1953, %v1957
        %v3114 = vcombine.low %v1961, %v1965
        %v3116 = vunpack.c.l.s4 1966171168
        %v3117 = vunpack.c.0.s8 %v3116
        %v3118 = vlaneseq
        %v3119 = vshrl.u32 %v3118, 7
        %v3120 = vsub.s32 %v3117, %v3119
        %v3121 = vrot.slane %v3111, %v3120
        %v3123 = vunpack.c.l.s4 1966171168
        %v3124 = vunpack.c.0.s8 %v3123
        %v3125 = vlaneseq
        %v3126 = vshrl.u32 %v3125, 7
        %v3127 = vsub.s32 %v3124, %v3126
        %v3128 = vrot.slane %v3112, %v3127
        %v3130 = vunpack.c.l.s4 1966171168
        %v3131 = vunpack.c.0.s8 %v3130
        %v3132 = vlaneseq
        %v3133 = vshrl.u32 %v3132, 7
        %v3134 = vsub.s32 %v3131, %v3133
        %v3135 = vrot.slane %v3113, %v3134
        %v3137 = vunpack.c.l.s4 1966171168
        %v3138 = vunpack.c.0.s8 %v3137
        %v3139 = vlaneseq
        %v3140 = vshrl.u32 %v3139, 7
        %v3141 = vsub.s32 %v3138, %v3140
        %v3142 = vrot.slane %v3114, %v3141
        %v3143 = vcombine.low %v3121, %v3128
        %v3144 = vcombine.low %v3135, %v3142
        %v3146 = vunpack.c.l.s4 1966171168
        %v3147 = vunpack.c.0.s8 %v3146
        %v3148 = vlaneseq
        %v3149 = vshrl.u32 %v3148, 7
        %v3150 = vsub.s32 %v3147, %v3149
        %v3151 = vrot.slane %v3143, %v3150
        %v3153 = vunpack.c.l.s4 1966171168
        %v3154 = vunpack.c.0.s8 %v3153
        %v3155 = vlaneseq
        %v3156 = vshrl.u32 %v3155, 7
        %v3157 = vsub.s32 %v3154, %v3156
        %v3158 = vrot.slane %v3144, %v3157
        %v3159 = vcombine.low %v3151, %v3158
        %v3160 = vcombine.low %v1969, %v1973
        %v3161 = vcombine.low %v1977, %v1981
        %v3162 = vcombine.low %v1985, %v1989
        %v3163 = vcombine.low %v1993, %v1997
        %v3165 = vunpack.c.l.s4 1966171168
        %v3166 = vunpack.c.0.s8 %v3165
        %v3167 = vlaneseq
        %v3168 = vshrl.u32 %v3167, 7
        %v3169 = vsub.s32 %v3166, %v3168
        %v3170 = vrot.slane %v3160, %v3169
        %v3172 = vunpack.c.l.s4 1966171168
        %v3173 = vunpack.c.0.s8 %v3172
        %v3174 = vlaneseq
        %v3175 = vshrl.u32 %v3174, 7
        %v3176 = vsub.s32 %v3173, %v3175
        %v3177 = vrot.slane %v3161, %v3176
        %v3179 = vunpack.c.l.s4 1966171168
        %v3180 = vunpack.c.0.s8 %v3179
        %v3181 = vlaneseq
        %v3182 = vshrl.u32 %v3181, 7
        %v3183 = vsub.s32 %v3180, %v3182
        %v3184 = vrot.slane %v3162, %v3183
        %v3186 = vunpack.c.l.s4 1966171168
        %v3187 = vunpack.c.0.s8 %v3186
        %v3188 = vlaneseq
        %v3189 = vshrl.u32 %v3188, 7
        %v3190 = vsub.s32 %v3187, %v3189
        %v3191 = vrot.slane %v3163, %v3190
        %v3192 = vcombine.low %v3170, %v3177
        %v3193 = vcombine.low %v3184, %v3191
        %v3195 = vunpack.c.l.s4 1966171168
        %v3196 = vunpack.c.0.s8 %v3195
        %v3197 = vlaneseq
        %v3198 = vshrl.u32 %v3197, 7
        %v3199 = vsub.s32 %v3196, %v3198
        %v3200 = vrot.slane %v3192, %v3199
        %v3202 = vunpack.c.l.s4 1966171168
        %v3203 = vunpack.c.0.s8 %v3202
        %v3204 = vlaneseq
        %v3205 = vshrl.u32 %v3204, 7
        %v3206 = vsub.s32 %v3203, %v3205
        %v3207 = vrot.slane %v3193, %v3206
        %v3208 = vcombine.low %v3200, %v3207
        %v3209 = vcombine.low %v2001, %v2005
        %v3210 = vcombine.low %v2009, %v2013
        %v3211 = vcombine.low %v2017, %v2021
        %v3212 = vcombine.low %v2025, %v2029
        %v3214 = vunpack.c.l.s4 1966171168
        %v3215 = vunpack.c.0.s8 %v3214
        %v3216 = vlaneseq
        %v3217 = vshrl.u32 %v3216, 7
        %v3218 = vsub.s32 %v3215, %v3217
        %v3219 = vrot.slane %v3209, %v3218
        %v3221 = vunpack.c.l.s4 1966171168
        %v3222 = vunpack.c.0.s8 %v3221
        %v3223 = vlaneseq
        %v3224 = vshrl.u32 %v3223, 7
        %v3225 = vsub.s32 %v3222, %v3224
        %v3226 = vrot.slane %v3210, %v3225
        %v3228 = vunpack.c.l.s4 1966171168
        %v3229 = vunpack.c.0.s8 %v3228
        %v3230 = vlaneseq
        %v3231 = vshrl.u32 %v3230, 7
        %v3232 = vsub.s32 %v3229, %v3231
        %v3233 = vrot.slane %v3211, %v3232
        %v3235 = vunpack.c.l.s4 1966171168
        %v3236 = vunpack.c.0.s8 %v3235
        %v3237 = vlaneseq
        %v3238 = vshrl.u32 %v3237, 7
        %v3239 = vsub.s32 %v3236, %v3238
        %v3240 = vrot.slane %v3212, %v3239
        %v3241 = vcombine.low %v3219, %v3226
        %v3242 = vcombine.low %v3233, %v3240
        %v3244 = vunpack.c.l.s4 1966171168
        %v3245 = vunpack.c.0.s8 %v3244
        %v3246 = vlaneseq
        %v3247 = vshrl.u32 %v3246, 7
        %v3248 = vsub.s32 %v3245, %v3247
        %v3249 = vrot.slane %v3241, %v3248
        %v3251 = vunpack.c.l.s4 1966171168
        %v3252 = vunpack.c.0.s8 %v3251
        %v3253 = vlaneseq
        %v3254 = vshrl.u32 %v3253, 7
        %v3255 = vsub.s32 %v3252, %v3254
        %v3256 = vrot.slane %v3242, %v3255
        %v3257 = vcombine.low %v3249, %v3256
        %v3258 = vcombine.low %v2033, %v2037
        %v3259 = vcombine.low %v2041, %v2045
        %v3260 = vcombine.low %v2049, %v2053
        %v3261 = vcombine.low %v2057, %v2061
        %v3263 = vunpack.c.l.s4 1966171168
        %v3264 = vunpack.c.0.s8 %v3263
        %v3265 = vlaneseq
        %v3266 = vshrl.u32 %v3265, 7
        %v3267 = vsub.s32 %v3264, %v3266
        %v3268 = vrot.slane %v3258, %v3267
        %v3270 = vunpack.c.l.s4 1966171168
        %v3271 = vunpack.c.0.s8 %v3270
        %v3272 = vlaneseq
        %v3273 = vshrl.u32 %v3272, 7
        %v3274 = vsub.s32 %v3271, %v3273
        %v3275 = vrot.slane %v3259, %v3274
        %v3277 = vunpack.c.l.s4 1966171168
        %v3278 = vunpack.c.0.s8 %v3277
        %v3279 = vlaneseq
        %v3280 = vshrl.u32 %v3279, 7
        %v3281 = vsub.s32 %v3278, %v3280
        %v3282 = vrot.slane %v3260, %v3281
        %v3284 = vunpack.c.l.s4 1966171168
        %v3285 = vunpack.c.0.s8 %v3284
        %v3286 = vlaneseq
        %v3287 = vshrl.u32 %v3286, 7
        %v3288 = vsub.s32 %v3285, %v3287
        %v3289 = vrot.slane %v3261, %v3288
        %v3290 = vcombine.low %v3268, %v3275
        %v3291 = vcombine.low %v3282, %v3289
        %v3293 = vunpack.c.l.s4 1966171168
        %v3294 = vunpack.c.0.s8 %v3293
        %v3295 = vlaneseq
        %v3296 = vshrl.u32 %v3295, 7
        %v3297 = vsub.s32 %v3294, %v3296
        %v3298 = vrot.slane %v3290, %v3297
        %v3300 = vunpack.c.l.s4 1966171168
        %v3301 = vunpack.c.0.s8 %v3300
        %v3302 = vlaneseq
        %v3303 = vshrl.u32 %v3302, 7
        %v3304 = vsub.s32 %v3301, %v3303
        %v3305 = vrot.slane %v3291, %v3304
        %v3306 = vcombine.low %v3298, %v3305
        %v3307 = vcombine.low %v2065, %v2069
        %v3308 = vcombine.low %v2073, %v2077
        %v3309 = vcombine.low %v2081, %v2085
        %v3310 = vcombine.low %v2089, %v2093
        %v3312 = vunpack.c.l.s4 1966171168
        %v3313 = vunpack.c.0.s8 %v3312
        %v3314 = vlaneseq
        %v3315 = vshrl.u32 %v3314, 7
        %v3316 = vsub.s32 %v3313, %v3315
        %v3317 = vrot.slane %v3307, %v3316
        %v3319 = vunpack.c.l.s4 1966171168
        %v3320 = vunpack.c.0.s8 %v3319
        %v3321 = vlaneseq
        %v3322 = vshrl.u32 %v3321, 7
        %v3323 = vsub.s32 %v3320, %v3322
        %v3324 = vrot.slane %v3308, %v3323
        %v3326 = vunpack.c.l.s4 1966171168
        %v3327 = vunpack.c.0.s8 %v3326
        %v3328 = vlaneseq
        %v3329 = vshrl.u32 %v3328, 7
        %v3330 = vsub.s32 %v3327, %v3329
        %v3331 = vrot.slane %v3309, %v3330
        %v3333 = vunpack.c.l.s4 1966171168
        %v3334 = vunpack.c.0.s8 %v3333
        %v3335 = vlaneseq
        %v3336 = vshrl.u32 %v3335, 7
        %v3337 = vsub.s32 %v3334, %v3336
        %v3338 = vrot.slane %v3310, %v3337
        %v3339 = vcombine.low %v3317, %v3324
        %v3340 = vcombine.low %v3331, %v3338
        %v3342 = vunpack.c.l.s4 1966171168
        %v3343 = vunpack.c.0.s8 %v3342
        %v3344 = vlaneseq
        %v3345 = vshrl.u32 %v3344, 7
        %v3346 = vsub.s32 %v3343, %v3345
        %v3347 = vrot.slane %v3339, %v3346
        %v3349 = vunpack.c.l.s4 1966171168
        %v3350 = vunpack.c.0.s8 %v3349
        %v3351 = vlaneseq
        %v3352 = vshrl.u32 %v3351, 7
        %v3353 = vsub.s32 %v3350, %v3352
        %v3354 = vrot.slane %v3340, %v3353
        %v3355 = vcombine.low %v3347, %v3354
        %v3356 = vcombine.low %v2097, %v2101
        %v3357 = vcombine.low %v2105, %v2109
        %v3358 = vcombine.low %v2113, %v2117
        %v3359 = vcombine.low %v2121, %v2125
        %v3361 = vunpack.c.l.s4 1966171168
        %v3362 = vunpack.c.0.s8 %v3361
        %v3363 = vlaneseq
        %v3364 = vshrl.u32 %v3363, 7
        %v3365 = vsub.s32 %v3362, %v3364
        %v3366 = vrot.slane %v3356, %v3365
        %v3368 = vunpack.c.l.s4 1966171168
        %v3369 = vunpack.c.0.s8 %v3368
        %v3370 = vlaneseq
        %v3371 = vshrl.u32 %v3370, 7
        %v3372 = vsub.s32 %v3369, %v3371
        %v3373 = vrot.slane %v3357, %v3372
        %v3375 = vunpack.c.l.s4 1966171168
        %v3376 = vunpack.c.0.s8 %v3375
        %v3377 = vlaneseq
        %v3378 = vshrl.u32 %v3377, 7
        %v3379 = vsub.s32 %v3376, %v3378
        %v3380 = vrot.slane %v3358, %v3379
        %v3382 = vunpack.c.l.s4 1966171168
        %v3383 = vunpack.c.0.s8 %v3382
        %v3384 = vlaneseq
        %v3385 = vshrl.u32 %v3384, 7
        %v3386 = vsub.s32 %v3383, %v3385
        %v3387 = vrot.slane %v3359, %v3386
        %v3388 = vcombine.low %v3366, %v3373
        %v3389 = vcombine.low %v3380, %v3387
        %v3391 = vunpack.c.l.s4 1966171168
        %v3392 = vunpack.c.0.s8 %v3391
        %v3393 = vlaneseq
        %v3394 = vshrl.u32 %v3393, 7
        %v3395 = vsub.s32 %v3392, %v3394
        %v3396 = vrot.slane %v3388, %v3395
        %v3398 = vunpack.c.l.s4 1966171168
        %v3399 = vunpack.c.0.s8 %v3398
        %v3400 = vlaneseq
        %v3401 = vshrl.u32 %v3400, 7
        %v3402 = vsub.s32 %v3399, %v3401
        %v3403 = vrot.slane %v3389, %v3402
        %v3404 = vcombine.low %v3396, %v3403
        %v3405 = vcombine.low %v2129, %v2133
        %v3406 = vcombine.low %v2137, %v2141
        %v3407 = vcombine.low %v2145, %v2149
        %v3408 = vcombine.low %v2153, %v2157
        %v3410 = vunpack.c.l.s4 1966171168
        %v3411 = vunpack.c.0.s8 %v3410
        %v3412 = vlaneseq
        %v3413 = vshrl.u32 %v3412, 7
        %v3414 = vsub.s32 %v3411, %v3413
        %v3415 = vrot.slane %v3405, %v3414
        %v3417 = vunpack.c.l.s4 1966171168
        %v3418 = vunpack.c.0.s8 %v3417
        %v3419 = vlaneseq
        %v3420 = vshrl.u32 %v3419, 7
        %v3421 = vsub.s32 %v3418, %v3420
        %v3422 = vrot.slane %v3406, %v3421
        %v3424 = vunpack.c.l.s4 1966171168
        %v3425 = vunpack.c.0.s8 %v3424
        %v3426 = vlaneseq
        %v3427 = vshrl.u32 %v3426, 7
        %v3428 = vsub.s32 %v3425, %v3427
        %v3429 = vrot.slane %v3407, %v3428
        %v3431 = vunpack.c.l.s4 1966171168
        %v3432 = vunpack.c.0.s8 %v3431
        %v3433 = vlaneseq
        %v3434 = vshrl.u32 %v3433, 7
        %v3435 = vsub.s32 %v3432, %v3434
        %v3436 = vrot.slane %v3408, %v3435
        %v3437 = vcombine.low %v3415, %v3422
        %v3438 = vcombine.low %v3429, %v3436
        %v3440 = vunpack.c.l.s4 1966171168
        %v3441 = vunpack.c.0.s8 %v3440
        %v3442 = vlaneseq
        %v3443 = vshrl.u32 %v3442, 7
        %v3444 = vsub.s32 %v3441, %v3443
        %v3445 = vrot.slane %v3437, %v3444
        %v3447 = vunpack.c.l.s4 1966171168
        %v3448 = vunpack.c.0.s8 %v3447
        %v3449 = vlaneseq
        %v3450 = vshrl.u32 %v3449, 7
        %v3451 = vsub.s32 %v3448, %v3450
        %v3452 = vrot.slane %v3438, %v3451
        %v3453 = vcombine.low %v3445, %v3452
        %v3454 = vcombine.low %v2161, %v2165
        %v3455 = vcombine.low %v2169, %v2173
        %v3456 = vcombine.low %v2177, %v2181
        %v3457 = vcombine.low %v2185, %v2189
        %v3459 = vunpack.c.l.s4 1966171168
        %v3460 = vunpack.c.0.s8 %v3459
        %v3461 = vlaneseq
        %v3462 = vshrl.u32 %v3461, 7
        %v3463 = vsub.s32 %v3460, %v3462
        %v3464 = vrot.slane %v3454, %v3463
        %v3466 = vunpack.c.l.s4 1966171168
        %v3467 = vunpack.c.0.s8 %v3466
        %v3468 = vlaneseq
        %v3469 = vshrl.u32 %v3468, 7
        %v3470 = vsub.s32 %v3467, %v3469
        %v3471 = vrot.slane %v3455, %v3470
        %v3473 = vunpack.c.l.s4 1966171168
        %v3474 = vunpack.c.0.s8 %v3473
        %v3475 = vlaneseq
        %v3476 = vshrl.u32 %v3475, 7
        %v3477 = vsub.s32 %v3474, %v3476
        %v3478 = vrot.slane %v3456, %v3477
        %v3480 = vunpack.c.l.s4 1966171168
        %v3481 = vunpack.c.0.s8 %v3480
        %v3482 = vlaneseq
        %v3483 = vshrl.u32 %v3482, 7
        %v3484 = vsub.s32 %v3481, %v3483
        %v3485 = vrot.slane %v3457, %v3484
        %v3486 = vcombine.low %v3464, %v3471
        %v3487 = vcombine.low %v3478, %v3485
        %v3489 = vunpack.c.l.s4 1966171168
        %v3490 = vunpack.c.0.s8 %v3489
        %v3491 = vlaneseq
        %v3492 = vshrl.u32 %v3491, 7
        %v3493 = vsub.s32 %v3490, %v3492
        %v3494 = vrot.slane %v3486, %v3493
        %v3496 = vunpack.c.l.s4 1966171168
        %v3497 = vunpack.c.0.s8 %v3496
        %v3498 = vlaneseq
        %v3499 = vshrl.u32 %v3498, 7
        %v3500 = vsub.s32 %v3497, %v3499
        %v3501 = vrot.slane %v3487, %v3500
        %v3502 = vcombine.low %v3494, %v3501
        %v3503 = vcombine.low %v2193, %v2197
        %v3504 = vcombine.low %v2201, %v2205
        %v3505 = vcombine.low %v2209, %v2213
        %v3506 = vcombine.low %v2217, %v2221
        %v3508 = vunpack.c.l.s4 1966171168
        %v3509 = vunpack.c.0.s8 %v3508
        %v3510 = vlaneseq
        %v3511 = vshrl.u32 %v3510, 7
        %v3512 = vsub.s32 %v3509, %v3511
        %v3513 = vrot.slane %v3503, %v3512
        %v3515 = vunpack.c.l.s4 1966171168
        %v3516 = vunpack.c.0.s8 %v3515
        %v3517 = vlaneseq
        %v3518 = vshrl.u32 %v3517, 7
        %v3519 = vsub.s32 %v3516, %v3518
        %v3520 = vrot.slane %v3504, %v3519
        %v3522 = vunpack.c.l.s4 1966171168
        %v3523 = vunpack.c.0.s8 %v3522
        %v3524 = vlaneseq
        %v3525 = vshrl.u32 %v3524, 7
        %v3526 = vsub.s32 %v3523, %v3525
        %v3527 = vrot.slane %v3505, %v3526
        %v3529 = vunpack.c.l.s4 1966171168
        %v3530 = vunpack.c.0.s8 %v3529
        %v3531 = vlaneseq
        %v3532 = vshrl.u32 %v3531, 7
        %v3533 = vsub.s32 %v3530, %v3532
        %v3534 = vrot.slane %v3506, %v3533
        %v3535 = vcombine.low %v3513, %v3520
        %v3536 = vcombine.low %v3527, %v3534
        %v3538 = vunpack.c.l.s4 1966171168
        %v3539 = vunpack.c.0.s8 %v3538
        %v3540 = vlaneseq
        %v3541 = vshrl.u32 %v3540, 7
        %v3542 = vsub.s32 %v3539, %v3541
        %v3543 = vrot.slane %v3535, %v3542
        %v3545 = vunpack.c.l.s4 1966171168
        %v3546 = vunpack.c.0.s8 %v3545
        %v3547 = vlaneseq
        %v3548 = vshrl.u32 %v3547, 7
        %v3549 = vsub.s32 %v3546, %v3548
        %v3550 = vrot.slane %v3536, %v3549
        %v3551 = vcombine.low %v3543, %v3550
        %v3552 = vcombine.low %v2225, %v2229
        %v3553 = vcombine.low %v2233, %v2237
        %v3554 = vcombine.low %v2241, %v2245
        %v3555 = vcombine.low %v2249, %v2253
        %v3557 = vunpack.c.l.s4 1966171168
        %v3558 = vunpack.c.0.s8 %v3557
        %v3559 = vlaneseq
        %v3560 = vshrl.u32 %v3559, 7
        %v3561 = vsub.s32 %v3558, %v3560
        %v3562 = vrot.slane %v3552, %v3561
        %v3564 = vunpack.c.l.s4 1966171168
        %v3565 = vunpack.c.0.s8 %v3564
        %v3566 = vlaneseq
        %v3567 = vshrl.u32 %v3566, 7
        %v3568 = vsub.s32 %v3565, %v3567
        %v3569 = vrot.slane %v3553, %v3568
        %v3571 = vunpack.c.l.s4 1966171168
        %v3572 = vunpack.c.0.s8 %v3571
        %v3573 = vlaneseq
        %v3574 = vshrl.u32 %v3573, 7
        %v3575 = vsub.s32 %v3572, %v3574
        %v3576 = vrot.slane %v3554, %v3575
        %v3578 = vunpack.c.l.s4 1966171168
        %v3579 = vunpack.c.0.s8 %v3578
        %v3580 = vlaneseq
        %v3581 = vshrl.u32 %v3580, 7
        %v3582 = vsub.s32 %v3579, %v3581
        %v3583 = vrot.slane %v3555, %v3582
        %v3584 = vcombine.low %v3562, %v3569
        %v3585 = vcombine.low %v3576, %v3583
        %v3587 = vunpack.c.l.s4 1966171168
        %v3588 = vunpack.c.0.s8 %v3587
        %v3589 = vlaneseq
        %v3590 = vshrl.u32 %v3589, 7
        %v3591 = vsub.s32 %v3588, %v3590
        %v3592 = vrot.slane %v3584, %v3591
        %v3594 = vunpack.c.l.s4 1966171168
        %v3595 = vunpack.c.0.s8 %v3594
        %v3596 = vlaneseq
        %v3597 = vshrl.u32 %v3596, 7
        %v3598 = vsub.s32 %v3595, %v3597
        %v3599 = vrot.slane %v3585, %v3598
        %v3600 = vcombine.low %v3592, %v3599
        %v3601 = vcombine.low %v2257, %v2261
        %v3602 = vcombine.low %v2265, %v2269
        %v3603 = vcombine.low %v2273, %v2277
        %v3604 = vcombine.low %v2281, %v2285
        %v3606 = vunpack.c.l.s4 1966171168
        %v3607 = vunpack.c.0.s8 %v3606
        %v3608 = vlaneseq
        %v3609 = vshrl.u32 %v3608, 7
        %v3610 = vsub.s32 %v3607, %v3609
        %v3611 = vrot.slane %v3601, %v3610
        %v3613 = vunpack.c.l.s4 1966171168
        %v3614 = vunpack.c.0.s8 %v3613
        %v3615 = vlaneseq
        %v3616 = vshrl.u32 %v3615, 7
        %v3617 = vsub.s32 %v3614, %v3616
        %v3618 = vrot.slane %v3602, %v3617
        %v3620 = vunpack.c.l.s4 1966171168
        %v3621 = vunpack.c.0.s8 %v3620
        %v3622 = vlaneseq
        %v3623 = vshrl.u32 %v3622, 7
        %v3624 = vsub.s32 %v3621, %v3623
        %v3625 = vrot.slane %v3603, %v3624
        %v3627 = vunpack.c.l.s4 1966171168
        %v3628 = vunpack.c.0.s8 %v3627
        %v3629 = vlaneseq
        %v3630 = vshrl.u32 %v3629, 7
        %v3631 = vsub.s32 %v3628, %v3630
        %v3632 = vrot.slane %v3604, %v3631
        %v3633 = vcombine.low %v3611, %v3618
        %v3634 = vcombine.low %v3625, %v3632
        %v3636 = vunpack.c.l.s4 1966171168
        %v3637 = vunpack.c.0.s8 %v3636
        %v3638 = vlaneseq
        %v3639 = vshrl.u32 %v3638, 7
        %v3640 = vsub.s32 %v3637, %v3639
        %v3641 = vrot.slane %v3633, %v3640
        %v3643 = vunpack.c.l.s4 1966171168
        %v3644 = vunpack.c.0.s8 %v3643
        %v3645 = vlaneseq
        %v3646 = vshrl.u32 %v3645, 7
        %v3647 = vsub.s32 %v3644, %v3646
        %v3648 = vrot.slane %v3634, %v3647
        %v3649 = vcombine.low %v3641, %v3648
        %v3650 = vcombine.low %v2289, %v2293
        %v3651 = vcombine.low %v2297, %v2301
        %v3652 = vcombine.low %v2305, %v2309
        %v3653 = vcombine.low %v2313, %v2317
        %v3655 = vunpack.c.l.s4 1966171168
        %v3656 = vunpack.c.0.s8 %v3655
        %v3657 = vlaneseq
        %v3658 = vshrl.u32 %v3657, 7
        %v3659 = vsub.s32 %v3656, %v3658
        %v3660 = vrot.slane %v3650, %v3659
        %v3662 = vunpack.c.l.s4 1966171168
        %v3663 = vunpack.c.0.s8 %v3662
        %v3664 = vlaneseq
        %v3665 = vshrl.u32 %v3664, 7
        %v3666 = vsub.s32 %v3663, %v3665
        %v3667 = vrot.slane %v3651, %v3666
        %v3669 = vunpack.c.l.s4 1966171168
        %v3670 = vunpack.c.0.s8 %v3669
        %v3671 = vlaneseq
        %v3672 = vshrl.u32 %v3671, 7
        %v3673 = vsub.s32 %v3670, %v3672
        %v3674 = vrot.slane %v3652, %v3673
        %v3676 = vunpack.c.l.s4 1966171168
        %v3677 = vunpack.c.0.s8 %v3676
        %v3678 = vlaneseq
        %v3679 = vshrl.u32 %v3678, 7
        %v3680 = vsub.s32 %v3677, %v3679
        %v3681 = vrot.slane %v3653, %v3680
        %v3682 = vcombine.low %v3660, %v3667
        %v3683 = vcombine.low %v3674, %v3681
        %v3685 = vunpack.c.l.s4 1966171168
        %v3686 = vunpack.c.0.s8 %v3685
        %v3687 = vlaneseq
        %v3688 = vshrl.u32 %v3687, 7
        %v3689 = vsub.s32 %v3686, %v3688
        %v3690 = vrot.slane %v3682, %v3689
        %v3692 = vunpack.c.l.s4 1966171168
        %v3693 = vunpack.c.0.s8 %v3692
        %v3694 = vlaneseq
        %v3695 = vshrl.u32 %v3694, 7
        %v3696 = vsub.s32 %v3693, %v3695
        %v3697 = vrot.slane %v3683, %v3696
        %v3698 = vcombine.low %v3690, %v3697
        %v3699 = vcombine.low %v2321, %v2325
        %v3700 = vcombine.low %v2329, %v2333
        %v3701 = vcombine.low %v2337, %v2341
        %v3702 = vcombine.low %v2345, %v2349
        %v3704 = vunpack.c.l.s4 1966171168
        %v3705 = vunpack.c.0.s8 %v3704
        %v3706 = vlaneseq
        %v3707 = vshrl.u32 %v3706, 7
        %v3708 = vsub.s32 %v3705, %v3707
        %v3709 = vrot.slane %v3699, %v3708
        %v3711 = vunpack.c.l.s4 1966171168
        %v3712 = vunpack.c.0.s8 %v3711
        %v3713 = vlaneseq
        %v3714 = vshrl.u32 %v3713, 7
        %v3715 = vsub.s32 %v3712, %v3714
        %v3716 = vrot.slane %v3700, %v3715
        %v3718 = vunpack.c.l.s4 1966171168
        %v3719 = vunpack.c.0.s8 %v3718
        %v3720 = vlaneseq
        %v3721 = vshrl.u32 %v3720, 7
        %v3722 = vsub.s32 %v3719, %v3721
        %v3723 = vrot.slane %v3701, %v3722
        %v3725 = vunpack.c.l.s4 1966171168
        %v3726 = vunpack.c.0.s8 %v3725
        %v3727 = vlaneseq
        %v3728 = vshrl.u32 %v3727, 7
        %v3729 = vsub.s32 %v3726, %v3728
        %v3730 = vrot.slane %v3702, %v3729
        %v3731 = vcombine.low %v3709, %v3716
        %v3732 = vcombine.low %v3723, %v3730
        %v3734 = vunpack.c.l.s4 1966171168
        %v3735 = vunpack.c.0.s8 %v3734
        %v3736 = vlaneseq
        %v3737 = vshrl.u32 %v3736, 7
        %v3738 = vsub.s32 %v3735, %v3737
        %v3739 = vrot.slane %v3731, %v3738
        %v3741 = vunpack.c.l.s4 1966171168
        %v3742 = vunpack.c.0.s8 %v3741
        %v3743 = vlaneseq
        %v3744 = vshrl.u32 %v3743, 7
        %v3745 = vsub.s32 %v3742, %v3744
        %v3746 = vrot.slane %v3732, %v3745
        %v3747 = vcombine.low %v3739, %v3746
        %v3748 = vcombine.low %v2353, %v2357
        %v3749 = vcombine.low %v2361, %v2365
        %v3750 = vcombine.low %v2369, %v2373
        %v3751 = vcombine.low %v2377, %v2381
        %v3753 = vunpack.c.l.s4 1966171168
        %v3754 = vunpack.c.0.s8 %v3753
        %v3755 = vlaneseq
        %v3756 = vshrl.u32 %v3755, 7
        %v3757 = vsub.s32 %v3754, %v3756
        %v3758 = vrot.slane %v3748, %v3757
        %v3760 = vunpack.c.l.s4 1966171168
        %v3761 = vunpack.c.0.s8 %v3760
        %v3762 = vlaneseq
        %v3763 = vshrl.u32 %v3762, 7
        %v3764 = vsub.s32 %v3761, %v3763
        %v3765 = vrot.slane %v3749, %v3764
        %v3767 = vunpack.c.l.s4 1966171168
        %v3768 = vunpack.c.0.s8 %v3767
        %v3769 = vlaneseq
        %v3770 = vshrl.u32 %v3769, 7
        %v3771 = vsub.s32 %v3768, %v3770
        %v3772 = vrot.slane %v3750, %v3771
        %v3774 = vunpack.c.l.s4 1966171168
        %v3775 = vunpack.c.0.s8 %v3774
        %v3776 = vlaneseq
        %v3777 = vshrl.u32 %v3776, 7
        %v3778 = vsub.s32 %v3775, %v3777
        %v3779 = vrot.slane %v3751, %v3778
        %v3780 = vcombine.low %v3758, %v3765
        %v3781 = vcombine.low %v3772, %v3779
        %v3783 = vunpack.c.l.s4 1966171168
        %v3784 = vunpack.c.0.s8 %v3783
        %v3785 = vlaneseq
        %v3786 = vshrl.u32 %v3785, 7
        %v3787 = vsub.s32 %v3784, %v3786
        %v3788 = vrot.slane %v3780, %v3787
        %v3790 = vunpack.c.l.s4 1966171168
        %v3791 = vunpack.c.0.s8 %v3790
        %v3792 = vlaneseq
        %v3793 = vshrl.u32 %v3792, 7
        %v3794 = vsub.s32 %v3791, %v3793
        %v3795 = vrot.slane %v3781, %v3794
        %v3796 = vcombine.low %v3788, %v3795
        %v3797 = vcombine.low %v2385, %v2389
        %v3798 = vcombine.low %v2393, %v2397
        %v3799 = vcombine.low %v2401, %v2405
        %v3800 = vcombine.low %v2409, %v2413
        %v3802 = vunpack.c.l.s4 1966171168
        %v3803 = vunpack.c.0.s8 %v3802
        %v3804 = vlaneseq
        %v3805 = vshrl.u32 %v3804, 7
        %v3806 = vsub.s32 %v3803, %v3805
        %v3807 = vrot.slane %v3797, %v3806
        %v3809 = vunpack.c.l.s4 1966171168
        %v3810 = vunpack.c.0.s8 %v3809
        %v3811 = vlaneseq
        %v3812 = vshrl.u32 %v3811, 7
        %v3813 = vsub.s32 %v3810, %v3812
        %v3814 = vrot.slane %v3798, %v3813
        %v3816 = vunpack.c.l.s4 1966171168
        %v3817 = vunpack.c.0.s8 %v3816
        %v3818 = vlaneseq
        %v3819 = vshrl.u32 %v3818, 7
        %v3820 = vsub.s32 %v3817, %v3819
        %v3821 = vrot.slane %v3799, %v3820
        %v3823 = vunpack.c.l.s4 1966171168
        %v3824 = vunpack.c.0.s8 %v3823
        %v3825 = vlaneseq
        %v3826 = vshrl.u32 %v3825, 7
        %v3827 = vsub.s32 %v3824, %v3826
        %v3828 = vrot.slane %v3800, %v3827
        %v3829 = vcombine.low %v3807, %v3814
        %v3830 = vcombine.low %v3821, %v3828
        %v3832 = vunpack.c.l.s4 1966171168
        %v3833 = vunpack.c.0.s8 %v3832
        %v3834 = vlaneseq
        %v3835 = vshrl.u32 %v3834, 7
        %v3836 = vsub.s32 %v3833, %v3835
        %v3837 = vrot.slane %v3829, %v3836
        %v3839 = vunpack.c.l.s4 1966171168
        %v3840 = vunpack.c.0.s8 %v3839
        %v3841 = vlaneseq
        %v3842 = vshrl.u32 %v3841, 7
        %v3843 = vsub.s32 %v3840, %v3842
        %v3844 = vrot.slane %v3830, %v3843
        %v3845 = vcombine.low %v3837, %v3844
        %v3846 = vcombine.low %v2417, %v2421
        %v3847 = vcombine.low %v2425, %v2429
        %v3848 = vcombine.low %v2433, %v2437
        %v3849 = vcombine.low %v2441, %v2445
        %v3851 = vunpack.c.l.s4 1966171168
        %v3852 = vunpack.c.0.s8 %v3851
        %v3853 = vlaneseq
        %v3854 = vshrl.u32 %v3853, 7
        %v3855 = vsub.s32 %v3852, %v3854
        %v3856 = vrot.slane %v3846, %v3855
        %v3858 = vunpack.c.l.s4 1966171168
        %v3859 = vunpack.c.0.s8 %v3858
        %v3860 = vlaneseq
        %v3861 = vshrl.u32 %v3860, 7
        %v3862 = vsub.s32 %v3859, %v3861
        %v3863 = vrot.slane %v3847, %v3862
        %v3865 = vunpack.c.l.s4 1966171168
        %v3866 = vunpack.c.0.s8 %v3865
        %v3867 = vlaneseq
        %v3868 = vshrl.u32 %v3867, 7
        %v3869 = vsub.s32 %v3866, %v3868
        %v3870 = vrot.slane %v3848, %v3869
        %v3872 = vunpack.c.l.s4 1966171168
        %v3873 = vunpack.c.0.s8 %v3872
        %v3874 = vlaneseq
        %v3875 = vshrl.u32 %v3874, 7
        %v3876 = vsub.s32 %v3873, %v3875
        %v3877 = vrot.slane %v3849, %v3876
        %v3878 = vcombine.low %v3856, %v3863
        %v3879 = vcombine.low %v3870, %v3877
        %v3881 = vunpack.c.l.s4 1966171168
        %v3882 = vunpack.c.0.s8 %v3881
        %v3883 = vlaneseq
        %v3884 = vshrl.u32 %v3883, 7
        %v3885 = vsub.s32 %v3882, %v3884
        %v3886 = vrot.slane %v3878, %v3885
        %v3888 = vunpack.c.l.s4 1966171168
        %v3889 = vunpack.c.0.s8 %v3888
        %v3890 = vlaneseq
        %v3891 = vshrl.u32 %v3890, 7
        %v3892 = vsub.s32 %v3889, %v3891
        %v3893 = vrot.slane %v3879, %v3892
        %v3894 = vcombine.low %v3886, %v3893
        %v3895 = vcombine.low %v2449, %v2453
        %v3896 = vcombine.low %v2457, %v2461
        %v3897 = vcombine.low %v2465, %v2469
        %v3898 = vcombine.low %v2473, %v2477
        %v3900 = vunpack.c.l.s4 1966171168
        %v3901 = vunpack.c.0.s8 %v3900
        %v3902 = vlaneseq
        %v3903 = vshrl.u32 %v3902, 7
        %v3904 = vsub.s32 %v3901, %v3903
        %v3905 = vrot.slane %v3895, %v3904
        %v3907 = vunpack.c.l.s4 1966171168
        %v3908 = vunpack.c.0.s8 %v3907
        %v3909 = vlaneseq
        %v3910 = vshrl.u32 %v3909, 7
        %v3911 = vsub.s32 %v3908, %v3910
        %v3912 = vrot.slane %v3896, %v3911
        %v3914 = vunpack.c.l.s4 1966171168
        %v3915 = vunpack.c.0.s8 %v3914
        %v3916 = vlaneseq
        %v3917 = vshrl.u32 %v3916, 7
        %v3918 = vsub.s32 %v3915, %v3917
        %v3919 = vrot.slane %v3897, %v3918
        %v3921 = vunpack.c.l.s4 1966171168
        %v3922 = vunpack.c.0.s8 %v3921
        %v3923 = vlaneseq
        %v3924 = vshrl.u32 %v3923, 7
        %v3925 = vsub.s32 %v3922, %v3924
        %v3926 = vrot.slane %v3898, %v3925
        %v3927 = vcombine.low %v3905, %v3912
        %v3928 = vcombine.low %v3919, %v3926
        %v3930 = vunpack.c.l.s4 1966171168
        %v3931 = vunpack.c.0.s8 %v3930
        %v3932 = vlaneseq
        %v3933 = vshrl.u32 %v3932, 7
        %v3934 = vsub.s32 %v3931, %v3933
        %v3935 = vrot.slane %v3927, %v3934
        %v3937 = vunpack.c.l.s4 1966171168
        %v3938 = vunpack.c.0.s8 %v3937
        %v3939 = vlaneseq
        %v3940 = vshrl.u32 %v3939, 7
        %v3941 = vsub.s32 %v3938, %v3940
        %v3942 = vrot.slane %v3928, %v3941
        %v3943 = vcombine.low %v3935, %v3942
        %v3944 = vcombine.low %v2481, %v2485
        %v3945 = vcombine.low %v2489, %v2493
        %v3946 = vcombine.low %v2497, %v2501
        %v3947 = vcombine.low %v2505, %v2509
        %v3949 = vunpack.c.l.s4 1966171168
        %v3950 = vunpack.c.0.s8 %v3949
        %v3951 = vlaneseq
        %v3952 = vshrl.u32 %v3951, 7
        %v3953 = vsub.s32 %v3950, %v3952
        %v3954 = vrot.slane %v3944, %v3953
        %v3956 = vunpack.c.l.s4 1966171168
        %v3957 = vunpack.c.0.s8 %v3956
        %v3958 = vlaneseq
        %v3959 = vshrl.u32 %v3958, 7
        %v3960 = vsub.s32 %v3957, %v3959
        %v3961 = vrot.slane %v3945, %v3960
        %v3963 = vunpack.c.l.s4 1966171168
        %v3964 = vunpack.c.0.s8 %v3963
        %v3965 = vlaneseq
        %v3966 = vshrl.u32 %v3965, 7
        %v3967 = vsub.s32 %v3964, %v3966
        %v3968 = vrot.slane %v3946, %v3967
        %v3970 = vunpack.c.l.s4 1966171168
        %v3971 = vunpack.c.0.s8 %v3970
        %v3972 = vlaneseq
        %v3973 = vshrl.u32 %v3972, 7
        %v3974 = vsub.s32 %v3971, %v3973
        %v3975 = vrot.slane %v3947, %v3974
        %v3976 = vcombine.low %v3954, %v3961
        %v3977 = vcombine.low %v3968, %v3975
        %v3979 = vunpack.c.l.s4 1966171168
        %v3980 = vunpack.c.0.s8 %v3979
        %v3981 = vlaneseq
        %v3982 = vshrl.u32 %v3981, 7
        %v3983 = vsub.s32 %v3980, %v3982
        %v3984 = vrot.slane %v3976, %v3983
        %v3986 = vunpack.c.l.s4 1966171168
        %v3987 = vunpack.c.0.s8 %v3986
        %v3988 = vlaneseq
        %v3989 = vshrl.u32 %v3988, 7
        %v3990 = vsub.s32 %v3987, %v3989
        %v3991 = vrot.slane %v3977, %v3990
        %v3992 = vcombine.low %v3984, %v3991
        %v3993 = vcombine.low %v2513, %v2517
        %v3994 = vcombine.low %v2521, %v2525
        %v3995 = vcombine.low %v2529, %v2533
        %v3996 = vcombine.low %v2537, %v2541
        %v3998 = vunpack.c.l.s4 1966171168
        %v3999 = vunpack.c.0.s8 %v3998
        %v4000 = vlaneseq
        %v4001 = vshrl.u32 %v4000, 7
        %v4002 = vsub.s32 %v3999, %v4001
        %v4003 = vrot.slane %v3993, %v4002
        %v4005 = vunpack.c.l.s4 1966171168
        %v4006 = vunpack.c.0.s8 %v4005
        %v4007 = vlaneseq
        %v4008 = vshrl.u32 %v4007, 7
        %v4009 = vsub.s32 %v4006, %v4008
        %v4010 = vrot.slane %v3994, %v4009
        %v4012 = vunpack.c.l.s4 1966171168
        %v4013 = vunpack.c.0.s8 %v4012
        %v4014 = vlaneseq
        %v4015 = vshrl.u32 %v4014, 7
        %v4016 = vsub.s32 %v4013, %v4015
        %v4017 = vrot.slane %v3995, %v4016
        %v4019 = vunpack.c.l.s4 1966171168
        %v4020 = vunpack.c.0.s8 %v4019
        %v4021 = vlaneseq
        %v4022 = vshrl.u32 %v4021, 7
        %v4023 = vsub.s32 %v4020, %v4022
        %v4024 = vrot.slane %v3996, %v4023
        %v4025 = vcombine.low %v4003, %v4010
        %v4026 = vcombine.low %v4017, %v4024
        %v4028 = vunpack.c.l.s4 1966171168
        %v4029 = vunpack.c.0.s8 %v4028
        %v4030 = vlaneseq
        %v4031 = vshrl.u32 %v4030, 7
        %v4032 = vsub.s32 %v4029, %v4031
        %v4033 = vrot.slane %v4025, %v4032
        %v4035 = vunpack.c.l.s4 1966171168
        %v4036 = vunpack.c.0.s8 %v4035
        %v4037 = vlaneseq
        %v4038 = vshrl.u32 %v4037, 7
        %v4039 = vsub.s32 %v4036, %v4038
        %v4040 = vrot.slane %v4026, %v4039
        %v4041 = vcombine.low %v4033, %v4040
        %v4042 = vcombine.low %v2545, %v2549
        %v4043 = vcombine.low %v2553, %v2557
        %v4044 = vcombine.low %v2561, %v2565
        %v4045 = vcombine.low %v2569, %v2573
        %v4047 = vunpack.c.l.s4 1966171168
        %v4048 = vunpack.c.0.s8 %v4047
        %v4049 = vlaneseq
        %v4050 = vshrl.u32 %v4049, 7
        %v4051 = vsub.s32 %v4048, %v4050
        %v4052 = vrot.slane %v4042, %v4051
        %v4054 = vunpack.c.l.s4 1966171168
        %v4055 = vunpack.c.0.s8 %v4054
        %v4056 = vlaneseq
        %v4057 = vshrl.u32 %v4056, 7
        %v4058 = vsub.s32 %v4055, %v4057
        %v4059 = vrot.slane %v4043, %v4058
        %v4061 = vunpack.c.l.s4 1966171168
        %v4062 = vunpack.c.0.s8 %v4061
        %v4063 = vlaneseq
        %v4064 = vshrl.u32 %v4063, 7
        %v4065 = vsub.s32 %v4062, %v4064
        %v4066 = vrot.slane %v4044, %v4065
        %v4068 = vunpack.c.l.s4 1966171168
        %v4069 = vunpack.c.0.s8 %v4068
        %v4070 = vlaneseq
        %v4071 = vshrl.u32 %v4070, 7
        %v4072 = vsub.s32 %v4069, %v4071
        %v4073 = vrot.slane %v4045, %v4072
        %v4074 = vcombine.low %v4052, %v4059
        %v4075 = vcombine.low %v4066, %v4073
        %v4077 = vunpack.c.l.s4 1966171168
        %v4078 = vunpack.c.0.s8 %v4077
        %v4079 = vlaneseq
        %v4080 = vshrl.u32 %v4079, 7
        %v4081 = vsub.s32 %v4078, %v4080
        %v4082 = vrot.slane %v4074, %v4081
        %v4084 = vunpack.c.l.s4 1966171168
        %v4085 = vunpack.c.0.s8 %v4084
        %v4086 = vlaneseq
        %v4087 = vshrl.u32 %v4086, 7
        %v4088 = vsub.s32 %v4085, %v4087
        %v4089 = vrot.slane %v4075, %v4088
        %v4090 = vcombine.low %v4082, %v4089
        %v4091 = vcombine.low %v2577, %v2581
        %v4092 = vcombine.low %v2585, %v2589
        %v4093 = vcombine.low %v2593, %v2597
        %v4094 = vcombine.low %v2601, %v2605
        %v4096 = vunpack.c.l.s4 1966171168
        %v4097 = vunpack.c.0.s8 %v4096
        %v4098 = vlaneseq
        %v4099 = vshrl.u32 %v4098, 7
        %v4100 = vsub.s32 %v4097, %v4099
        %v4101 = vrot.slane %v4091, %v4100
        %v4103 = vunpack.c.l.s4 1966171168
        %v4104 = vunpack.c.0.s8 %v4103
        %v4105 = vlaneseq
        %v4106 = vshrl.u32 %v4105, 7
        %v4107 = vsub.s32 %v4104, %v4106
        %v4108 = vrot.slane %v4092, %v4107
        %v4110 = vunpack.c.l.s4 1966171168
        %v4111 = vunpack.c.0.s8 %v4110
        %v4112 = vlaneseq
        %v4113 = vshrl.u32 %v4112, 7
        %v4114 = vsub.s32 %v4111, %v4113
        %v4115 = vrot.slane %v4093, %v4114
        %v4117 = vunpack.c.l.s4 1966171168
        %v4118 = vunpack.c.0.s8 %v4117
        %v4119 = vlaneseq
        %v4120 = vshrl.u32 %v4119, 7
        %v4121 = vsub.s32 %v4118, %v4120
        %v4122 = vrot.slane %v4094, %v4121
        %v4123 = vcombine.low %v4101, %v4108
        %v4124 = vcombine.low %v4115, %v4122
        %v4126 = vunpack.c.l.s4 1966171168
        %v4127 = vunpack.c.0.s8 %v4126
        %v4128 = vlaneseq
        %v4129 = vshrl.u32 %v4128, 7
        %v4130 = vsub.s32 %v4127, %v4129
        %v4131 = vrot.slane %v4123, %v4130
        %v4133 = vunpack.c.l.s4 1966171168
        %v4134 = vunpack.c.0.s8 %v4133
        %v4135 = vlaneseq
        %v4136 = vshrl.u32 %v4135, 7
        %v4137 = vsub.s32 %v4134, %v4136
        %v4138 = vrot.slane %v4124, %v4137
        %v4139 = vcombine.low %v4131, %v4138
        %v4140 = vcombine.low %v2609, %v2613
        %v4141 = vcombine.low %v2617, %v2621
        %v4142 = vcombine.low %v2625, %v2629
        %v4143 = vcombine.low %v2633, %v2637
        %v4145 = vunpack.c.l.s4 1966171168
        %v4146 = vunpack.c.0.s8 %v4145
        %v4147 = vlaneseq
        %v4148 = vshrl.u32 %v4147, 7
        %v4149 = vsub.s32 %v4146, %v4148
        %v4150 = vrot.slane %v4140, %v4149
        %v4152 = vunpack.c.l.s4 1966171168
        %v4153 = vunpack.c.0.s8 %v4152
        %v4154 = vlaneseq
        %v4155 = vshrl.u32 %v4154, 7
        %v4156 = vsub.s32 %v4153, %v4155
        %v4157 = vrot.slane %v4141, %v4156
        %v4159 = vunpack.c.l.s4 1966171168
        %v4160 = vunpack.c.0.s8 %v4159
        %v4161 = vlaneseq
        %v4162 = vshrl.u32 %v4161, 7
        %v4163 = vsub.s32 %v4160, %v4162
        %v4164 = vrot.slane %v4142, %v4163
        %v4166 = vunpack.c.l.s4 1966171168
        %v4167 = vunpack.c.0.s8 %v4166
        %v4168 = vlaneseq
        %v4169 = vshrl.u32 %v4168, 7
        %v4170 = vsub.s32 %v4167, %v4169
        %v4171 = vrot.slane %v4143, %v4170
        %v4172 = vcombine.low %v4150, %v4157
        %v4173 = vcombine.low %v4164, %v4171
        %v4175 = vunpack.c.l.s4 1966171168
        %v4176 = vunpack.c.0.s8 %v4175
        %v4177 = vlaneseq
        %v4178 = vshrl.u32 %v4177, 7
        %v4179 = vsub.s32 %v4176, %v4178
        %v4180 = vrot.slane %v4172, %v4179
        %v4182 = vunpack.c.l.s4 1966171168
        %v4183 = vunpack.c.0.s8 %v4182
        %v4184 = vlaneseq
        %v4185 = vshrl.u32 %v4184, 7
        %v4186 = vsub.s32 %v4183, %v4185
        %v4187 = vrot.slane %v4173, %v4186
        %v4188 = vcombine.low %v4180, %v4187
        %v4189 = vcombine.low %v2641, %v2645
        %v4190 = vcombine.low %v2649, %v2653
        %v4191 = vcombine.low %v2657, %v2661
        %v4192 = vcombine.low %v2665, %v2669
        %v4194 = vunpack.c.l.s4 1966171168
        %v4195 = vunpack.c.0.s8 %v4194
        %v4196 = vlaneseq
        %v4197 = vshrl.u32 %v4196, 7
        %v4198 = vsub.s32 %v4195, %v4197
        %v4199 = vrot.slane %v4189, %v4198
        %v4201 = vunpack.c.l.s4 1966171168
        %v4202 = vunpack.c.0.s8 %v4201
        %v4203 = vlaneseq
        %v4204 = vshrl.u32 %v4203, 7
        %v4205 = vsub.s32 %v4202, %v4204
        %v4206 = vrot.slane %v4190, %v4205
        %v4208 = vunpack.c.l.s4 1966171168
        %v4209 = vunpack.c.0.s8 %v4208
        %v4210 = vlaneseq
        %v4211 = vshrl.u32 %v4210, 7
        %v4212 = vsub.s32 %v4209, %v4211
        %v4213 = vrot.slane %v4191, %v4212
        %v4215 = vunpack.c.l.s4 1966171168
        %v4216 = vunpack.c.0.s8 %v4215
        %v4217 = vlaneseq
        %v4218 = vshrl.u32 %v4217, 7
        %v4219 = vsub.s32 %v4216, %v4218
        %v4220 = vrot.slane %v4192, %v4219
        %v4221 = vcombine.low %v4199, %v4206
        %v4222 = vcombine.low %v4213, %v4220
        %v4224 = vunpack.c.l.s4 1966171168
        %v4225 = vunpack.c.0.s8 %v4224
        %v4226 = vlaneseq
        %v4227 = vshrl.u32 %v4226, 7
        %v4228 = vsub.s32 %v4225, %v4227
        %v4229 = vrot.slane %v4221, %v4228
        %v4231 = vunpack.c.l.s4 1966171168
        %v4232 = vunpack.c.0.s8 %v4231
        %v4233 = vlaneseq
        %v4234 = vshrl.u32 %v4233, 7
        %v4235 = vsub.s32 %v4232, %v4234
        %v4236 = vrot.slane %v4222, %v4235
        %v4237 = vcombine.low %v4229, %v4236
        %4238 = vset.pattern.permute.xlu0 0
        %4239 = vperm.xlu0 %4238, %v2718
        %v4240 = vpop.permute.xlu0 %4239
        %4241 = vset.pattern.permute.xlu0 0
        %4242 = vperm.xlu0 %4241, %v2767
        %v4243 = vpop.permute.xlu0 %4242
        %4244 = vset.pattern.permute.xlu0 0
        %4245 = vperm.xlu0 %4244, %v2816
        %v4246 = vpop.permute.xlu0 %4245
        %4247 = vset.pattern.permute.xlu0 0
        %4248 = vperm.xlu0 %4247, %v2865
        %v4249 = vpop.permute.xlu0 %4248
        %4250 = vset.pattern.permute.xlu0 0
        %4251 = vperm.xlu0 %4250, %v2914
        %v4252 = vpop.permute.xlu0 %4251
        %4253 = vset.pattern.permute.xlu0 0
        %4254 = vperm.xlu0 %4253, %v2963
        %v4255 = vpop.permute.xlu0 %4254
        %4256 = vset.pattern.permute.xlu0 0
        %4257 = vperm.xlu0 %4256, %v3012
        %v4258 = vpop.permute.xlu0 %4257
        %4259 = vset.pattern.permute.xlu0 0
        %4260 = vperm.xlu0 %4259, %v3061
        %v4261 = vpop.permute.xlu0 %4260
        %4262 = vset.pattern.permute.xlu0 0
        %4263 = vperm.xlu0 %4262, %v3110
        %v4264 = vpop.permute.xlu0 %4263
        %4265 = vset.pattern.permute.xlu0 0
        %4266 = vperm.xlu0 %4265, %v3159
        %v4267 = vpop.permute.xlu0 %4266
        %4268 = vset.pattern.permute.xlu0 0
        %4269 = vperm.xlu0 %4268, %v3208
        %v4270 = vpop.permute.xlu0 %4269
        %4271 = vset.pattern.permute.xlu0 0
        %4272 = vperm.xlu0 %4271, %v3257
        %v4273 = vpop.permute.xlu0 %4272
        %4274 = vset.pattern.permute.xlu0 0
        %4275 = vperm.xlu0 %4274, %v3306
        %v4276 = vpop.permute.xlu0 %4275
        %4277 = vset.pattern.permute.xlu0 0
        %4278 = vperm.xlu0 %4277, %v3355
        %v4279 = vpop.permute.xlu0 %4278
        %4280 = vset.pattern.permute.xlu0 0
        %4281 = vperm.xlu0 %4280, %v3404
        %v4282 = vpop.permute.xlu0 %4281
        %4283 = vset.pattern.permute.xlu0 0
        %4284 = vperm.xlu0 %4283, %v3453
        %v4285 = vpop.permute.xlu0 %4284
        %4286 = vset.pattern.permute.xlu0 0
        %4287 = vperm.xlu0 %4286, %v3502
        %v4288 = vpop.permute.xlu0 %4287
        %4289 = vset.pattern.permute.xlu0 0
        %4290 = vperm.xlu0 %4289, %v3551
        %v4291 = vpop.permute.xlu0 %4290
        %4292 = vset.pattern.permute.xlu0 0
        %4293 = vperm.xlu0 %4292, %v3600
        %v4294 = vpop.permute.xlu0 %4293
        %4295 = vset.pattern.permute.xlu0 0
        %4296 = vperm.xlu0 %4295, %v3649
        %v4297 = vpop.permute.xlu0 %4296
        %4298 = vset.pattern.permute.xlu0 0
        %4299 = vperm.xlu0 %4298, %v3698
        %v4300 = vpop.permute.xlu0 %4299
        %4301 = vset.pattern.permute.xlu0 0
        %4302 = vperm.xlu0 %4301, %v3747
        %v4303 = vpop.permute.xlu0 %4302
        %4304 = vset.pattern.permute.xlu0 0
        %4305 = vperm.xlu0 %4304, %v3796
        %v4306 = vpop.permute.xlu0 %4305
        %4307 = vset.pattern.permute.xlu0 0
        %4308 = vperm.xlu0 %4307, %v3845
        %v4309 = vpop.permute.xlu0 %4308
        %4310 = vset.pattern.permute.xlu0 0
        %4311 = vperm.xlu0 %4310, %v3894
        %v4312 = vpop.permute.xlu0 %4311
        %4313 = vset.pattern.permute.xlu0 0
        %4314 = vperm.xlu0 %4313, %v3943
        %v4315 = vpop.permute.xlu0 %4314
        %4316 = vset.pattern.permute.xlu0 0
        %4317 = vperm.xlu0 %4316, %v3992
        %v4318 = vpop.permute.xlu0 %4317
        %4319 = vset.pattern.permute.xlu0 0
        %4320 = vperm.xlu0 %4319, %v4041
        %v4321 = vpop.permute.xlu0 %4320
        %4322 = vset.pattern.permute.xlu0 0
        %4323 = vperm.xlu0 %4322, %v4090
        %v4324 = vpop.permute.xlu0 %4323
        %4325 = vset.pattern.permute.xlu0 0
        %4326 = vperm.xlu0 %4325, %v4139
        %v4327 = vpop.permute.xlu0 %4326
        %4328 = vset.pattern.permute.xlu0 0
        %4329 = vperm.xlu0 %4328, %v4188
        %v4330 = vpop.permute.xlu0 %4329
        %4331 = vset.pattern.permute.xlu0 0
        %4332 = vperm.xlu0 %4331, %v4237
        %v4333 = vpop.permute.xlu0 %4332
        %v4334 = vlaneseq
        %v4335 = vand.u32 %v4334, 127
        %v4336 = vlaneseq
        %v4337 = vshrl.u32 %v4336, 7
        %v4338 = vsub.s32 %v4335, %v4337
        %v4339 = vrot.slane %v4240, %v4338
        %v4340 = vadd.s32 %v4335, 4294967288
        %v4341 = vlaneseq
        %v4342 = vshrl.u32 %v4341, 7
        %v4343 = vsub.s32 %v4340, %v4342
        %v4344 = vrot.slane %v4243, %v4343
        %vm4345 = vcmask 130112
        %v4346 = vsel %vm4345, %v4344, %v4339
        %v4347 = vadd.s32 %v4335, 4294967280
        %v4348 = vlaneseq
        %v4349 = vshrl.u32 %v4348, 7
        %v4350 = vsub.s32 %v4347, %v4349
        %v4351 = vrot.slane %v4246, %v4350
        %vm4352 = vcmask 195712
        %v4353 = vsel %vm4352, %v4351, %v4346
        %v4354 = vadd.s32 %v4335, 4294967272
        %v4355 = vlaneseq
        %v4356 = vshrl.u32 %v4355, 7
        %v4357 = vsub.s32 %v4354, %v4356
        %v4358 = vrot.slane %v4249, %v4357
        %vm4359 = vcmask 261312
        %v4360 = vsel %vm4359, %v4358, %v4353
        %v4361 = vadd.s32 %v4335, 4294967264
        %v4362 = vlaneseq
        %v4363 = vshrl.u32 %v4362, 7
        %v4364 = vsub.s32 %v4361, %v4363
        %v4365 = vrot.slane %v4252, %v4364
        %vm4366 = vcmask 326912
        %v4367 = vsel %vm4366, %v4365, %v4360
        %v4368 = vadd.s32 %v4335, 4294967256
        %v4369 = vlaneseq
        %v4370 = vshrl.u32 %v4369, 7
        %v4371 = vsub.s32 %v4368, %v4370
        %v4372 = vrot.slane %v4255, %v4371
        %vm4373 = vcmask 392512
        %v4374 = vsel %vm4373, %v4372, %v4367
        %v4375 = vadd.s32 %v4335, 4294967248
        %v4376 = vlaneseq
        %v4377 = vshrl.u32 %v4376, 7
        %v4378 = vsub.s32 %v4375, %v4377
        %v4379 = vrot.slane %v4258, %v4378
        %vm4380 = vcmask 458112
        %v4381 = vsel %vm4380, %v4379, %v4374
        %v4382 = vadd.s32 %v4335, 4294967240
        %v4383 = vlaneseq
        %v4384 = vshrl.u32 %v4383, 7
        %v4385 = vsub.s32 %v4382, %v4384
        %v4386 = vrot.slane %v4261, %v4385
        %vm4387 = vcmask 523712
        %v4388 = vsel %vm4387, %v4386, %v4381
        %v4389 = vadd.s32 %v4335, 4294967232
        %v4390 = vlaneseq
        %v4391 = vshrl.u32 %v4390, 7
        %v4392 = vsub.s32 %v4389, %v4391
        %v4393 = vrot.slane %v4264, %v4392
        %vm4394 = vcmask 589312
        %v4395 = vsel %vm4394, %v4393, %v4388
        %v4396 = vadd.s32 %v4335, 4294967224
        %v4397 = vlaneseq
        %v4398 = vshrl.u32 %v4397, 7
        %v4399 = vsub.s32 %v4396, %v4398
        %v4400 = vrot.slane %v4267, %v4399
        %vm4401 = vcmask 654912
        %v4402 = vsel %vm4401, %v4400, %v4395
        %v4403 = vadd.s32 %v4335, 4294967216
        %v4404 = vlaneseq
        %v4405 = vshrl.u32 %v4404, 7
        %v4406 = vsub.s32 %v4403, %v4405
        %v4407 = vrot.slane %v4270, %v4406
        %vm4408 = vcmask 720512
        %v4409 = vsel %vm4408, %v4407, %v4402
        %v4410 = vadd.s32 %v4335, 4294967208
        %v4411 = vlaneseq
        %v4412 = vshrl.u32 %v4411, 7
        %v4413 = vsub.s32 %v4410, %v4412
        %v4414 = vrot.slane %v4273, %v4413
        %vm4415 = vcmask 786112
        %v4416 = vsel %vm4415, %v4414, %v4409
        %v4417 = vadd.s32 %v4335, 4294967200
        %v4418 = vlaneseq
        %v4419 = vshrl.u32 %v4418, 7
        %v4420 = vsub.s32 %v4417, %v4419
        %v4421 = vrot.slane %v4276, %v4420
        %vm4422 = vcmask 851712
        %v4423 = vsel %vm4422, %v4421, %v4416
        %v4424 = vadd.s32 %v4335, 4294967192
        %v4425 = vlaneseq
        %v4426 = vshrl.u32 %v4425, 7
        %v4427 = vsub.s32 %v4424, %v4426
        %v4428 = vrot.slane %v4279, %v4427
        %vm4429 = vcmask 917312
        %v4430 = vsel %vm4429, %v4428, %v4423
        %v4431 = vadd.s32 %v4335, 4294967184
        %v4432 = vlaneseq
        %v4433 = vshrl.u32 %v4432, 7
        %v4434 = vsub.s32 %v4431, %v4433
        %v4435 = vrot.slane %v4282, %v4434
        %vm4436 = vcmask 982912
        %v4437 = vsel %vm4436, %v4435, %v4430
        %v4438 = vadd.s32 %v4335, 4294967176
        %v4439 = vlaneseq
        %v4440 = vshrl.u32 %v4439, 7
        %v4441 = vsub.s32 %v4438, %v4440
        %v4442 = vrot.slane %v4285, %v4441
        %vm4443 = vcmask 1048512
        %v4444 = vsel %vm4443, %v4442, %v4437
        %v4445 = vlaneseq
        %v4446 = vshrl.u32 %v4445, 7
        %v4447 = vsub.s32 %v4335, %v4446
        %v4448 = vrot.slane %v4288, %v4447
        %v4449 = vlaneseq
        %v4450 = vshrl.u32 %v4449, 7
        %v4451 = vsub.s32 %v4340, %v4450
        %v4452 = vrot.slane %v4291, %v4451
        %v4453 = vsel %vm4345, %v4452, %v4448
        %v4454 = vlaneseq
        %v4455 = vshrl.u32 %v4454, 7
        %v4456 = vsub.s32 %v4347, %v4455
        %v4457 = vrot.slane %v4294, %v4456
        %v4458 = vsel %vm4352, %v4457, %v4453
        %v4459 = vlaneseq
        %v4460 = vshrl.u32 %v4459, 7
        %v4461 = vsub.s32 %v4354, %v4460
        %v4462 = vrot.slane %v4297, %v4461
        %v4463 = vsel %vm4359, %v4462, %v4458
        %v4464 = vlaneseq
        %v4465 = vshrl.u32 %v4464, 7
        %v4466 = vsub.s32 %v4361, %v4465
        %v4467 = vrot.slane %v4300, %v4466
        %v4468 = vsel %vm4366, %v4467, %v4463
        %v4469 = vlaneseq
        %v4470 = vshrl.u32 %v4469, 7
        %v4471 = vsub.s32 %v4368, %v4470
        %v4472 = vrot.slane %v4303, %v4471
        %v4473 = vsel %vm4373, %v4472, %v4468
        %v4474 = vlaneseq
        %v4475 = vshrl.u32 %v4474, 7
        %v4476 = vsub.s32 %v4375, %v4475
        %v4477 = vrot.slane %v4306, %v4476
        %v4478 = vsel %vm4380, %v4477, %v4473
        %v4479 = vlaneseq
        %v4480 = vshrl.u32 %v4479, 7
        %v4481 = vsub.s32 %v4382, %v4480
        %v4482 = vrot.slane %v4309, %v4481
        %v4483 = vsel %vm4387, %v4482, %v4478
        %v4484 = vlaneseq
        %v4485 = vshrl.u32 %v4484, 7
        %v4486 = vsub.s32 %v4389, %v4485
        %v4487 = vrot.slane %v4312, %v4486
        %v4488 = vsel %vm4394, %v4487, %v4483
        %v4489 = vlaneseq
        %v4490 = vshrl.u32 %v4489, 7
        %v4491 = vsub.s32 %v4396, %v4490
        %v4492 = vrot.slane %v4315, %v4491
        %v4493 = vsel %vm4401, %v4492, %v4488
        %v4494 = vlaneseq
        %v4495 = vshrl.u32 %v4494, 7
        %v4496 = vsub.s32 %v4403, %v4495
        %v4497 = vrot.slane %v4318, %v4496
        %v4498 = vsel %vm4408, %v4497, %v4493
        %v4499 = vlaneseq
        %v4500 = vshrl.u32 %v4499, 7
        %v4501 = vsub.s32 %v4410, %v4500
        %v4502 = vrot.slane %v4321, %v4501
        %v4503 = vsel %vm4415, %v4502, %v4498
        %v4504 = vlaneseq
        %v4505 = vshrl.u32 %v4504, 7
        %v4506 = vsub.s32 %v4417, %v4505
        %v4507 = vrot.slane %v4324, %v4506
        %v4508 = vsel %vm4422, %v4507, %v4503
        %v4509 = vlaneseq
        %v4510 = vshrl.u32 %v4509, 7
        %v4511 = vsub.s32 %v4424, %v4510
        %v4512 = vrot.slane %v4327, %v4511
        %v4513 = vsel %vm4429, %v4512, %v4508
        %v4514 = vlaneseq
        %v4515 = vshrl.u32 %v4514, 7
        %v4516 = vsub.s32 %v4431, %v4515
        %v4517 = vrot.slane %v4330, %v4516
        %v4518 = vsel %vm4436, %v4517, %v4513
        %v4519 = vlaneseq
        %v4520 = vshrl.u32 %v4519, 7
        %v4521 = vsub.s32 %v4438, %v4520
        %v4522 = vrot.slane %v4333, %v4521
        %v4523 = vsel %vm4443, %v4522, %v4518
        %v4524 = vcombine.low %v4444, %v4523
        %v4526 = vunpack.c.l.s4 1966171168
        %v4527 = vunpack.c.0.s8 %v4526
        %v4528 = vlaneseq
        %v4529 = vshrl.u32 %v4528, 7
        %v4530 = vsub.s32 %v4527, %v4529
        %v4531 = vrot.slane %v4524, %v4530
        %v4533 = vunpack.c.l.s4 1966171168
        %v4534 = vunpack.c.0.s8 %v4533
        %v4535 = vlaneseq
        %v4536 = vshrl.u32 %v4535, 7
        %v4537 = vsub.s32 %v4534, %v4536
        %v4538 = vrot.slane %v4531, %v4537
        %v4540 = vlaneseq
        %vm4541 = vcmp.ge.s32.totalorder %v4540, 0
        %vm4542 = vcmp.lt.s32.totalorder %v4540, 256
        %vm4543 = vmand %vm4541, %vm4542
        %4544 = vst.msk [vmem:[%s271] sm:$0x3] %vm4543, %v4538
        %s4545 = sand.u32 %s142, 1
        %s4546 = scalar_lea.sflag [#allocation4], %s4545
        %s4547 = sand.u32 %s142, 1
        %s4548 = smul.addr %s4547, 2
        %s4549 = scalar_lea.vmem [#allocation9], %s4548
        // Predicated region
        $region53: #{tpu_custom_call.1} parent=39 // pred_check
          %p4550 = pneg %p152
        $region54: #{tpu_custom_call.1} parent=39 // pred_check_branch
          %4552 = sbr.rel (%p4550) target = $region56
        $region55: #{tpu_custom_call.1} parent=39 // pred_region
          %s4554 = ssub.s32 32, 32
          %4555 = vsyncadd %s4546, %s4554
          %s4556 = smul.addr %s24, 2
          %s4557 = smul.addr %s4556, 16
          %s4558 = scalar_lea.hbm %s5, %s4557
          %s4560 = sshll.u32 %s4549, 4
          %s4561 = int_to_ptr.vmem [resolvable:$true] %s4560
          %4563 = dma.vmem_to_hbm [thread:$0]  %s4561, 32, %s4558, %s4546
        $region56: #{tpu_custom_call.1} parent=39 // pred_fallthru
          _
      $region40: #{tpu_custom_call.1} parent=5 // pred_fallthru
        _
      %p4564 = scmp.le.s32.totalorder 2, %s19
      // Predicated region
      $region57: #{tpu_custom_call.1} parent=5 // pred_check
        %p4565 = pneg %p4564
      $region58: #{tpu_custom_call.1} parent=5 // pred_check_branch
        %4567 = sbr.rel (%p4565) target = $region60
      $region59: #{tpu_custom_call.1} parent=5 // pred_region
        %s4568 = ssub.s32 %s19, 2
        // Predicated region
        $region61: #{tpu_custom_call.1} parent=59 // pred_check
          %p4569 = pneg %p158
        $region62: #{tpu_custom_call.1} parent=59 // pred_check_branch
          %4571 = sbr.rel (%p4569) target = $region64
        $region63: #{tpu_custom_call.1} parent=59 // pred_region
          %s4572 = sand.u32 %s143, 1
          %s4573 = scalar_lea.sflag [#allocation4], %s4572
          %s4574 = sand.u32 %s143, 1
          %s4575 = smul.addr %s4574, 2
          %s4576 = scalar_lea.vmem [#allocation9], %s4575
          %4577 = dma.done %s4573, 32
        $region64: #{tpu_custom_call.1} parent=59 // pred_fallthru
          _
      $region60: #{tpu_custom_call.1} parent=5 // pred_fallthru
        _
    $region6: #{tpu_custom_call.1} parent=1 // loop_footer
      %s23 = sadd.s32 1, %s19
    $region7: #{tpu_custom_call.1} parent=1 // loop_footer_branch
      %18 = sbr.rel target = $region3
    $region8: #{tpu_custom_call.1} parent=1 // loop_exit
      _
    %4578 = vsyncpa [#allocation3], 1
    %s4579 = scalar_lea.sflag [#allocation3], 1
    %4580 = vsyncpa %s4579, 1
    %4581 = vsyncpa [#allocation7], 1
    %4582 = vsyncpa [#allocation4], 1
    %s4583 = scalar_lea.sflag [#allocation4], 1
    %4584 = vsyncpa %s4583, 1
    %4585 = vsyncpa [#allocation5], 1
    %s4586 = scalar_lea.sflag [#allocation5], 1
    %4587 = vsyncpa %s4586, 1

</llo_original>
